<compile_context>
chip_gen: v5e
topology: v5e:2x2
jax: 0.10.0
libtpu: 0.0.40
codegen_flags: <defaults>
</compile_context>

<pallas_src>
import functools
import math

import jax
import jax.numpy as jnp
import numpy as np
from jax import lax
from jax.experimental import pallas as pl
from jax.experimental.pallas import tpu as pltpu


# ------------------------------------------------------------------
# Fused kernel: QKV projection + multi-head masked attention + output proj.
#   one grid step == (one batch row, one tq-row query tile); all heads per step.
# ------------------------------------------------------------------
def _mha_fused_kernel(vl_ref, q_ref, k_ref, v_ref, w_qkv_ref, b_qkv_ref,
                      w_out_ref, b_out_ref, o_ref, attn_scratch, *, heads):
    b = pl.program_id(0)
    tq, H = q_ref.shape
    L = k_ref.shape[0]
    d = H // heads
    scale = 1.0 / math.sqrt(d)

    # --- Q/K/V projections: x @ W^T + b, W in PyTorch (out, in) layout.
    #     dot_general contracts last dims -> no transpose of the weight tile.
    def project(x_ref, idx, post_scale=None):
        acc = lax.dot_general(
            x_ref[...], w_qkv_ref[idx],
            (((1,), (1,)), ((), ())),
            preferred_element_type=jnp.float32)
        acc = acc + b_qkv_ref[idx]
        if post_scale is not None:
            acc = acc * post_scale          # fold 1/sqrt(d) here, still in f32
        return acc.astype(x_ref.dtype)      # back to bf16 for the MXU

    qp = project(q_ref, 0, post_scale=scale)   # (tq, H)
    kp = project(k_ref, 1)                     # (L,  H)
    vp = project(v_ref, 2)                     # (L,  H)

    # --- additive mask, hoisted out of the head loop (d2l -1e6 fill semantics)
    vl = vl_ref[b]
    col = lax.broadcasted_iota(jnp.int32, (tq, L), 1)
    neg = jnp.where(col < vl, jnp.float32(0.0), jnp.float32(-1e6))   # (tq, L)

    # --- per-head masked softmax attention (static loop, traced once)
    for h in range(heads):
        sl = slice(h * d, (h + 1) * d)
        q_h = qp[:, sl]
        k_h = kp[:, sl]
        v_h = vp[:, sl]

        # scores = q_h @ k_h^T via dot_general on last dims (no explicit .T)
        scores = lax.dot_general(
            q_h, k_h, (((1,), (1,)), ((), ())),
            preferred_element_type=jnp.float32) + neg                # (tq, L) f32
        scores = scores - scores.max(axis=-1, keepdims=True)
        p = jnp.exp(scores)
        p = p * pl.reciprocal(p.sum(axis=-1, keepdims=True), approx=True)

        # dropout: eval mode -> identity
        pv = jnp.dot(p.astype(v_h.dtype), v_h,
                     preferred_element_type=jnp.float32)             # (tq, d)
        attn_scratch[:, sl] = pv.astype(attn_scratch.dtype)          # bf16 scratch

    # --- fused output projection: (tq, H) @ W_out^T + b_out, lane-dense store
    out = lax.dot_general(
        attn_scratch[...], w_out_ref[...],
        (((1,), (1,)), ((), ())),
        preferred_element_type=jnp.float32)
    o_ref[...] = (out + b_out_ref[...]).astype(o_ref.dtype)


def mha_fused_pallas(q, k, v, w_qkv, b_qkv, w_out, b_out, valid_lens, heads,
                     *, tq=128):
    """q,k,v: (B,L,H) bf16; w_qkv: (3,H,H); b_qkv: (3,1,H); w_out: (H,H);
    b_out: (1,H); valid_lens: (B,) int32.  Returns (B,L,H) f32."""
    B, L, H = q.shape
    tq = tq if (L % tq == 0) else L          # keep divisibility; fall back to full L
    nq = L // tq

    def q_spec():
        return pl.BlockSpec((pl.Squeezed(), tq, H), lambda b, qi, vl: (b, qi, 0))

    def kv_spec():  # constant along the q axis -> stays resident across q tiles
        return pl.BlockSpec((pl.Squeezed(), L, H), lambda b, qi, vl: (b, 0, 0))

    itemsize = jnp.dtype(q.dtype).itemsize
    cost = pl.CostEstimate(
        flops=2 * B * L * H * (4 * H + 2 * L),        # 3 proj + scores + PV + out proj
        transcendentals=B * heads * L * L,            # exp (plus cheap reciprocals)
        bytes_accessed=(3 * B * L * H * itemsize      # q, k, v
                        + 4 * H * H * itemsize        # W_q/k/v/out
                        + 4 * H * 4 + B * 4           # biases + valid_lens
                        + B * L * H * 4),             # f32 output
    )

    kernel = functools.partial(_mha_fused_kernel, heads=heads)
    return pl.pallas_call(
        kernel,
        out_shape=jax.ShapeDtypeStruct((B, L, H), jnp.float32),
        grid_spec=pltpu.PrefetchScalarGridSpec(
            num_scalar_prefetch=1,
            grid=(B, nq),
            in_specs=[
                q_spec(), kv_spec(), kv_spec(),
                pl.BlockSpec((3, H, H), lambda b, qi, vl: (0, 0, 0)),
                pl.BlockSpec((3, 1, H), lambda b, qi, vl: (0, 0, 0)),
                pl.BlockSpec((H, H), lambda b, qi, vl: (0, 0)),
                pl.BlockSpec((1, H), lambda b, qi, vl: (0, 0)),
            ],
            out_specs=pl.BlockSpec((pl.Squeezed(), tq, H),
                                   lambda b, qi, vl: (b, qi, 0)),
            scratch_shapes=[pltpu.VMEM((tq, H), q.dtype)],
        ),
        compiler_params=pltpu.CompilerParams(
            dimension_semantics=("parallel", "parallel")),
        cost_estimate=cost,
    )(valid_lens, q, k, v, w_qkv, b_qkv, w_out, b_out)


# ------------------------------------------------------------------
# Multi-head attention wrapper (jitted so the weight restack fuses)
# ------------------------------------------------------------------
@functools.partial(jax.jit, static_argnames=("heads",))
def multi_head_attention(params, q, k, v, valid_lens, heads):
    compute_dtype = jnp.bfloat16
    B, L, H = q.shape

    w_qkv = jnp.stack([params["W_q"], params["W_k"], params["W_v"]]).astype(compute_dtype)
    b_qkv = jnp.stack([params["b_q"], params["b_k"], params["b_v"]])[:, None, :].astype(jnp.float32)
    w_out = params["W_out"].astype(compute_dtype)
    b_out = params["b_out"].reshape(1, H).astype(jnp.float32)

    if valid_lens is None:
        vl = jnp.full((B,), L, dtype=jnp.int32)
    else:
        vl = valid_lens.astype(jnp.int32)

    return mha_fused_pallas(
        q.astype(compute_dtype), k.astype(compute_dtype), v.astype(compute_dtype),
        w_qkv, b_qkv, w_out, b_out, vl, heads)


# ------------------------------------------------------------------
# Pure-JAX f32 reference (mirrors the PyTorch module)
# ------------------------------------------------------------------
def reference_mha(params, q, k, v, valid_lens, heads):
    def lin(x, w, b):
        return x @ w.T + b

    B, L, H = q.shape
    d = H // heads

    def t_qkv(x):
        x = x.reshape(B, L, heads, d).transpose(0, 2, 1, 3)
        return x.reshape(B * heads, L, d)

    qp = t_qkv(lin(q, params["W_q"], params["b_q"]))
    kp = t_qkv(lin(k, params["W_k"], params["b_k"]))
    vp = t_qkv(lin(v, params["W_v"], params["b_v"]))

    scores = jnp.einsum("bqd,bkd->bqk", qp, kp) / math.sqrt(d)
    if valid_lens is None:
        vl = jnp.full((B,), L, dtype=jnp.int32)
    else:
        vl = valid_lens.astype(jnp.int32)
    vl_ph = jnp.repeat(vl, heads, axis=0)
    col = jnp.arange(L)[None, None, :]
    scores = jnp.where(col < vl_ph[:, None, None], scores, -1e6)
    p = jax.nn.softmax(scores, axis=-1)
    o = jnp.einsum("bqk,bkd->bqd", p, vp)
    o = o.reshape(B, heads, L, d).transpose(0, 2, 1, 3).reshape(B, L, H)
    return lin(o, params["W_out"], params["b_out"])


# ------------------------------------------------------------------
if __name__ == "__main__":
    # Small, TPU-aligned shapes consistent with the module's
    # (batch, pairs_num, num_hiddens) inputs; seq=256 exercises the q-row grid axis.
    batch, seq, hidden, heads = 2, 256, 256, 4

    key = jax.random.PRNGKey(0)
    keys = jax.random.split(key, 12)

    def init_linear(kw, kb, fan_in, fan_out):
        bound = 1.0 / math.sqrt(fan_in)
        w = jax.random.uniform(kw, (fan_out, fan_in), jnp.float32, -bound, bound)
        b = jax.random.uniform(kb, (fan_out,), jnp.float32, -bound, bound)
        return w, b

    W_q, b_q = init_linear(keys[0], keys[1], hidden, hidden)
    W_k, b_k = init_linear(keys[2], keys[3], hidden, hidden)
    W_v, b_v = init_linear(keys[4], keys[5], hidden, hidden)
    W_out, b_out = init_linear(keys[6], keys[7], hidden, hidden)
    params = dict(W_q=W_q, b_q=b_q, W_k=W_k, b_k=b_k,
                  W_v=W_v, b_v=b_v, W_out=W_out, b_out=b_out)

    q = jax.random.normal(keys[8], (batch, seq, hidden), jnp.float32)
    k = jax.random.normal(keys[9], (batch, seq, hidden), jnp.float32)
    v = jax.random.normal(keys[10], (batch, seq, hidden), jnp.float32)
    valid_lens = jnp.array([seq, 100], dtype=jnp.int32)

    out = multi_head_attention(params, q, k, v, valid_lens, heads)
    out = jax.block_until_ready(out)

    ref = reference_mha(params, q, k, v, valid_lens, heads)
    assert out.shape == (batch, seq, hidden)
    # bf16 MXU operands (f32 accumulation / f32 softmax) vs. a pure-f32 reference:
    # loose tolerance covers bf16 quantization noise; kernel-logic bugs would blow past it.
    np.testing.assert_allclose(np.asarray(out), np.asarray(ref), rtol=2e-2, atol=2e-2)

    print("KERNEL_OK")
</pallas_src>

<mosaic_0001>
module attributes {stable_mosaic.version = 11 : i64} {
  func.func @_mha_fused_kernel(%arg0: i32, %arg1: i32, %arg2: memref<2xi32, #tpu.memory_space<smem>>, %arg3: memref<1x128x256xbf16, #tpu.memory_space<vmem>>, %arg4: memref<1x256x256xbf16, #tpu.memory_space<vmem>>, %arg5: memref<1x256x256xbf16, #tpu.memory_space<vmem>>, %arg6: memref<3x256x256xbf16, #tpu.memory_space<vmem>>, %arg7: memref<3x1x256xf32, #tpu.memory_space<vmem>>, %arg8: memref<256x256xbf16, #tpu.memory_space<vmem>>, %arg9: memref<1x256xf32, #tpu.memory_space<vmem>>, %arg10: memref<1x128x256xf32, #tpu.memory_space<vmem>>, %arg11: memref<128x256xbf16, #tpu.memory_space<vmem>>) attributes {dimension_semantics = [#tpu.dimension_semantics<parallel>, #tpu.dimension_semantics<parallel>], iteration_bounds = array<i64: 2, 2>, scalar_prefetch = 1 : i64, scratch_operands = 1 : i64, tpu.core_type = #tpu.core_type<tc>, window_params = [{transform_indices = @transform_0, window_bounds = array<i64: 1, 128, 256>}, {transform_indices = @transform_1, window_bounds = array<i64: 1, 256, 256>}, {transform_indices = @transform_2, window_bounds = array<i64: 1, 256, 256>}, {pipeline_mode = #tpu.pipeline_mode<synchronous>, transform_indices = @transform_3, window_bounds = array<i64: 3, 256, 256>}, {pipeline_mode = #tpu.pipeline_mode<synchronous>, transform_indices = @transform_4, window_bounds = array<i64: 3, 1, 256>}, {pipeline_mode = #tpu.pipeline_mode<synchronous>, transform_indices = @transform_5, window_bounds = array<i64: 256, 256>}, {pipeline_mode = #tpu.pipeline_mode<synchronous>, transform_indices = @transform_6, window_bounds = array<i64: 1, 256>}, {transform_indices = @transform_7, window_bounds = array<i64: 1, 128, 256>}]} {
    %c0 = arith.constant 0 : index
    %c0_0 = arith.constant 0 : index
    %c0_1 = arith.constant 0 : index
    %0 = vector.load %arg3[%c0, %c0_0, %c0_1] : memref<1x128x256xbf16, #tpu.memory_space<vmem>>, vector<1x128x256xbf16>
    %1 = vector.shape_cast %0 : vector<1x128x256xbf16> to vector<128x256xbf16>
    %c0_2 = arith.constant 0 : index
    %c0_3 = arith.constant 0 : index
    %c0_4 = arith.constant 0 : index
    %2 = vector.load %arg6[%c0_2, %c0_3, %c0_4] : memref<3x256x256xbf16, #tpu.memory_space<vmem>>, vector<1x256x256xbf16>
    %3 = vector.shape_cast %2 : vector<1x256x256xbf16> to vector<256x256xbf16>
    %cst = arith.constant dense<0.000000e+00> : vector<128x256xf32>
    %4 = tpu.matmul %1, %3, %cst {dimension_numbers = #tpu.dot_dimension_numbers<[1], [1], [0], [0], [0, 0, 1, 0], [], []>} : vector<128x256xbf16>, vector<256x256xbf16>, vector<128x256xf32> -> vector<128x256xf32>
    %c0_5 = arith.constant 0 : index
    %c0_6 = arith.constant 0 : index
    %c0_7 = arith.constant 0 : index
    %5 = vector.load %arg7[%c0_5, %c0_6, %c0_7] : memref<3x1x256xf32, #tpu.memory_space<vmem>>, vector<1x1x256xf32>
    %6 = vector.shape_cast %5 : vector<1x1x256xf32> to vector<1x256xf32>
    %7 = vector.broadcast %6 : vector<1x256xf32> to vector<128x256xf32>
    %8 = arith.addf %4, %7 : vector<128x256xf32>
    %cst_8 = arith.constant 1.250000e-01 : f32
    %9 = vector.broadcast %cst_8 : f32 to vector<128x256xf32>
    %10 = arith.mulf %8, %9 : vector<128x256xf32>
    %11 = arith.truncf %10 : vector<128x256xf32> to vector<128x256xbf16>
    %c0_9 = arith.constant 0 : index
    %c0_10 = arith.constant 0 : index
    %c0_11 = arith.constant 0 : index
    %12 = vector.load %arg4[%c0_9, %c0_10, %c0_11] : memref<1x256x256xbf16, #tpu.memory_space<vmem>>, vector<1x256x256xbf16>
    %13 = vector.shape_cast %12 : vector<1x256x256xbf16> to vector<256x256xbf16>
    %c1 = arith.constant 1 : index
    %c0_12 = arith.constant 0 : index
    %c0_13 = arith.constant 0 : index
    %14 = vector.load %arg6[%c1, %c0_12, %c0_13] : memref<3x256x256xbf16, #tpu.memory_space<vmem>>, vector<1x256x256xbf16>
    %15 = vector.shape_cast %14 : vector<1x256x256xbf16> to vector<256x256xbf16>
    %cst_14 = arith.constant dense<0.000000e+00> : vector<256x256xf32>
    %16 = tpu.matmul %13, %15, %cst_14 {dimension_numbers = #tpu.dot_dimension_numbers<[1], [1], [0], [0], [0, 0, 1, 0], [], []>} : vector<256x256xbf16>, vector<256x256xbf16>, vector<256x256xf32> -> vector<256x256xf32>
    %c1_15 = arith.constant 1 : index
    %c0_16 = arith.constant 0 : index
    %c0_17 = arith.constant 0 : index
    %17 = vector.load %arg7[%c1_15, %c0_16, %c0_17] : memref<3x1x256xf32, #tpu.memory_space<vmem>>, vector<1x1x256xf32>
    %18 = vector.shape_cast %17 : vector<1x1x256xf32> to vector<1x256xf32>
    %19 = vector.broadcast %18 : vector<1x256xf32> to vector<256x256xf32>
    %20 = arith.addf %16, %19 : vector<256x256xf32>
    %21 = arith.truncf %20 : vector<256x256xf32> to vector<256x256xbf16>
    %c0_18 = arith.constant 0 : index
    %c0_19 = arith.constant 0 : index
    %c0_20 = arith.constant 0 : index
    %22 = vector.load %arg5[%c0_18, %c0_19, %c0_20] : memref<1x256x256xbf16, #tpu.memory_space<vmem>>, vector<1x256x256xbf16>
    %23 = vector.shape_cast %22 : vector<1x256x256xbf16> to vector<256x256xbf16>
    %c2 = arith.constant 2 : index
    %c0_21 = arith.constant 0 : index
    %c0_22 = arith.constant 0 : index
    %24 = vector.load %arg6[%c2, %c0_21, %c0_22] : memref<3x256x256xbf16, #tpu.memory_space<vmem>>, vector<1x256x256xbf16>
    %25 = vector.shape_cast %24 : vector<1x256x256xbf16> to vector<256x256xbf16>
    %cst_23 = arith.constant dense<0.000000e+00> : vector<256x256xf32>
    %26 = tpu.matmul %23, %25, %cst_23 {dimension_numbers = #tpu.dot_dimension_numbers<[1], [1], [0], [0], [0, 0, 1, 0], [], []>} : vector<256x256xbf16>, vector<256x256xbf16>, vector<256x256xf32> -> vector<256x256xf32>
    %c2_24 = arith.constant 2 : index
    %c0_25 = arith.constant 0 : index
    %c0_26 = arith.constant 0 : index
    %27 = vector.load %arg7[%c2_24, %c0_25, %c0_26] : memref<3x1x256xf32, #tpu.memory_space<vmem>>, vector<1x1x256xf32>
    %28 = vector.shape_cast %27 : vector<1x1x256xf32> to vector<1x256xf32>
    %29 = vector.broadcast %28 : vector<1x256xf32> to vector<256x256xf32>
    %30 = arith.addf %26, %29 : vector<256x256xf32>
    %31 = arith.truncf %30 : vector<256x256xf32> to vector<256x256xbf16>
    %32 = arith.index_cast %arg0 : i32 to index
    %33 = memref.load %arg2[%32] : memref<2xi32, #tpu.memory_space<smem>>
    %34 = tpu.iota {dimensions = array<i32: 1>} : vector<128x256xi32>
    %35 = vector.broadcast %33 : i32 to vector<128x256xi32>
    %36 = arith.cmpi slt, %34, %35 : vector<128x256xi32>
    %cst_27 = arith.constant 0.000000e+00 : f32
    %cst_28 = arith.constant -1.000000e+06 : f32
    %37 = vector.broadcast %cst_27 : f32 to vector<128x256xf32>
    %38 = vector.broadcast %cst_28 : f32 to vector<128x256xf32>
    %39 = arith.select %36, %37, %38 : vector<128x256xi1>, vector<128x256xf32>
    %40 = vector.extract_strided_slice %11 {offsets = [0, 0], sizes = [128, 64], strides = [1, 1]} : vector<128x256xbf16> to vector<128x64xbf16>
    %41 = vector.extract_strided_slice %21 {offsets = [0, 0], sizes = [256, 64], strides = [1, 1]} : vector<256x256xbf16> to vector<256x64xbf16>
    %42 = vector.extract_strided_slice %31 {offsets = [0, 0], sizes = [256, 64], strides = [1, 1]} : vector<256x256xbf16> to vector<256x64xbf16>
    %cst_29 = arith.constant dense<0.000000e+00> : vector<128x256xf32>
    %43 = tpu.matmul %40, %41, %cst_29 {dimension_numbers = #tpu.dot_dimension_numbers<[1], [1], [0], [0], [0, 0, 1, 0], [], []>} : vector<128x64xbf16>, vector<256x64xbf16>, vector<128x256xf32> -> vector<128x256xf32>
    %44 = arith.addf %43, %39 : vector<128x256xf32>
    %cst_30 = arith.constant dense<0xFF800000> : vector<128xf32>
    %45 = vector.multi_reduction <maximumf>, %44, %cst_30 [1] : vector<128x256xf32> to vector<128xf32>
    %46 = vector.shape_cast %45 : vector<128xf32> to vector<128x1xf32>
    %47 = vector.broadcast %46 : vector<128x1xf32> to vector<128x256xf32>
    %48 = arith.subf %44, %47 : vector<128x256xf32>
    %49 = math.exp %48 : vector<128x256xf32>
    %cst_31 = arith.constant dense<0.000000e+00> : vector<128xf32>
    %50 = vector.multi_reduction <add>, %49, %cst_31 [1] : vector<128x256xf32> to vector<128xf32>
    %51 = vector.shape_cast %50 : vector<128xf32> to vector<128x1xf32>
    %52 = tpu.reciprocal %51 {approx = true} : vector<128x1xf32> -> vector<128x1xf32>
    %53 = vector.broadcast %52 : vector<128x1xf32> to vector<128x256xf32>
    %54 = arith.mulf %49, %53 : vector<128x256xf32>
    %55 = arith.truncf %54 : vector<128x256xf32> to vector<128x256xbf16>
    %cst_32 = arith.constant dense<0.000000e+00> : vector<128x64xf32>
    %56 = tpu.matmul %55, %42, %cst_32 {dimension_numbers = #tpu.dot_dimension_numbers<[1], [0], [0], [1], [0, 0, 1, 1], [], []>} : vector<128x256xbf16>, vector<256x64xbf16>, vector<128x64xf32> -> vector<128x64xf32>
    %57 = arith.truncf %56 : vector<128x64xf32> to vector<128x64xbf16>
    %c0_33 = arith.constant 0 : index
    %c0_34 = arith.constant 0 : index
    %58 = vector.load %arg11[%c0_33, %c0_34] : memref<128x256xbf16, #tpu.memory_space<vmem>>, vector<128x64xbf16>
    tpu.vector_store %arg11[%c0_33, %c0_34], %57 {strides = array<i32>} : memref<128x256xbf16, #tpu.memory_space<vmem>>, vector<128x64xbf16>,
    %59 = vector.extract_strided_slice %11 {offsets = [0, 64], sizes = [128, 64], strides = [1, 1]} : vector<128x256xbf16> to vector<128x64xbf16>
    %60 = vector.extract_strided_slice %21 {offsets = [0, 64], sizes = [256, 64], strides = [1, 1]} : vector<256x256xbf16> to vector<256x64xbf16>
    %61 = vector.extract_strided_slice %31 {offsets = [0, 64], sizes = [256, 64], strides = [1, 1]} : vector<256x256xbf16> to vector<256x64xbf16>
    %cst_35 = arith.constant dense<0.000000e+00> : vector<128x256xf32>
    %62 = tpu.matmul %59, %60, %cst_35 {dimension_numbers = #tpu.dot_dimension_numbers<[1], [1], [0], [0], [0, 0, 1, 0], [], []>} : vector<128x64xbf16>, vector<256x64xbf16>, vector<128x256xf32> -> vector<128x256xf32>
    %63 = arith.addf %62, %39 : vector<128x256xf32>
    %cst_36 = arith.constant dense<0xFF800000> : vector<128xf32>
    %64 = vector.multi_reduction <maximumf>, %63, %cst_36 [1] : vector<128x256xf32> to vector<128xf32>
    %65 = vector.shape_cast %64 : vector<128xf32> to vector<128x1xf32>
    %66 = vector.broadcast %65 : vector<128x1xf32> to vector<128x256xf32>
    %67 = arith.subf %63, %66 : vector<128x256xf32>
    %68 = math.exp %67 : vector<128x256xf32>
    %cst_37 = arith.constant dense<0.000000e+00> : vector<128xf32>
    %69 = vector.multi_reduction <add>, %68, %cst_37 [1] : vector<128x256xf32> to vector<128xf32>
    %70 = vector.shape_cast %69 : vector<128xf32> to vector<128x1xf32>
    %71 = tpu.reciprocal %70 {approx = true} : vector<128x1xf32> -> vector<128x1xf32>
    %72 = vector.broadcast %71 : vector<128x1xf32> to vector<128x256xf32>
    %73 = arith.mulf %68, %72 : vector<128x256xf32>
    %74 = arith.truncf %73 : vector<128x256xf32> to vector<128x256xbf16>
    %cst_38 = arith.constant dense<0.000000e+00> : vector<128x64xf32>
    %75 = tpu.matmul %74, %61, %cst_38 {dimension_numbers = #tpu.dot_dimension_numbers<[1], [0], [0], [1], [0, 0, 1, 1], [], []>} : vector<128x256xbf16>, vector<256x64xbf16>, vector<128x64xf32> -> vector<128x64xf32>
    %76 = arith.truncf %75 : vector<128x64xf32> to vector<128x64xbf16>
    %c0_39 = arith.constant 0 : index
    %c64 = arith.constant 64 : index
    %77 = vector.load %arg11[%c0_39, %c64] : memref<128x256xbf16, #tpu.memory_space<vmem>>, vector<128x64xbf16>
    tpu.vector_store %arg11[%c0_39, %c64], %76 {strides = array<i32>} : memref<128x256xbf16, #tpu.memory_space<vmem>>, vector<128x64xbf16>,
    %78 = vector.extract_strided_slice %11 {offsets = [0, 128], sizes = [128, 64], strides = [1, 1]} : vector<128x256xbf16> to vector<128x64xbf16>
    %79 = vector.extract_strided_slice %21 {offsets = [0, 128], sizes = [256, 64], strides = [1, 1]} : vector<256x256xbf16> to vector<256x64xbf16>
    %80 = vector.extract_strided_slice %31 {offsets = [0, 128], sizes = [256, 64], strides = [1, 1]} : vector<256x256xbf16> to vector<256x64xbf16>
    %cst_40 = arith.constant dense<0.000000e+00> : vector<128x256xf32>
    %81 = tpu.matmul %78, %79, %cst_40 {dimension_numbers = #tpu.dot_dimension_numbers<[1], [1], [0], [0], [0, 0, 1, 0], [], []>} : vector<128x64xbf16>, vector<256x64xbf16>, vector<128x256xf32> -> vector<128x256xf32>
    %82 = arith.addf %81, %39 : vector<128x256xf32>
    %cst_41 = arith.constant dense<0xFF800000> : vector<128xf32>
    %83 = vector.multi_reduction <maximumf>, %82, %cst_41 [1] : vector<128x256xf32> to vector<128xf32>
    %84 = vector.shape_cast %83 : vector<128xf32> to vector<128x1xf32>
    %85 = vector.broadcast %84 : vector<128x1xf32> to vector<128x256xf32>
    %86 = arith.subf %82, %85 : vector<128x256xf32>
    %87 = math.exp %86 : vector<128x256xf32>
    %cst_42 = arith.constant dense<0.000000e+00> : vector<128xf32>
    %88 = vector.multi_reduction <add>, %87, %cst_42 [1] : vector<128x256xf32> to vector<128xf32>
    %89 = vector.shape_cast %88 : vector<128xf32> to vector<128x1xf32>
    %90 = tpu.reciprocal %89 {approx = true} : vector<128x1xf32> -> vector<128x1xf32>
    %91 = vector.broadcast %90 : vector<128x1xf32> to vector<128x256xf32>
    %92 = arith.mulf %87, %91 : vector<128x256xf32>
    %93 = arith.truncf %92 : vector<128x256xf32> to vector<128x256xbf16>
    %cst_43 = arith.constant dense<0.000000e+00> : vector<128x64xf32>
    %94 = tpu.matmul %93, %80, %cst_43 {dimension_numbers = #tpu.dot_dimension_numbers<[1], [0], [0], [1], [0, 0, 1, 1], [], []>} : vector<128x256xbf16>, vector<256x64xbf16>, vector<128x64xf32> -> vector<128x64xf32>
    %95 = arith.truncf %94 : vector<128x64xf32> to vector<128x64xbf16>
    %c0_44 = arith.constant 0 : index
    %c128 = arith.constant 128 : index
    %96 = vector.load %arg11[%c0_44, %c128] : memref<128x256xbf16, #tpu.memory_space<vmem>>, vector<128x64xbf16>
    tpu.vector_store %arg11[%c0_44, %c128], %95 {strides = array<i32>} : memref<128x256xbf16, #tpu.memory_space<vmem>>, vector<128x64xbf16>,
    %97 = vector.extract_strided_slice %11 {offsets = [0, 192], sizes = [128, 64], strides = [1, 1]} : vector<128x256xbf16> to vector<128x64xbf16>
    %98 = vector.extract_strided_slice %21 {offsets = [0, 192], sizes = [256, 64], strides = [1, 1]} : vector<256x256xbf16> to vector<256x64xbf16>
    %99 = vector.extract_strided_slice %31 {offsets = [0, 192], sizes = [256, 64], strides = [1, 1]} : vector<256x256xbf16> to vector<256x64xbf16>
    %cst_45 = arith.constant dense<0.000000e+00> : vector<128x256xf32>
    %100 = tpu.matmul %97, %98, %cst_45 {dimension_numbers = #tpu.dot_dimension_numbers<[1], [1], [0], [0], [0, 0, 1, 0], [], []>} : vector<128x64xbf16>, vector<256x64xbf16>, vector<128x256xf32> -> vector<128x256xf32>
    %101 = arith.addf %100, %39 : vector<128x256xf32>
    %cst_46 = arith.constant dense<0xFF800000> : vector<128xf32>
    %102 = vector.multi_reduction <maximumf>, %101, %cst_46 [1] : vector<128x256xf32> to vector<128xf32>
    %103 = vector.shape_cast %102 : vector<128xf32> to vector<128x1xf32>
    %104 = vector.broadcast %103 : vector<128x1xf32> to vector<128x256xf32>
    %105 = arith.subf %101, %104 : vector<128x256xf32>
    %106 = math.exp %105 : vector<128x256xf32>
    %cst_47 = arith.constant dense<0.000000e+00> : vector<128xf32>
    %107 = vector.multi_reduction <add>, %106, %cst_47 [1] : vector<128x256xf32> to vector<128xf32>
    %108 = vector.shape_cast %107 : vector<128xf32> to vector<128x1xf32>
    %109 = tpu.reciprocal %108 {approx = true} : vector<128x1xf32> -> vector<128x1xf32>
    %110 = vector.broadcast %109 : vector<128x1xf32> to vector<128x256xf32>
    %111 = arith.mulf %106, %110 : vector<128x256xf32>
    %112 = arith.truncf %111 : vector<128x256xf32> to vector<128x256xbf16>
    %cst_48 = arith.constant dense<0.000000e+00> : vector<128x64xf32>
    %113 = tpu.matmul %112, %99, %cst_48 {dimension_numbers = #tpu.dot_dimension_numbers<[1], [0], [0], [1], [0, 0, 1, 1], [], []>} : vector<128x256xbf16>, vector<256x64xbf16>, vector<128x64xf32> -> vector<128x64xf32>
    %114 = arith.truncf %113 : vector<128x64xf32> to vector<128x64xbf16>
    %c0_49 = arith.constant 0 : index
    %c192 = arith.constant 192 : index
    %115 = vector.load %arg11[%c0_49, %c192] : memref<128x256xbf16, #tpu.memory_space<vmem>>, vector<128x64xbf16>
    tpu.vector_store %arg11[%c0_49, %c192], %114 {strides = array<i32>} : memref<128x256xbf16, #tpu.memory_space<vmem>>, vector<128x64xbf16>,
    %c0_50 = arith.constant 0 : index
    %c0_51 = arith.constant 0 : index
    %116 = vector.load %arg11[%c0_50, %c0_51] : memref<128x256xbf16, #tpu.memory_space<vmem>>, vector<128x256xbf16>
    %c0_52 = arith.constant 0 : index
    %c0_53 = arith.constant 0 : index
    %117 = vector.load %arg8[%c0_52, %c0_53] : memref<256x256xbf16, #tpu.memory_space<vmem>>, vector<256x256xbf16>
    %cst_54 = arith.constant dense<0.000000e+00> : vector<128x256xf32>
    %118 = tpu.matmul %116, %117, %cst_54 {dimension_numbers = #tpu.dot_dimension_numbers<[1], [1], [0], [0], [0, 0, 1, 0], [], []>} : vector<128x256xbf16>, vector<256x256xbf16>, vector<128x256xf32> -> vector<128x256xf32>
    %c0_55 = arith.constant 0 : index
    %c0_56 = arith.constant 0 : index
    %119 = vector.load %arg9[%c0_55, %c0_56] : memref<1x256xf32, #tpu.memory_space<vmem>>, vector<1x256xf32>
    %120 = vector.broadcast %119 : vector<1x256xf32> to vector<128x256xf32>
    %121 = arith.addf %118, %120 : vector<128x256xf32>
    %c0_57 = arith.constant 0 : index
    %c0_58 = arith.constant 0 : index
    %c0_59 = arith.constant 0 : index
    %122 = vector.load %arg10[%c0_57, %c0_58, %c0_59] : memref<1x128x256xf32, #tpu.memory_space<vmem>>, vector<1x128x256xf32>
    %123 = vector.shape_cast %122 : vector<1x128x256xf32> to vector<128x256xf32>
    %124 = vector.shape_cast %121 : vector<128x256xf32> to vector<1x128x256xf32>
    tpu.vector_store %arg10[%c0_57, %c0_58, %c0_59], %124 {strides = array<i32>} : memref<1x128x256xf32, #tpu.memory_space<vmem>>, vector<1x128x256xf32>,
    return
  }
  func.func @transform_0(%arg0: i32, %arg1: i32, %arg2: memref<2xi32, #tpu.memory_space<smem>>) -> (i32, i32, i32) {
    %c0_i32 = arith.constant 0 : i32
    %c0_i32_0 = arith.constant 0 : i32
    return %arg0, %arg1, %c0_i32 : i32, i32, i32
  }
  func.func @transform_1(%arg0: i32, %arg1: i32, %arg2: memref<2xi32, #tpu.memory_space<smem>>) -> (i32, i32, i32) {
    %c0_i32 = arith.constant 0 : i32
    %c0_i32_0 = arith.constant 0 : i32
    %c0_i32_1 = arith.constant 0 : i32
    return %arg0, %c0_i32, %c0_i32_0 : i32, i32, i32
  }
  func.func @transform_2(%arg0: i32, %arg1: i32, %arg2: memref<2xi32, #tpu.memory_space<smem>>) -> (i32, i32, i32) {
    %c0_i32 = arith.constant 0 : i32
    %c0_i32_0 = arith.constant 0 : i32
    %c0_i32_1 = arith.constant 0 : i32
    return %arg0, %c0_i32, %c0_i32_0 : i32, i32, i32
  }
  func.func @transform_3(%arg0: i32, %arg1: i32, %arg2: memref<2xi32, #tpu.memory_space<smem>>) -> (i32, i32, i32) {
    %c0_i32 = arith.constant 0 : i32
    %c0_i32_0 = arith.constant 0 : i32
    %c0_i32_1 = arith.constant 0 : i32
    %c0_i32_2 = arith.constant 0 : i32
    return %c0_i32, %c0_i32_0, %c0_i32_1 : i32, i32, i32
  }
  func.func @transform_4(%arg0: i32, %arg1: i32, %arg2: memref<2xi32, #tpu.memory_space<smem>>) -> (i32, i32, i32) {
    %c0_i32 = arith.constant 0 : i32
    %c0_i32_0 = arith.constant 0 : i32
    %c0_i32_1 = arith.constant 0 : i32
    %c0_i32_2 = arith.constant 0 : i32
    return %c0_i32, %c0_i32_0, %c0_i32_1 : i32, i32, i32
  }
  func.func @transform_5(%arg0: i32, %arg1: i32, %arg2: memref<2xi32, #tpu.memory_space<smem>>) -> (i32, i32) {
    %c0_i32 = arith.constant 0 : i32
    %c0_i32_0 = arith.constant 0 : i32
    %c0_i32_1 = arith.constant 0 : i32
    return %c0_i32, %c0_i32_0 : i32, i32
  }
  func.func @transform_6(%arg0: i32, %arg1: i32, %arg2: memref<2xi32, #tpu.memory_space<smem>>) -> (i32, i32) {
    %c0_i32 = arith.constant 0 : i32
    %c0_i32_0 = arith.constant 0 : i32
    %c0_i32_1 = arith.constant 0 : i32
    return %c0_i32, %c0_i32_0 : i32, i32
  }
  func.func @transform_7(%arg0: i32, %arg1: i32, %arg2: memref<2xi32, #tpu.memory_space<smem>>) -> (i32, i32, i32) {
    %c0_i32 = arith.constant 0 : i32
    %c0_i32_0 = arith.constant 0 : i32
    return %arg0, %arg1, %c0_i32 : i32, i32, i32
  }
}

</mosaic_0001>

<llo_original>
// kernel: multi_head_attention.1
$region0: #{multi_head_attention.1}
  #allocation0 [shape = 'u32[]', space=smem, size = 0x4, offset = 0x4, fixed_abs, tag = 'smem constant byte address 0x4 - core index']
  #allocation1 [shape = 'u32[72,128]{1,0:T(1,128)}', space=vmem, size = 0x9000, scoped, tag = 'internal scratch']
  #allocation2 [shape = 'bf16[128,256]{1,0:T(8,128)(2,1)}', space=vmem, size = 0x10000, scoped, tag = 'scratch operand']
  #allocation3 [shape = 's32[1]{0}', space=sflag, size = 0x4, scoped, tag = 'scoped memory for multi_head_attention.1']
  #allocation4 [shape = 'u8[512]{0}', space=smem, size = 0x200, scoped, tag = 'prefetched SMEM operand 0']
  %s0 = inlined_call_operand.vmem [shape: s32[2], index: 0, kind: input, shape index: {}]
  %s1 = inlined_call_operand.vmem [shape: bf16[2,256,256], index: 1, kind: input, shape index: {}]
  %s2 = inlined_call_operand.vmem [shape: bf16[2,256,256], index: 2, kind: input, shape index: {}]
  %s3 = inlined_call_operand.vmem [shape: bf16[2,256,256], index: 3, kind: input, shape index: {}]
  %s4 = inlined_call_operand.vmem [shape: bf16[3,256,256], index: 4, kind: input, shape index: {}]
  %s5 = inlined_call_operand.vmem [shape: f32[3,1,256], index: 5, kind: input, shape index: {}]
  %s6 = inlined_call_operand.vmem [shape: bf16[256,256], index: 6, kind: input, shape index: {}]
  %s7 = inlined_call_operand.vmem [shape: f32[1,256], index: 7, kind: input, shape index: {}]
  %s8 = inlined_call_operand.hbm [shape: f32[2,256,256], index: 8, kind: output, shape index: {}]
  %s9 = sld [smem:[#allocation0]]
  $region61: #{multi_head_attention.1} parent=0
    _
  %s11 = ssub.s32 1, %s9
  %s12 = scalar_select 0, %s11, %s9
  %s14 = sshll.u32 %s0, 4
  %s15 = int_to_ptr.vmem [resolvable:$true] %s14
  %17 = dma.vmem_to_smem %s15, 16, [#allocation4], [#allocation3]
  %19 = dma.done [#allocation3], 16
  %20 = sfence
  $region1: #{multi_head_attention.1} parent=0
    #allocation5 [shape = 'u8[262144]{0}', space=vmem, size = 0x40000, scoped, tag = 'output window, operand 0']
    #allocation6 [shape = 's32[2]{0}', space=sflag, size = 0x8, scoped, tag = 'scoped memory for multi_head_attention.1']
    %21 = vsyncpa [#allocation6], 0
    %s22 = scalar_lea.sflag [#allocation6], 1
    %23 = vsyncpa %s22, 0
    loop: start=0, step=1, limit=6
    $region2: #{multi_head_attention.1} parent=1 // loop_pre_header
      _
    $region3: #{multi_head_attention.1} parent=1 // loop_header
      %s25 = sphi 0, %s29
      %p26 = scmp.ge.s32.totalorder %s25, 6
      %s32 = sphi 0, %s44
      %s33 = sphi 0, %s40
      %s34 = sphi 0, %s32
      %s35 = sphi 0, %s33
      %s36 = sphi 0, %s34
      %s37 = sphi 0, %s35
      %s49 = sphi 0, %s51
      %s52 = sphi 0, %s49
      %s53 = sphi 0, %s52
      %s69 = sphi 0, %s53
      %s75 = sphi 0, %s77
      %s78 = sphi 0, %s75
      %s79 = sphi 0, %s78
      %s95 = sphi 0, %s79
      %s101 = sphi 0, %s103
      %s104 = sphi 0, %s101
      %s105 = sphi 0, %s104
      %s121 = sphi 0, %s105
      %s125 = sphi 0, %s125
      %s127 = sphi 0, %s125
      %s128 = sphi 0, %s127
      %s142 = sphi 0, %s128
      %s146 = sphi 0, %s146
      %s148 = sphi 0, %s146
      %s149 = sphi 0, %s148
      %s163 = sphi 0, %s149
      %s167 = sphi 0, %s167
      %s169 = sphi 0, %s167
      %s170 = sphi 0, %s169
      %s184 = sphi 0, %s170
      %s188 = sphi 0, %s188
      %s190 = sphi 0, %s188
      %s191 = sphi 0, %s190
      %s205 = sphi 0, %s191
      %s213 = sphi 0, %s215
      %s216 = sphi 0, %s213
      %s217 = sphi 0, %s216
      %s233 = sphi 0, %s217
    $region4: #{multi_head_attention.1} parent=1 // loop_header_branch
      %28 = sbr.rel (%p26) target = $region8
    $region5: #{multi_head_attention.1} parent=1 // loop_body
      %s30 = ssub.s32 %s25, 1
      %s31 = ssub.s32 %s25, 2
      %s38 = sadd.s32 1, %s33
      %p39 = scmp.ge.s32.totalorder %s38, 2
      %s40 = scalar_select %p39, 0, %s38
      %s41 = sadd.s32 1, %s32
      %s42 = scalar_select %p39, %s41, %s32
      %p43 = scmp.ge.s32.totalorder %s42, 2
      %s44 = scalar_select %p43, 0, %s42
      %s45 = ssub.s32 %s32, %s44
      %s46 = ssub.s32 %s33, %s40
      %s47 = sor.u32 %s45, %s46
      %p48 = scmp.eq.s32.totalorder %s47, 0
      %s50 = sadd.s32 %s49, 1
      %s51 = scalar_select %p48, %s49, %s50
      %p54 = pneg %p48
      %p55 = scmp.eq.s32.totalorder %s25, 3
      %p56 = por %p54, %p55
      %p57 = scmp.ne.s32.totalorder %s49, %s52
      %p58 = scmp.eq.s32.totalorder %s25, 0
      %p59 = por %p57, %p58
      %p60 = scmp.ne.s32.totalorder %s49, %s52
      %p61 = scmp.eq.s32.totalorder %s30, 3
      %p62 = por %p60, %p61
      %p63 = scmp.ne.s32.totalorder %s52, %s53
      %p64 = scmp.eq.s32.totalorder %s30, 0
      %p65 = por %p63, %p64
      %p66 = scmp.ne.s32.totalorder %s52, %s53
      %p67 = scmp.eq.s32.totalorder %s31, 3
      %p68 = por %p66, %p67
      %p70 = scmp.ne.s32.totalorder %s53, %s69
      %p71 = scmp.eq.s32.totalorder %s31, 0
      %p72 = por %p70, %p71
      %s73 = ssub.s32 %s32, %s44
      %p74 = scmp.eq.s32.totalorder %s73, 0
      %s76 = sadd.s32 %s75, 1
      %s77 = scalar_select %p74, %s75, %s76
      %p80 = pneg %p74
      %p81 = scmp.eq.s32.totalorder %s25, 3
      %p82 = por %p80, %p81
      %p83 = scmp.ne.s32.totalorder %s75, %s78
      %p84 = scmp.eq.s32.totalorder %s25, 0
      %p85 = por %p83, %p84
      %p86 = scmp.ne.s32.totalorder %s75, %s78
      %p87 = scmp.eq.s32.totalorder %s30, 3
      %p88 = por %p86, %p87
      %p89 = scmp.ne.s32.totalorder %s78, %s79
      %p90 = scmp.eq.s32.totalorder %s30, 0
      %p91 = por %p89, %p90
      %p92 = scmp.ne.s32.totalorder %s78, %s79
      %p93 = scmp.eq.s32.totalorder %s31, 3
      %p94 = por %p92, %p93
      %p96 = scmp.ne.s32.totalorder %s79, %s95
      %p97 = scmp.eq.s32.totalorder %s31, 0
      %p98 = por %p96, %p97
      %s99 = ssub.s32 %s32, %s44
      %p100 = scmp.eq.s32.totalorder %s99, 0
      %s102 = sadd.s32 %s101, 1
      %s103 = scalar_select %p100, %s101, %s102
      %p106 = pneg %p100
      %p107 = scmp.eq.s32.totalorder %s25, 3
      %p108 = por %p106, %p107
      %p109 = scmp.ne.s32.totalorder %s101, %s104
      %p110 = scmp.eq.s32.totalorder %s25, 0
      %p111 = por %p109, %p110
      %p112 = scmp.ne.s32.totalorder %s101, %s104
      %p113 = scmp.eq.s32.totalorder %s30, 3
      %p114 = por %p112, %p113
      %p115 = scmp.ne.s32.totalorder %s104, %s105
      %p116 = scmp.eq.s32.totalorder %s30, 0
      %p117 = por %p115, %p116
      %p118 = scmp.ne.s32.totalorder %s104, %s105
      %p119 = scmp.eq.s32.totalorder %s31, 3
      %p120 = por %p118, %p119
      %p122 = scmp.ne.s32.totalorder %s105, %s121
      %p123 = scmp.eq.s32.totalorder %s31, 0
      %p124 = por %p122, %p123
      %s126 = sadd.s32 %s125, 1
      %p129 = scmp.eq.s32.totalorder %s25, 3
      %p130 = scmp.ne.s32.totalorder %s125, %s127
      %p131 = scmp.eq.s32.totalorder %s25, 0
      %p132 = por %p130, %p131
      %p133 = scmp.ne.s32.totalorder %s125, %s127
      %p134 = scmp.eq.s32.totalorder %s30, 3
      %p135 = por %p133, %p134
      %p136 = scmp.ne.s32.totalorder %s127, %s128
      %p137 = scmp.eq.s32.totalorder %s30, 0
      %p138 = por %p136, %p137
      %p139 = scmp.ne.s32.totalorder %s127, %s128
      %p140 = scmp.eq.s32.totalorder %s31, 3
      %p141 = por %p139, %p140
      %p143 = scmp.ne.s32.totalorder %s128, %s142
      %p144 = scmp.eq.s32.totalorder %s31, 0
      %p145 = por %p143, %p144
      %s147 = sadd.s32 %s146, 1
      %p150 = scmp.eq.s32.totalorder %s25, 3
      %p151 = scmp.ne.s32.totalorder %s146, %s148
      %p152 = scmp.eq.s32.totalorder %s25, 0
      %p153 = por %p151, %p152
      %p154 = scmp.ne.s32.totalorder %s146, %s148
      %p155 = scmp.eq.s32.totalorder %s30, 3
      %p156 = por %p154, %p155
      %p157 = scmp.ne.s32.totalorder %s148, %s149
      %p158 = scmp.eq.s32.totalorder %s30, 0
      %p159 = por %p157, %p158
      %p160 = scmp.ne.s32.totalorder %s148, %s149
      %p161 = scmp.eq.s32.totalorder %s31, 3
      %p162 = por %p160, %p161
      %p164 = scmp.ne.s32.totalorder %s149, %s163
      %p165 = scmp.eq.s32.totalorder %s31, 0
      %p166 = por %p164, %p165
      %s168 = sadd.s32 %s167, 1
      %p171 = scmp.eq.s32.totalorder %s25, 3
      %p172 = scmp.ne.s32.totalorder %s167, %s169
      %p173 = scmp.eq.s32.totalorder %s25, 0
      %p174 = por %p172, %p173
      %p175 = scmp.ne.s32.totalorder %s167, %s169
      %p176 = scmp.eq.s32.totalorder %s30, 3
      %p177 = por %p175, %p176
      %p178 = scmp.ne.s32.totalorder %s169, %s170
      %p179 = scmp.eq.s32.totalorder %s30, 0
      %p180 = por %p178, %p179
      %p181 = scmp.ne.s32.totalorder %s169, %s170
      %p182 = scmp.eq.s32.totalorder %s31, 3
      %p183 = por %p181, %p182
      %p185 = scmp.ne.s32.totalorder %s170, %s184
      %p186 = scmp.eq.s32.totalorder %s31, 0
      %p187 = por %p185, %p186
      %s189 = sadd.s32 %s188, 1
      %p192 = scmp.eq.s32.totalorder %s25, 3
      %p193 = scmp.ne.s32.totalorder %s188, %s190
      %p194 = scmp.eq.s32.totalorder %s25, 0
      %p195 = por %p193, %p194
      %p196 = scmp.ne.s32.totalorder %s188, %s190
      %p197 = scmp.eq.s32.totalorder %s30, 3
      %p198 = por %p196, %p197
      %p199 = scmp.ne.s32.totalorder %s190, %s191
      %p200 = scmp.eq.s32.totalorder %s30, 0
      %p201 = por %p199, %p200
      %p202 = scmp.ne.s32.totalorder %s190, %s191
      %p203 = scmp.eq.s32.totalorder %s31, 3
      %p204 = por %p202, %p203
      %p206 = scmp.ne.s32.totalorder %s191, %s205
      %p207 = scmp.eq.s32.totalorder %s31, 0
      %p208 = por %p206, %p207
      %s209 = ssub.s32 %s32, %s44
      %s210 = ssub.s32 %s33, %s40
      %s211 = sor.u32 %s209, %s210
      %p212 = scmp.eq.s32.totalorder %s211, 0
      %s214 = sadd.s32 %s213, 1
      %s215 = scalar_select %p212, %s213, %s214
      %p218 = pneg %p212
      %p219 = scmp.eq.s32.totalorder %s25, 3
      %p220 = por %p218, %p219
      %p221 = scmp.ne.s32.totalorder %s213, %s216
      %p222 = scmp.eq.s32.totalorder %s25, 0
      %p223 = por %p221, %p222
      %p224 = scmp.ne.s32.totalorder %s213, %s216
      %p225 = scmp.eq.s32.totalorder %s30, 3
      %p226 = por %p224, %p225
      %p227 = scmp.ne.s32.totalorder %s216, %s217
      %p228 = scmp.eq.s32.totalorder %s30, 0
      %p229 = por %p227, %p228
      %p230 = scmp.ne.s32.totalorder %s216, %s217
      %p231 = scmp.eq.s32.totalorder %s31, 3
      %p232 = por %p230, %p231
      %p234 = scmp.ne.s32.totalorder %s217, %s233
      %p235 = scmp.eq.s32.totalorder %s31, 0
      %p236 = por %p234, %p235
      %p237 = scmp.le.s32.totalorder 1, %s25
      %p238 = scmp.lt.s32.totalorder %s25, 5
      %p239 = pnand %p237, %p238
      %p240 = pneg %p239
      // Predicated region
      $region9: #{multi_head_attention.1} parent=5 // pred_check
        _
      $region10: #{multi_head_attention.1} parent=5 // pred_check_branch
        %242 = sbr.rel (%p239) target = $region12
      $region11: #{multi_head_attention.1} parent=5 // pred_region
        %s243 = ssub.s32 %s25, 1
        // Predicated region
        $region13: #{multi_head_attention.1} parent=11 // pred_check
          %p244 = pneg %p138
        $region14: #{multi_head_attention.1} parent=11 // pred_check_branch
          %246 = sbr.rel (%p244) target = $region16
        $region15: #{multi_head_attention.1} parent=11 // pred_region
          _
        $region16: #{multi_head_attention.1} parent=11 // pred_fallthru
          _
        // Predicated region
        $region17: #{multi_head_attention.1} parent=11 // pred_check
          %p247 = pneg %p159
        $region18: #{multi_head_attention.1} parent=11 // pred_check_branch
          %249 = sbr.rel (%p247) target = $region20
        $region19: #{multi_head_attention.1} parent=11 // pred_region
          _
        $region20: #{multi_head_attention.1} parent=11 // pred_fallthru
          _
        // Predicated region
        $region21: #{multi_head_attention.1} parent=11 // pred_check
          %p250 = pneg %p180
        $region22: #{multi_head_attention.1} parent=11 // pred_check_branch
          %252 = sbr.rel (%p250) target = $region24
        $region23: #{multi_head_attention.1} parent=11 // pred_region
          _
        $region24: #{multi_head_attention.1} parent=11 // pred_fallthru
          _
        // Predicated region
        $region25: #{multi_head_attention.1} parent=11 // pred_check
          %p253 = pneg %p201
        $region26: #{multi_head_attention.1} parent=11 // pred_check_branch
          %255 = sbr.rel (%p253) target = $region28
        $region27: #{multi_head_attention.1} parent=11 // pred_region
          _
        $region28: #{multi_head_attention.1} parent=11 // pred_fallthru
          _
      $region12: #{multi_head_attention.1} parent=5 // pred_fallthru
        _
      %p256 = scmp.lt.s32.totalorder %s25, 4
      // Predicated region
      $region29: #{multi_head_attention.1} parent=5 // pred_check
        %p257 = pneg %p256
      $region30: #{multi_head_attention.1} parent=5 // pred_check_branch
        %259 = sbr.rel (%p257) target = $region32
      $region31: #{multi_head_attention.1} parent=5 // pred_region
        // Predicated region
        $region33: #{multi_head_attention.1} parent=31 // pred_check
          %p260 = pneg %p59
        $region34: #{multi_head_attention.1} parent=31 // pred_check_branch
          %262 = sbr.rel (%p260) target = $region36
        $region35: #{multi_head_attention.1} parent=31 // pred_region
          %s263 = smul.u32 16, %s33
          %p264 = scmp.lt.s32.totalorder %s32, 1
          %s265 = scalar_select %p264, %s32, 1
          %p266 = scmp.lt.s32.totalorder %s263, 31
          %s267 = scalar_select %p266, %s263, 31
          %s268 = smul.addr %s267, 2
          %s269 = smul.addr %s265, 64
          %s270 = sadd.s32 %s268, %s269
          %s271 = smul.addr %s270, 4
          %s272 = scalar_lea.vmem %s1, %s271
          %s273 = smul.u32 16, %s33
        $region36: #{multi_head_attention.1} parent=31 // pred_fallthru
          _
        // Predicated region
        $region37: #{multi_head_attention.1} parent=31 // pred_check
          %p274 = pneg %p85
        $region38: #{multi_head_attention.1} parent=31 // pred_check_branch
          %276 = sbr.rel (%p274) target = $region40
        $region39: #{multi_head_attention.1} parent=31 // pred_region
          %p277 = scmp.lt.s32.totalorder %s32, 1
          %s278 = scalar_select %p277, %s32, 1
          %s279 = smul.addr %s278, 64
          %s280 = smul.addr %s279, 4
          %s281 = scalar_lea.vmem %s2, %s280
        $region40: #{multi_head_attention.1} parent=31 // pred_fallthru
          _
        // Predicated region
        $region41: #{multi_head_attention.1} parent=31 // pred_check
          %p282 = pneg %p111
        $region42: #{multi_head_attention.1} parent=31 // pred_check_branch
          %284 = sbr.rel (%p282) target = $region44
        $region43: #{multi_head_attention.1} parent=31 // pred_region
          %p285 = scmp.lt.s32.totalorder %s32, 1
          %s286 = scalar_select %p285, %s32, 1
          %s287 = smul.addr %s286, 64
          %s288 = smul.addr %s287, 4
          %s289 = scalar_lea.vmem %s3, %s288
        $region44: #{multi_head_attention.1} parent=31 // pred_fallthru
          _
      $region32: #{multi_head_attention.1} parent=5 // pred_fallthru
        _
      %p290 = scmp.le.s32.totalorder 1, %s25
      %p291 = scmp.lt.s32.totalorder %s25, 5
      %p292 = pnand %p290, %p291
      %p293 = pneg %p292
      // Predicated region
      $region45: #{multi_head_attention.1} parent=5 // pred_check
        _
      $region46: #{multi_head_attention.1} parent=5 // pred_check_branch
        %295 = sbr.rel (%p292) target = $region48
      $region47: #{multi_head_attention.1} parent=5 // pred_region
        %s296 = ssub.s32 %s25, 1
        %s297 = smul.u32 16, %s35
        %p298 = scmp.lt.s32.totalorder %s34, 1
        %s299 = scalar_select %p298, %s34, 1
        %p300 = scmp.lt.s32.totalorder %s297, 31
        %s301 = scalar_select %p300, %s297, 31
        %s302 = smul.addr %s301, 2
        %s303 = smul.addr %s299, 64
        %s304 = sadd.s32 %s302, %s303
        %s305 = smul.addr %s304, 4
        %s306 = scalar_lea.vmem %s1, %s305
        %p307 = pneg %p65
        %p308 = pneg %p62
        %p309 = scmp.lt.s32.totalorder %s34, 1
        %s310 = scalar_select %p309, %s34, 1
        %s311 = smul.addr %s310, 64
        %s312 = smul.addr %s311, 4
        %s313 = scalar_lea.vmem %s2, %s312
        %p314 = pneg %p91
        %p315 = pneg %p88
        %p316 = scmp.lt.s32.totalorder %s34, 1
        %s317 = scalar_select %p316, %s34, 1
        %s318 = smul.addr %s317, 64
        %s319 = smul.addr %s318, 4
        %s320 = scalar_lea.vmem %s3, %s319
        %p321 = pneg %p117
        %p322 = pneg %p114
        %p323 = pneg %p138
        %p324 = pneg %p135
        %p325 = pneg %p159
        %p326 = pneg %p156
        %p327 = pneg %p180
        %p328 = pneg %p177
        %p329 = pneg %p201
        %p330 = pneg %p198
        %p331 = pneg %p229
        %p332 = pneg %p226
        %s333 = sand.u32 %s216, 1
        %s334 = scalar_lea.sflag [#allocation6], %s333
        %s335 = sand.u32 %s216, 1
        %s336 = smul.addr %s335, 256
        %s337 = scalar_lea.vmem [#allocation5], %s336
        %s338 = smul.u32 16, %s35
        %p339 = scmp.lt.s32.totalorder %s34, 1
        %s340 = scalar_select %p339, %s34, 1
        %p341 = scmp.lt.s32.totalorder %s338, 31
        %s342 = scalar_select %p341, %s338, 31
        %s343 = smul.addr %s342, 2
        %s344 = smul.addr %s340, 64
        %s345 = sadd.s32 %s343, %s344
        %s346 = smul.addr %s345, 4
        %s347 = scalar_lea.vmem %s1, %s346
        %s348 = smul.u32 16, %s35
        %p349 = scmp.lt.s32.totalorder %s34, 1
        %s350 = scalar_select %p349, %s34, 1
        %s351 = smul.addr %s350, 64
        %s352 = smul.addr %s351, 4
        %s353 = scalar_lea.vmem %s2, %s352
        %p354 = scmp.lt.s32.totalorder %s34, 1
        %s355 = scalar_select %p354, %s34, 1
        %s356 = smul.addr %s355, 64
        %s357 = smul.addr %s356, 4
        %s358 = scalar_lea.vmem %s3, %s357
        %s359 = smul.u32 16, %s35
        %v360 = vld [vmem:[%s347] sm:$0xff]
        %v361 = vld [vmem:[%s347 + $0x8] sm:$0xff]
        %v362 = vld [vmem:[%s347 + $0x10] sm:$0xff]
        %v363 = vld [vmem:[%s347 + $0x18] sm:$0xff]
        %v364 = vld [vmem:[%s347 + $0x20] sm:$0xff]
        %v365 = vld [vmem:[%s347 + $0x28] sm:$0xff]
        %v366 = vld [vmem:[%s347 + $0x30] sm:$0xff]
        %v367 = vld [vmem:[%s347 + $0x38] sm:$0xff]
        %v368 = vld [vmem:[%s347 + $0x40] sm:$0xff]
        %v369 = vld [vmem:[%s347 + $0x48] sm:$0xff]
        %v370 = vld [vmem:[%s347 + $0x50] sm:$0xff]
        %v371 = vld [vmem:[%s347 + $0x58] sm:$0xff]
        %v372 = vld [vmem:[%s347 + $0x60] sm:$0xff]
        %v373 = vld [vmem:[%s347 + $0x68] sm:$0xff]
        %v374 = vld [vmem:[%s347 + $0x70] sm:$0xff]
        %v375 = vld [vmem:[%s347 + $0x78] sm:$0xff]
        %v376 = vld [vmem:[%s4] sm:$0xff]
        %v377 = vld [vmem:[%s4 + $0x8] sm:$0xff]
        %v378 = vld [vmem:[%s4 + $0x10] sm:$0xff]
        %v379 = vld [vmem:[%s4 + $0x18] sm:$0xff]
        %v380 = vld [vmem:[%s4 + $0x20] sm:$0xff]
        %v381 = vld [vmem:[%s4 + $0x28] sm:$0xff]
        %v382 = vld [vmem:[%s4 + $0x30] sm:$0xff]
        %v383 = vld [vmem:[%s4 + $0x38] sm:$0xff]
        %v384 = vld [vmem:[%s4 + $0x40] sm:$0xff]
        %v385 = vld [vmem:[%s4 + $0x48] sm:$0xff]
        %v386 = vld [vmem:[%s4 + $0x50] sm:$0xff]
        %v387 = vld [vmem:[%s4 + $0x58] sm:$0xff]
        %v388 = vld [vmem:[%s4 + $0x60] sm:$0xff]
        %v389 = vld [vmem:[%s4 + $0x68] sm:$0xff]
        %v390 = vld [vmem:[%s4 + $0x70] sm:$0xff]
        %v391 = vld [vmem:[%s4 + $0x78] sm:$0xff]
        %v392 = vld [vmem:[%s4 + $0x80] sm:$0xff]
        %v393 = vld [vmem:[%s4 + $0x88] sm:$0xff]
        %v394 = vld [vmem:[%s4 + $0x90] sm:$0xff]
        %v395 = vld [vmem:[%s4 + $0x98] sm:$0xff]
        %v396 = vld [vmem:[%s4 + $0xa0] sm:$0xff]
        %v397 = vld [vmem:[%s4 + $0xa8] sm:$0xff]
        %v398 = vld [vmem:[%s4 + $0xb0] sm:$0xff]
        %v399 = vld [vmem:[%s4 + $0xb8] sm:$0xff]
        %v400 = vld [vmem:[%s4 + $0xc0] sm:$0xff]
        %v401 = vld [vmem:[%s4 + $0xc8] sm:$0xff]
        %v402 = vld [vmem:[%s4 + $0xd0] sm:$0xff]
        %v403 = vld [vmem:[%s4 + $0xd8] sm:$0xff]
        %v404 = vld [vmem:[%s4 + $0xe0] sm:$0xff]
        %v405 = vld [vmem:[%s4 + $0xe8] sm:$0xff]
        %v406 = vld [vmem:[%s4 + $0xf0] sm:$0xff]
        %v407 = vld [vmem:[%s4 + $0xf8] sm:$0xff]
        %v408 = vld [vmem:[%s5] sm:$0x3]
        %v410 = vperm.slane %v408, 0
        %v411 = vperm.slane %v408, 1
        %v430 = vunpack.c.l.b16 %v360
        %v431 = vunpack.c.h.b16 %v360
        %v432 = vunpack.c.l.b16 %v361
        %v433 = vunpack.c.h.b16 %v361
        %v434 = vunpack.c.l.b16 %v362
        %v435 = vunpack.c.h.b16 %v362
        %v436 = vunpack.c.l.b16 %v363
        %v437 = vunpack.c.h.b16 %v363
        %v438 = vunpack.c.l.b16 %v364
        %v439 = vunpack.c.h.b16 %v364
        %v440 = vunpack.c.l.b16 %v365
        %v441 = vunpack.c.h.b16 %v365
        %v442 = vunpack.c.l.b16 %v366
        %v443 = vunpack.c.h.b16 %v366
        %v444 = vunpack.c.l.b16 %v367
        %v445 = vunpack.c.h.b16 %v367
        %v446 = vunpack.c.l.b16 %v368
        %v447 = vunpack.c.h.b16 %v368
        %v448 = vunpack.c.l.b16 %v369
        %v449 = vunpack.c.h.b16 %v369
        %v450 = vunpack.c.l.b16 %v370
        %v451 = vunpack.c.h.b16 %v370
        %v452 = vunpack.c.l.b16 %v371
        %v453 = vunpack.c.h.b16 %v371
        %v454 = vunpack.c.l.b16 %v372
        %v455 = vunpack.c.h.b16 %v372
        %v456 = vunpack.c.l.b16 %v373
        %v457 = vunpack.c.h.b16 %v373
        %v458 = vunpack.c.l.b16 %v374
        %v459 = vunpack.c.h.b16 %v374
        %v460 = vunpack.c.l.b16 %v375
        %v461 = vunpack.c.h.b16 %v375
        %v462 = vpack.c.b16 %v432, %v430
        %v463 = vpack.c.b16 %v433, %v431
        %v464 = vpack.c.b16 %v436, %v434
        %v465 = vpack.c.b16 %v437, %v435
        %v466 = vpack.c.b16 %v440, %v438
        %v467 = vpack.c.b16 %v441, %v439
        %v468 = vpack.c.b16 %v444, %v442
        %v469 = vpack.c.b16 %v445, %v443
        %v470 = vpack.c.b16 %v448, %v446
        %v471 = vpack.c.b16 %v449, %v447
        %v472 = vpack.c.b16 %v452, %v450
        %v473 = vpack.c.b16 %v453, %v451
        %v474 = vpack.c.b16 %v456, %v454
        %v475 = vpack.c.b16 %v457, %v455
        %v476 = vpack.c.b16 %v460, %v458
        %v477 = vpack.c.b16 %v461, %v459
        %v526 = vunpack.c.l.b16 %v376
        %v527 = vunpack.c.h.b16 %v376
        %v528 = vunpack.c.l.b16 %v377
        %v529 = vunpack.c.h.b16 %v377
        %v530 = vunpack.c.l.b16 %v378
        %v531 = vunpack.c.h.b16 %v378
        %v532 = vunpack.c.l.b16 %v379
        %v533 = vunpack.c.h.b16 %v379
        %v534 = vunpack.c.l.b16 %v380
        %v535 = vunpack.c.h.b16 %v380
        %v536 = vunpack.c.l.b16 %v381
        %v537 = vunpack.c.h.b16 %v381
        %v538 = vunpack.c.l.b16 %v382
        %v539 = vunpack.c.h.b16 %v382
        %v540 = vunpack.c.l.b16 %v383
        %v541 = vunpack.c.h.b16 %v383
        %v542 = vunpack.c.l.b16 %v384
        %v543 = vunpack.c.h.b16 %v384
        %v544 = vunpack.c.l.b16 %v385
        %v545 = vunpack.c.h.b16 %v385
        %v546 = vunpack.c.l.b16 %v386
        %v547 = vunpack.c.h.b16 %v386
        %v548 = vunpack.c.l.b16 %v387
        %v549 = vunpack.c.h.b16 %v387
        %v550 = vunpack.c.l.b16 %v388
        %v551 = vunpack.c.h.b16 %v388
        %v552 = vunpack.c.l.b16 %v389
        %v553 = vunpack.c.h.b16 %v389
        %v554 = vunpack.c.l.b16 %v390
        %v555 = vunpack.c.h.b16 %v390
        %v556 = vunpack.c.l.b16 %v391
        %v557 = vunpack.c.h.b16 %v391
        %v558 = vunpack.c.l.b16 %v392
        %v559 = vunpack.c.h.b16 %v392
        %v560 = vunpack.c.l.b16 %v393
        %v561 = vunpack.c.h.b16 %v393
        %v562 = vunpack.c.l.b16 %v394
        %v563 = vunpack.c.h.b16 %v394
        %v564 = vunpack.c.l.b16 %v395
        %v565 = vunpack.c.h.b16 %v395
        %v566 = vunpack.c.l.b16 %v396
        %v567 = vunpack.c.h.b16 %v396
        %v568 = vunpack.c.l.b16 %v397
        %v569 = vunpack.c.h.b16 %v397
        %v570 = vunpack.c.l.b16 %v398
        %v571 = vunpack.c.h.b16 %v398
        %v572 = vunpack.c.l.b16 %v399
        %v573 = vunpack.c.h.b16 %v399
        %v574 = vunpack.c.l.b16 %v400
        %v575 = vunpack.c.h.b16 %v400
        %v576 = vunpack.c.l.b16 %v401
        %v577 = vunpack.c.h.b16 %v401
        %v578 = vunpack.c.l.b16 %v402
        %v579 = vunpack.c.h.b16 %v402
        %v580 = vunpack.c.l.b16 %v403
        %v581 = vunpack.c.h.b16 %v403
        %v582 = vunpack.c.l.b16 %v404
        %v583 = vunpack.c.h.b16 %v404
        %v584 = vunpack.c.l.b16 %v405
        %v585 = vunpack.c.h.b16 %v405
        %v586 = vunpack.c.l.b16 %v406
        %v587 = vunpack.c.h.b16 %v406
        %v588 = vunpack.c.l.b16 %v407
        %v589 = vunpack.c.h.b16 %v407
        %v590 = vpack.c.b16 %v528, %v526
        %v591 = vpack.c.b16 %v529, %v527
        %v592 = vpack.c.b16 %v532, %v530
        %v593 = vpack.c.b16 %v533, %v531
        %v594 = vpack.c.b16 %v536, %v534
        %v595 = vpack.c.b16 %v537, %v535
        %v596 = vpack.c.b16 %v540, %v538
        %v597 = vpack.c.b16 %v541, %v539
        %v598 = vpack.c.b16 %v544, %v542
        %v599 = vpack.c.b16 %v545, %v543
        %v600 = vpack.c.b16 %v548, %v546
        %v601 = vpack.c.b16 %v549, %v547
        %v602 = vpack.c.b16 %v552, %v550
        %v603 = vpack.c.b16 %v553, %v551
        %v604 = vpack.c.b16 %v556, %v554
        %v605 = vpack.c.b16 %v557, %v555
        %v606 = vpack.c.b16 %v560, %v558
        %v607 = vpack.c.b16 %v561, %v559
        %v608 = vpack.c.b16 %v564, %v562
        %v609 = vpack.c.b16 %v565, %v563
        %v610 = vpack.c.b16 %v568, %v566
        %v611 = vpack.c.b16 %v569, %v567
        %v612 = vpack.c.b16 %v572, %v570
        %v613 = vpack.c.b16 %v573, %v571
        %v614 = vpack.c.b16 %v576, %v574
        %v615 = vpack.c.b16 %v577, %v575
        %v616 = vpack.c.b16 %v580, %v578
        %v617 = vpack.c.b16 %v581, %v579
        %v618 = vpack.c.b16 %v584, %v582
        %v619 = vpack.c.b16 %v585, %v583
        %v620 = vpack.c.b16 %v588, %v586
        %v621 = vpack.c.b16 %v589, %v587
        %654 = vmatpush.bf16.xpose.msra.mxu0 %v604
        %655 = vmatpush.bf16.xpose.msra.mxu0 %v602
        %656 = vmatpush.bf16.xpose.msra.mxu0 %v600
        %657 = vmatpush.bf16.xpose.msra.mxu0 %v598
        %658 = vmatpush.bf16.xpose.msra.mxu0 %v596
        %659 = vmatpush.bf16.xpose.msra.mxu0 %v594
        %660 = vmatpush.bf16.xpose.msra.mxu0 %v592
        %661 = vmatpush.bf16.xpose.msra.mxu0 %v590
        %662 = vmatmul.bf16.gmra.mxu0 %v462
        %v663 = vpop.f32.mrf.mxu0
        %v664 = vadd.f32 %v410, %v663
        %v665 = vpop.f32.mrf.mxu0
        %v666 = vadd.f32 %v410, %v665
        %667 = vmatmul.bf16.gmra.mxu0 %v464
        %v668 = vpop.f32.mrf.mxu0
        %v669 = vadd.f32 %v410, %v668
        %v670 = vpop.f32.mrf.mxu0
        %v671 = vadd.f32 %v410, %v670
        %672 = vmatmul.bf16.gmra.mxu0 %v466
        %v673 = vpop.f32.mrf.mxu0
        %v674 = vadd.f32 %v410, %v673
        %v675 = vpop.f32.mrf.mxu0
        %v676 = vadd.f32 %v410, %v675
        %677 = vmatmul.bf16.gmra.mxu0 %v468
        %v678 = vpop.f32.mrf.mxu0
        %v679 = vadd.f32 %v410, %v678
        %v680 = vpop.f32.mrf.mxu0
        %v681 = vadd.f32 %v410, %v680
        %682 = vmatmul.bf16.gmra.mxu0 %v470
        %v683 = vpop.f32.mrf.mxu0
        %v684 = vadd.f32 %v410, %v683
        %v685 = vpop.f32.mrf.mxu0
        %v686 = vadd.f32 %v410, %v685
        %687 = vmatmul.bf16.gmra.mxu0 %v472
        %v688 = vpop.f32.mrf.mxu0
        %v689 = vadd.f32 %v410, %v688
        %v690 = vpop.f32.mrf.mxu0
        %v691 = vadd.f32 %v410, %v690
        %692 = vmatmul.bf16.gmra.mxu0 %v474
        %v693 = vpop.f32.mrf.mxu0
        %v694 = vadd.f32 %v410, %v693
        %v695 = vpop.f32.mrf.mxu0
        %v696 = vadd.f32 %v410, %v695
        %697 = vmatmul.bf16.gmra.mxu0 %v476
        %v698 = vpop.f32.mrf.mxu0
        %v699 = vadd.f32 %v410, %v698
        %v700 = vpop.f32.mrf.mxu0
        %v701 = vadd.f32 %v410, %v700
        %702 = vdwg.mxu0
        %703 = vmatpush.bf16.xpose.msra.mxu0 %v605
        %704 = vmatpush.bf16.xpose.msra.mxu0 %v603
        %705 = vmatpush.bf16.xpose.msra.mxu0 %v601
        %706 = vmatpush.bf16.xpose.msra.mxu0 %v599
        %707 = vmatpush.bf16.xpose.msra.mxu0 %v597
        %708 = vmatpush.bf16.xpose.msra.mxu0 %v595
        %709 = vmatpush.bf16.xpose.msra.mxu0 %v593
        %710 = vmatpush.bf16.xpose.msra.mxu0 %v591
        %711 = vmatmul.bf16.gmra.mxu0 %v463
        %v712 = vpop.f32.mrf.mxu0
        %v713 = vadd.f32 %v664, %v712
        %v714 = vpop.f32.mrf.mxu0
        %v715 = vadd.f32 %v666, %v714
        %716 = vmatmul.bf16.gmra.mxu0 %v465
        %v717 = vpop.f32.mrf.mxu0
        %v718 = vadd.f32 %v669, %v717
        %v719 = vpop.f32.mrf.mxu0
        %v720 = vadd.f32 %v671, %v719
        %721 = vmatmul.bf16.gmra.mxu0 %v467
        %v722 = vpop.f32.mrf.mxu0
        %v723 = vadd.f32 %v674, %v722
        %v724 = vpop.f32.mrf.mxu0
        %v725 = vadd.f32 %v676, %v724
        %726 = vmatmul.bf16.gmra.mxu0 %v469
        %v727 = vpop.f32.mrf.mxu0
        %v728 = vadd.f32 %v679, %v727
        %v729 = vpop.f32.mrf.mxu0
        %v730 = vadd.f32 %v681, %v729
        %731 = vmatmul.bf16.gmra.mxu0 %v471
        %v732 = vpop.f32.mrf.mxu0
        %v733 = vadd.f32 %v684, %v732
        %v734 = vpop.f32.mrf.mxu0
        %v735 = vadd.f32 %v686, %v734
        %736 = vmatmul.bf16.gmra.mxu0 %v473
        %v737 = vpop.f32.mrf.mxu0
        %v738 = vadd.f32 %v689, %v737
        %v739 = vpop.f32.mrf.mxu0
        %v740 = vadd.f32 %v691, %v739
        %741 = vmatmul.bf16.gmra.mxu0 %v475
        %v742 = vpop.f32.mrf.mxu0
        %v743 = vadd.f32 %v694, %v742
        %v744 = vpop.f32.mrf.mxu0
        %v745 = vadd.f32 %v696, %v744
        %746 = vmatmul.bf16.gmra.mxu0 %v477
        %v747 = vpop.f32.mrf.mxu0
        %v748 = vadd.f32 %v699, %v747
        %v749 = vpop.f32.mrf.mxu0
        %v750 = vadd.f32 %v701, %v749
        %751 = vdwg.mxu0
        %752 = vmatpush.bf16.xpose.msra.mxu0 %v620
        %753 = vmatpush.bf16.xpose.msra.mxu0 %v618
        %754 = vmatpush.bf16.xpose.msra.mxu0 %v616
        %755 = vmatpush.bf16.xpose.msra.mxu0 %v614
        %756 = vmatpush.bf16.xpose.msra.mxu0 %v612
        %757 = vmatpush.bf16.xpose.msra.mxu0 %v610
        %758 = vmatpush.bf16.xpose.msra.mxu0 %v608
        %759 = vmatpush.bf16.xpose.msra.mxu0 %v606
        %760 = vmatmul.bf16.gmra.mxu0 %v462
        %v761 = vpop.f32.mrf.mxu0
        %v762 = vadd.f32 %v411, %v761
        %v763 = vpop.f32.mrf.mxu0
        %v764 = vadd.f32 %v411, %v763
        %765 = vmatmul.bf16.gmra.mxu0 %v464
        %v766 = vpop.f32.mrf.mxu0
        %v767 = vadd.f32 %v411, %v766
        %v768 = vpop.f32.mrf.mxu0
        %v769 = vadd.f32 %v411, %v768
        %770 = vmatmul.bf16.gmra.mxu0 %v466
        %v771 = vpop.f32.mrf.mxu0
        %v772 = vadd.f32 %v411, %v771
        %v773 = vpop.f32.mrf.mxu0
        %v774 = vadd.f32 %v411, %v773
        %775 = vmatmul.bf16.gmra.mxu0 %v468
        %v776 = vpop.f32.mrf.mxu0
        %v777 = vadd.f32 %v411, %v776
        %v778 = vpop.f32.mrf.mxu0
        %v779 = vadd.f32 %v411, %v778
        %780 = vmatmul.bf16.gmra.mxu0 %v470
        %v781 = vpop.f32.mrf.mxu0
        %v782 = vadd.f32 %v411, %v781
        %v783 = vpop.f32.mrf.mxu0
        %v784 = vadd.f32 %v411, %v783
        %785 = vmatmul.bf16.gmra.mxu0 %v472
        %v786 = vpop.f32.mrf.mxu0
        %v787 = vadd.f32 %v411, %v786
        %v788 = vpop.f32.mrf.mxu0
        %v789 = vadd.f32 %v411, %v788
        %790 = vmatmul.bf16.gmra.mxu0 %v474
        %v791 = vpop.f32.mrf.mxu0
        %v792 = vadd.f32 %v411, %v791
        %v793 = vpop.f32.mrf.mxu0
        %v794 = vadd.f32 %v411, %v793
        %795 = vmatmul.bf16.gmra.mxu0 %v476
        %v796 = vpop.f32.mrf.mxu0
        %v797 = vadd.f32 %v411, %v796
        %v798 = vpop.f32.mrf.mxu0
        %v799 = vadd.f32 %v411, %v798
        %800 = vdwg.mxu0
        %801 = vmatpush.bf16.xpose.msra.mxu0 %v621
        %802 = vmatpush.bf16.xpose.msra.mxu0 %v619
        %803 = vmatpush.bf16.xpose.msra.mxu0 %v617
        %804 = vmatpush.bf16.xpose.msra.mxu0 %v615
        %805 = vmatpush.bf16.xpose.msra.mxu0 %v613
        %806 = vmatpush.bf16.xpose.msra.mxu0 %v611
        %807 = vmatpush.bf16.xpose.msra.mxu0 %v609
        %808 = vmatpush.bf16.xpose.msra.mxu0 %v607
        %809 = vmatmul.bf16.gmra.mxu0 %v463
        %v810 = vpop.f32.mrf.mxu0
        %v811 = vadd.f32 %v762, %v810
        %v812 = vpop.f32.mrf.mxu0
        %v813 = vadd.f32 %v764, %v812
        %814 = vmatmul.bf16.gmra.mxu0 %v465
        %v815 = vpop.f32.mrf.mxu0
        %v816 = vadd.f32 %v767, %v815
        %v817 = vpop.f32.mrf.mxu0
        %v818 = vadd.f32 %v769, %v817
        %819 = vmatmul.bf16.gmra.mxu0 %v467
        %v820 = vpop.f32.mrf.mxu0
        %v821 = vadd.f32 %v772, %v820
        %v822 = vpop.f32.mrf.mxu0
        %v823 = vadd.f32 %v774, %v822
        %824 = vmatmul.bf16.gmra.mxu0 %v469
        %v825 = vpop.f32.mrf.mxu0
        %v826 = vadd.f32 %v777, %v825
        %v827 = vpop.f32.mrf.mxu0
        %v828 = vadd.f32 %v779, %v827
        %829 = vmatmul.bf16.gmra.mxu0 %v471
        %v830 = vpop.f32.mrf.mxu0
        %v831 = vadd.f32 %v782, %v830
        %v832 = vpop.f32.mrf.mxu0
        %v833 = vadd.f32 %v784, %v832
        %834 = vmatmul.bf16.gmra.mxu0 %v473
        %v835 = vpop.f32.mrf.mxu0
        %v836 = vadd.f32 %v787, %v835
        %v837 = vpop.f32.mrf.mxu0
        %v838 = vadd.f32 %v789, %v837
        %839 = vmatmul.bf16.gmra.mxu0 %v475
        %v840 = vpop.f32.mrf.mxu0
        %v841 = vadd.f32 %v792, %v840
        %v842 = vpop.f32.mrf.mxu0
        %v843 = vadd.f32 %v794, %v842
        %844 = vmatmul.bf16.gmra.mxu0 %v477
        %v845 = vpop.f32.mrf.mxu0
        %v846 = vadd.f32 %v797, %v845
        %v847 = vpop.f32.mrf.mxu0
        %v848 = vadd.f32 %v799, %v847
        %849 = vdwg.mxu0
        %v850 = vmul.f32 %v713, 0.125
        %v851 = vmul.f32 %v811, 0.125
        %v852 = vmul.f32 %v715, 0.125
        %v853 = vmul.f32 %v813, 0.125
        %v854 = vmul.f32 %v718, 0.125
        %v855 = vmul.f32 %v816, 0.125
        %v856 = vmul.f32 %v720, 0.125
        %v857 = vmul.f32 %v818, 0.125
        %v858 = vmul.f32 %v723, 0.125
        %v859 = vmul.f32 %v821, 0.125
        %v860 = vmul.f32 %v725, 0.125
        %v861 = vmul.f32 %v823, 0.125
        %v862 = vmul.f32 %v728, 0.125
        %v863 = vmul.f32 %v826, 0.125
        %v864 = vmul.f32 %v730, 0.125
        %v865 = vmul.f32 %v828, 0.125
        %v866 = vmul.f32 %v733, 0.125
        %v867 = vmul.f32 %v831, 0.125
        %v868 = vmul.f32 %v735, 0.125
        %v869 = vmul.f32 %v833, 0.125
        %v870 = vmul.f32 %v738, 0.125
        %v871 = vmul.f32 %v836, 0.125
        %v872 = vmul.f32 %v740, 0.125
        %v873 = vmul.f32 %v838, 0.125
        %v874 = vmul.f32 %v743, 0.125
        %v875 = vmul.f32 %v841, 0.125
        %v876 = vmul.f32 %v745, 0.125
        %v877 = vmul.f32 %v843, 0.125
        %v878 = vmul.f32 %v748, 0.125
        %v879 = vmul.f32 %v846, 0.125
        %v880 = vmul.f32 %v750, 0.125
        %v881 = vmul.f32 %v848, 0.125
        %v882 = vpack.c.bf16 %v851, %v850
        %v883 = vpack.c.bf16 %v853, %v852
        %v884 = vpack.c.bf16 %v855, %v854
        %v885 = vpack.c.bf16 %v857, %v856
        %v886 = vpack.c.bf16 %v859, %v858
        %v887 = vpack.c.bf16 %v861, %v860
        %v888 = vpack.c.bf16 %v863, %v862
        %v889 = vpack.c.bf16 %v865, %v864
        %v890 = vpack.c.bf16 %v867, %v866
        %v891 = vpack.c.bf16 %v869, %v868
        %v892 = vpack.c.bf16 %v871, %v870
        %v893 = vpack.c.bf16 %v873, %v872
        %v894 = vpack.c.bf16 %v875, %v874
        %v895 = vpack.c.bf16 %v877, %v876
        %v896 = vpack.c.bf16 %v879, %v878
        %v897 = vpack.c.bf16 %v881, %v880
        %v898 = vld [vmem:[%s353] sm:$0xff]
        %v899 = vld [vmem:[%s353 + $0x8] sm:$0xff]
        %v900 = vld [vmem:[%s353 + $0x10] sm:$0xff]
        %v901 = vld [vmem:[%s353 + $0x18] sm:$0xff]
        %v902 = vld [vmem:[%s353 + $0x20] sm:$0xff]
        %v903 = vld [vmem:[%s353 + $0x28] sm:$0xff]
        %v904 = vld [vmem:[%s353 + $0x30] sm:$0xff]
        %v905 = vld [vmem:[%s353 + $0x38] sm:$0xff]
        %v906 = vld [vmem:[%s353 + $0x40] sm:$0xff]
        %v907 = vld [vmem:[%s353 + $0x48] sm:$0xff]
        %v908 = vld [vmem:[%s353 + $0x50] sm:$0xff]
        %v909 = vld [vmem:[%s353 + $0x58] sm:$0xff]
        %v910 = vld [vmem:[%s353 + $0x60] sm:$0xff]
        %v911 = vld [vmem:[%s353 + $0x68] sm:$0xff]
        %v912 = vld [vmem:[%s353 + $0x70] sm:$0xff]
        %v913 = vld [vmem:[%s353 + $0x78] sm:$0xff]
        %v914 = vld [vmem:[%s353 + $0x80] sm:$0xff]
        %v915 = vld [vmem:[%s353 + $0x88] sm:$0xff]
        %v916 = vld [vmem:[%s353 + $0x90] sm:$0xff]
        %v917 = vld [vmem:[%s353 + $0x98] sm:$0xff]
        %v918 = vld [vmem:[%s353 + $0xa0] sm:$0xff]
        %v919 = vld [vmem:[%s353 + $0xa8] sm:$0xff]
        %v920 = vld [vmem:[%s353 + $0xb0] sm:$0xff]
        %v921 = vld [vmem:[%s353 + $0xb8] sm:$0xff]
        %v922 = vld [vmem:[%s353 + $0xc0] sm:$0xff]
        %v923 = vld [vmem:[%s353 + $0xc8] sm:$0xff]
        %v924 = vld [vmem:[%s353 + $0xd0] sm:$0xff]
        %v925 = vld [vmem:[%s353 + $0xd8] sm:$0xff]
        %v926 = vld [vmem:[%s353 + $0xe0] sm:$0xff]
        %v927 = vld [vmem:[%s353 + $0xe8] sm:$0xff]
        %v928 = vld [vmem:[%s353 + $0xf0] sm:$0xff]
        %v929 = vld [vmem:[%s353 + $0xf8] sm:$0xff]
        %s930 = scalar_lea.vmem %s4, 256
        %v931 = vld [vmem:[%s930] sm:$0xff]
        %v932 = vld [vmem:[%s930 + $0x8] sm:$0xff]
        %v933 = vld [vmem:[%s930 + $0x10] sm:$0xff]
        %v934 = vld [vmem:[%s930 + $0x18] sm:$0xff]
        %v935 = vld [vmem:[%s930 + $0x20] sm:$0xff]
        %v936 = vld [vmem:[%s930 + $0x28] sm:$0xff]
        %v937 = vld [vmem:[%s930 + $0x30] sm:$0xff]
        %v938 = vld [vmem:[%s930 + $0x38] sm:$0xff]
        %v939 = vld [vmem:[%s930 + $0x40] sm:$0xff]
        %v940 = vld [vmem:[%s930 + $0x48] sm:$0xff]
        %v941 = vld [vmem:[%s930 + $0x50] sm:$0xff]
        %v942 = vld [vmem:[%s930 + $0x58] sm:$0xff]
        %v943 = vld [vmem:[%s930 + $0x60] sm:$0xff]
        %v944 = vld [vmem:[%s930 + $0x68] sm:$0xff]
        %v945 = vld [vmem:[%s930 + $0x70] sm:$0xff]
        %v946 = vld [vmem:[%s930 + $0x78] sm:$0xff]
        %v947 = vld [vmem:[%s930 + $0x80] sm:$0xff]
        %v948 = vld [vmem:[%s930 + $0x88] sm:$0xff]
        %v949 = vld [vmem:[%s930 + $0x90] sm:$0xff]
        %v950 = vld [vmem:[%s930 + $0x98] sm:$0xff]
        %v951 = vld [vmem:[%s930 + $0xa0] sm:$0xff]
        %v952 = vld [vmem:[%s930 + $0xa8] sm:$0xff]
        %v953 = vld [vmem:[%s930 + $0xb0] sm:$0xff]
        %v954 = vld [vmem:[%s930 + $0xb8] sm:$0xff]
        %v955 = vld [vmem:[%s930 + $0xc0] sm:$0xff]
        %v956 = vld [vmem:[%s930 + $0xc8] sm:$0xff]
        %v957 = vld [vmem:[%s930 + $0xd0] sm:$0xff]
        %v958 = vld [vmem:[%s930 + $0xd8] sm:$0xff]
        %v959 = vld [vmem:[%s930 + $0xe0] sm:$0xff]
        %v960 = vld [vmem:[%s930 + $0xe8] sm:$0xff]
        %v961 = vld [vmem:[%s930 + $0xf0] sm:$0xff]
        %v962 = vld [vmem:[%s930 + $0xf8] sm:$0xff]
        %s963 = scalar_lea.vmem %s5, 2
        %v964 = vld [vmem:[%s963] sm:$0x3]
        %v966 = vperm.slane %v964, 0
        %v967 = vperm.slane %v964, 1
        %v1002 = vunpack.c.l.b16 %v898
        %v1003 = vunpack.c.h.b16 %v898
        %v1004 = vunpack.c.l.b16 %v899
        %v1005 = vunpack.c.h.b16 %v899
        %v1006 = vunpack.c.l.b16 %v900
        %v1007 = vunpack.c.h.b16 %v900
        %v1008 = vunpack.c.l.b16 %v901
        %v1009 = vunpack.c.h.b16 %v901
        %v1010 = vunpack.c.l.b16 %v902
        %v1011 = vunpack.c.h.b16 %v902
        %v1012 = vunpack.c.l.b16 %v903
        %v1013 = vunpack.c.h.b16 %v903
        %v1014 = vunpack.c.l.b16 %v904
        %v1015 = vunpack.c.h.b16 %v904
        %v1016 = vunpack.c.l.b16 %v905
        %v1017 = vunpack.c.h.b16 %v905
        %v1018 = vunpack.c.l.b16 %v906
        %v1019 = vunpack.c.h.b16 %v906
        %v1020 = vunpack.c.l.b16 %v907
        %v1021 = vunpack.c.h.b16 %v907
        %v1022 = vunpack.c.l.b16 %v908
        %v1023 = vunpack.c.h.b16 %v908
        %v1024 = vunpack.c.l.b16 %v909
        %v1025 = vunpack.c.h.b16 %v909
        %v1026 = vunpack.c.l.b16 %v910
        %v1027 = vunpack.c.h.b16 %v910
        %v1028 = vunpack.c.l.b16 %v911
        %v1029 = vunpack.c.h.b16 %v911
        %v1030 = vunpack.c.l.b16 %v912
        %v1031 = vunpack.c.h.b16 %v912
        %v1032 = vunpack.c.l.b16 %v913
        %v1033 = vunpack.c.h.b16 %v913
        %v1034 = vunpack.c.l.b16 %v914
        %v1035 = vunpack.c.h.b16 %v914
        %v1036 = vunpack.c.l.b16 %v915
        %v1037 = vunpack.c.h.b16 %v915
        %v1038 = vunpack.c.l.b16 %v916
        %v1039 = vunpack.c.h.b16 %v916
        %v1040 = vunpack.c.l.b16 %v917
        %v1041 = vunpack.c.h.b16 %v917
        %v1042 = vunpack.c.l.b16 %v918
        %v1043 = vunpack.c.h.b16 %v918
        %v1044 = vunpack.c.l.b16 %v919
        %v1045 = vunpack.c.h.b16 %v919
        %v1046 = vunpack.c.l.b16 %v920
        %v1047 = vunpack.c.h.b16 %v920
        %v1048 = vunpack.c.l.b16 %v921
        %v1049 = vunpack.c.h.b16 %v921
        %v1050 = vunpack.c.l.b16 %v922
        %v1051 = vunpack.c.h.b16 %v922
        %v1052 = vunpack.c.l.b16 %v923
        %v1053 = vunpack.c.h.b16 %v923
        %v1054 = vunpack.c.l.b16 %v924
        %v1055 = vunpack.c.h.b16 %v924
        %v1056 = vunpack.c.l.b16 %v925
        %v1057 = vunpack.c.h.b16 %v925
        %v1058 = vunpack.c.l.b16 %v926
        %v1059 = vunpack.c.h.b16 %v926
        %v1060 = vunpack.c.l.b16 %v927
        %v1061 = vunpack.c.h.b16 %v927
        %v1062 = vunpack.c.l.b16 %v928
        %v1063 = vunpack.c.h.b16 %v928
        %v1064 = vunpack.c.l.b16 %v929
        %v1065 = vunpack.c.h.b16 %v929
        %v1066 = vpack.c.b16 %v1004, %v1002
        %v1067 = vpack.c.b16 %v1005, %v1003
        %v1068 = vpack.c.b16 %v1008, %v1006
        %v1069 = vpack.c.b16 %v1009, %v1007
        %v1070 = vpack.c.b16 %v1012, %v1010
        %v1071 = vpack.c.b16 %v1013, %v1011
        %v1072 = vpack.c.b16 %v1016, %v1014
        %v1073 = vpack.c.b16 %v1017, %v1015
        %v1074 = vpack.c.b16 %v1020, %v1018
        %v1075 = vpack.c.b16 %v1021, %v1019
        %v1076 = vpack.c.b16 %v1024, %v1022
        %v1077 = vpack.c.b16 %v1025, %v1023
        %v1078 = vpack.c.b16 %v1028, %v1026
        %v1079 = vpack.c.b16 %v1029, %v1027
        %v1080 = vpack.c.b16 %v1032, %v1030
        %v1081 = vpack.c.b16 %v1033, %v1031
        %v1082 = vpack.c.b16 %v1036, %v1034
        %v1083 = vpack.c.b16 %v1037, %v1035
        %v1084 = vpack.c.b16 %v1040, %v1038
        %v1085 = vpack.c.b16 %v1041, %v1039
        %v1086 = vpack.c.b16 %v1044, %v1042
        %v1087 = vpack.c.b16 %v1045, %v1043
        %v1088 = vpack.c.b16 %v1048, %v1046
        %v1089 = vpack.c.b16 %v1049, %v1047
        %v1090 = vpack.c.b16 %v1052, %v1050
        %v1091 = vpack.c.b16 %v1053, %v1051
        %v1092 = vpack.c.b16 %v1056, %v1054
        %v1093 = vpack.c.b16 %v1057, %v1055
        %v1094 = vpack.c.b16 %v1060, %v1058
        %v1095 = vpack.c.b16 %v1061, %v1059
        %v1096 = vpack.c.b16 %v1064, %v1062
        %v1097 = vpack.c.b16 %v1065, %v1063
        %v1162 = vunpack.c.l.b16 %v931
        %v1163 = vunpack.c.h.b16 %v931
        %v1164 = vunpack.c.l.b16 %v932
        %v1165 = vunpack.c.h.b16 %v932
        %v1166 = vunpack.c.l.b16 %v933
        %v1167 = vunpack.c.h.b16 %v933
        %v1168 = vunpack.c.l.b16 %v934
        %v1169 = vunpack.c.h.b16 %v934
        %v1170 = vunpack.c.l.b16 %v935
        %v1171 = vunpack.c.h.b16 %v935
        %v1172 = vunpack.c.l.b16 %v936
        %v1173 = vunpack.c.h.b16 %v936
        %v1174 = vunpack.c.l.b16 %v937
        %v1175 = vunpack.c.h.b16 %v937
        %v1176 = vunpack.c.l.b16 %v938
        %v1177 = vunpack.c.h.b16 %v938
        %v1178 = vunpack.c.l.b16 %v939
        %v1179 = vunpack.c.h.b16 %v939
        %v1180 = vunpack.c.l.b16 %v940
        %v1181 = vunpack.c.h.b16 %v940
        %v1182 = vunpack.c.l.b16 %v941
        %v1183 = vunpack.c.h.b16 %v941
        %v1184 = vunpack.c.l.b16 %v942
        %v1185 = vunpack.c.h.b16 %v942
        %v1186 = vunpack.c.l.b16 %v943
        %v1187 = vunpack.c.h.b16 %v943
        %v1188 = vunpack.c.l.b16 %v944
        %v1189 = vunpack.c.h.b16 %v944
        %v1190 = vunpack.c.l.b16 %v945
        %v1191 = vunpack.c.h.b16 %v945
        %v1192 = vunpack.c.l.b16 %v946
        %v1193 = vunpack.c.h.b16 %v946
        %v1194 = vunpack.c.l.b16 %v947
        %v1195 = vunpack.c.h.b16 %v947
        %v1196 = vunpack.c.l.b16 %v948
        %v1197 = vunpack.c.h.b16 %v948
        %v1198 = vunpack.c.l.b16 %v949
        %v1199 = vunpack.c.h.b16 %v949
        %v1200 = vunpack.c.l.b16 %v950
        %v1201 = vunpack.c.h.b16 %v950
        %v1202 = vunpack.c.l.b16 %v951
        %v1203 = vunpack.c.h.b16 %v951
        %v1204 = vunpack.c.l.b16 %v952
        %v1205 = vunpack.c.h.b16 %v952
        %v1206 = vunpack.c.l.b16 %v953
        %v1207 = vunpack.c.h.b16 %v953
        %v1208 = vunpack.c.l.b16 %v954
        %v1209 = vunpack.c.h.b16 %v954
        %v1210 = vunpack.c.l.b16 %v955
        %v1211 = vunpack.c.h.b16 %v955
        %v1212 = vunpack.c.l.b16 %v956
        %v1213 = vunpack.c.h.b16 %v956
        %v1214 = vunpack.c.l.b16 %v957
        %v1215 = vunpack.c.h.b16 %v957
        %v1216 = vunpack.c.l.b16 %v958
        %v1217 = vunpack.c.h.b16 %v958
        %v1218 = vunpack.c.l.b16 %v959
        %v1219 = vunpack.c.h.b16 %v959
        %v1220 = vunpack.c.l.b16 %v960
        %v1221 = vunpack.c.h.b16 %v960
        %v1222 = vunpack.c.l.b16 %v961
        %v1223 = vunpack.c.h.b16 %v961
        %v1224 = vunpack.c.l.b16 %v962
        %v1225 = vunpack.c.h.b16 %v962
        %v1226 = vpack.c.b16 %v1164, %v1162
        %v1227 = vpack.c.b16 %v1165, %v1163
        %v1228 = vpack.c.b16 %v1168, %v1166
        %v1229 = vpack.c.b16 %v1169, %v1167
        %v1230 = vpack.c.b16 %v1172, %v1170
        %v1231 = vpack.c.b16 %v1173, %v1171
        %v1232 = vpack.c.b16 %v1176, %v1174
        %v1233 = vpack.c.b16 %v1177, %v1175
        %v1234 = vpack.c.b16 %v1180, %v1178
        %v1235 = vpack.c.b16 %v1181, %v1179
        %v1236 = vpack.c.b16 %v1184, %v1182
        %v1237 = vpack.c.b16 %v1185, %v1183
        %v1238 = vpack.c.b16 %v1188, %v1186
        %v1239 = vpack.c.b16 %v1189, %v1187
        %v1240 = vpack.c.b16 %v1192, %v1190
        %v1241 = vpack.c.b16 %v1193, %v1191
        %v1242 = vpack.c.b16 %v1196, %v1194
        %v1243 = vpack.c.b16 %v1197, %v1195
        %v1244 = vpack.c.b16 %v1200, %v1198
        %v1245 = vpack.c.b16 %v1201, %v1199
        %v1246 = vpack.c.b16 %v1204, %v1202
        %v1247 = vpack.c.b16 %v1205, %v1203
        %v1248 = vpack.c.b16 %v1208, %v1206
        %v1249 = vpack.c.b16 %v1209, %v1207
        %v1250 = vpack.c.b16 %v1212, %v1210
        %v1251 = vpack.c.b16 %v1213, %v1211
        %v1252 = vpack.c.b16 %v1216, %v1214
        %v1253 = vpack.c.b16 %v1217, %v1215
        %v1254 = vpack.c.b16 %v1220, %v1218
        %v1255 = vpack.c.b16 %v1221, %v1219
        %v1256 = vpack.c.b16 %v1224, %v1222
        %v1257 = vpack.c.b16 %v1225, %v1223
        %1290 = vmatpush.bf16.xpose.msra.mxu0 %v1240
        %1291 = vmatpush.bf16.xpose.msra.mxu0 %v1238
        %1292 = vmatpush.bf16.xpose.msra.mxu0 %v1236
        %1293 = vmatpush.bf16.xpose.msra.mxu0 %v1234
        %1294 = vmatpush.bf16.xpose.msra.mxu0 %v1232
        %1295 = vmatpush.bf16.xpose.msra.mxu0 %v1230
        %1296 = vmatpush.bf16.xpose.msra.mxu0 %v1228
        %1297 = vmatpush.bf16.xpose.msra.mxu0 %v1226
        %1298 = vmatmul.bf16.gmra.mxu0 %v1066
        %v1299 = vpop.f32.mrf.mxu0
        %v1300 = vadd.f32 %v966, %v1299
        %v1301 = vpop.f32.mrf.mxu0
        %v1302 = vadd.f32 %v966, %v1301
        %1303 = vmatmul.bf16.gmra.mxu0 %v1068
        %v1304 = vpop.f32.mrf.mxu0
        %v1305 = vadd.f32 %v966, %v1304
        %v1306 = vpop.f32.mrf.mxu0
        %v1307 = vadd.f32 %v966, %v1306
        %1308 = vmatmul.bf16.gmra.mxu0 %v1070
        %v1309 = vpop.f32.mrf.mxu0
        %v1310 = vadd.f32 %v966, %v1309
        %v1311 = vpop.f32.mrf.mxu0
        %v1312 = vadd.f32 %v966, %v1311
        %1313 = vmatmul.bf16.gmra.mxu0 %v1072
        %v1314 = vpop.f32.mrf.mxu0
        %v1315 = vadd.f32 %v966, %v1314
        %v1316 = vpop.f32.mrf.mxu0
        %v1317 = vadd.f32 %v966, %v1316
        %1318 = vmatmul.bf16.gmra.mxu0 %v1074
        %v1319 = vpop.f32.mrf.mxu0
        %v1320 = vadd.f32 %v966, %v1319
        %v1321 = vpop.f32.mrf.mxu0
        %v1322 = vadd.f32 %v966, %v1321
        %1323 = vmatmul.bf16.gmra.mxu0 %v1076
        %v1324 = vpop.f32.mrf.mxu0
        %v1325 = vadd.f32 %v966, %v1324
        %v1326 = vpop.f32.mrf.mxu0
        %v1327 = vadd.f32 %v966, %v1326
        %1328 = vmatmul.bf16.gmra.mxu0 %v1078
        %v1329 = vpop.f32.mrf.mxu0
        %v1330 = vadd.f32 %v966, %v1329
        %v1331 = vpop.f32.mrf.mxu0
        %v1332 = vadd.f32 %v966, %v1331
        %1333 = vmatmul.bf16.gmra.mxu0 %v1080
        %v1334 = vpop.f32.mrf.mxu0
        %v1335 = vadd.f32 %v966, %v1334
        %v1336 = vpop.f32.mrf.mxu0
        %v1337 = vadd.f32 %v966, %v1336
        %1338 = vmatmul.bf16.gmra.mxu0 %v1082
        %v1339 = vpop.f32.mrf.mxu0
        %v1340 = vadd.f32 %v966, %v1339
        %v1341 = vpop.f32.mrf.mxu0
        %v1342 = vadd.f32 %v966, %v1341
        %1343 = vmatmul.bf16.gmra.mxu0 %v1084
        %v1344 = vpop.f32.mrf.mxu0
        %v1345 = vadd.f32 %v966, %v1344
        %v1346 = vpop.f32.mrf.mxu0
        %v1347 = vadd.f32 %v966, %v1346
        %1348 = vmatmul.bf16.gmra.mxu0 %v1086
        %v1349 = vpop.f32.mrf.mxu0
        %v1350 = vadd.f32 %v966, %v1349
        %v1351 = vpop.f32.mrf.mxu0
        %v1352 = vadd.f32 %v966, %v1351
        %1353 = vmatmul.bf16.gmra.mxu0 %v1088
        %v1354 = vpop.f32.mrf.mxu0
        %v1355 = vadd.f32 %v966, %v1354
        %v1356 = vpop.f32.mrf.mxu0
        %v1357 = vadd.f32 %v966, %v1356
        %1358 = vmatmul.bf16.gmra.mxu0 %v1090
        %v1359 = vpop.f32.mrf.mxu0
        %v1360 = vadd.f32 %v966, %v1359
        %v1361 = vpop.f32.mrf.mxu0
        %v1362 = vadd.f32 %v966, %v1361
        %1363 = vmatmul.bf16.gmra.mxu0 %v1092
        %v1364 = vpop.f32.mrf.mxu0
        %v1365 = vadd.f32 %v966, %v1364
        %v1366 = vpop.f32.mrf.mxu0
        %v1367 = vadd.f32 %v966, %v1366
        %1368 = vmatmul.bf16.gmra.mxu0 %v1094
        %v1369 = vpop.f32.mrf.mxu0
        %v1370 = vadd.f32 %v966, %v1369
        %v1371 = vpop.f32.mrf.mxu0
        %v1372 = vadd.f32 %v966, %v1371
        %1373 = vmatmul.bf16.gmra.mxu0 %v1096
        %v1374 = vpop.f32.mrf.mxu0
        %v1375 = vadd.f32 %v966, %v1374
        %v1376 = vpop.f32.mrf.mxu0
        %v1377 = vadd.f32 %v966, %v1376
        %1378 = vdwg.mxu0
        %1379 = vmatpush.bf16.xpose.msra.mxu0 %v1241
        %1380 = vmatpush.bf16.xpose.msra.mxu0 %v1239
        %1381 = vmatpush.bf16.xpose.msra.mxu0 %v1237
        %1382 = vmatpush.bf16.xpose.msra.mxu0 %v1235
        %1383 = vmatpush.bf16.xpose.msra.mxu0 %v1233
        %1384 = vmatpush.bf16.xpose.msra.mxu0 %v1231
        %1385 = vmatpush.bf16.xpose.msra.mxu0 %v1229
        %1386 = vmatpush.bf16.xpose.msra.mxu0 %v1227
        %1387 = vmatmul.bf16.gmra.mxu0 %v1067
        %v1388 = vpop.f32.mrf.mxu0
        %v1389 = vadd.f32 %v1300, %v1388
        %v1390 = vpop.f32.mrf.mxu0
        %v1391 = vadd.f32 %v1302, %v1390
        %1392 = vmatmul.bf16.gmra.mxu0 %v1069
        %v1393 = vpop.f32.mrf.mxu0
        %v1394 = vadd.f32 %v1305, %v1393
        %v1395 = vpop.f32.mrf.mxu0
        %v1396 = vadd.f32 %v1307, %v1395
        %1397 = vmatmul.bf16.gmra.mxu0 %v1071
        %v1398 = vpop.f32.mrf.mxu0
        %v1399 = vadd.f32 %v1310, %v1398
        %v1400 = vpop.f32.mrf.mxu0
        %v1401 = vadd.f32 %v1312, %v1400
        %1402 = vmatmul.bf16.gmra.mxu0 %v1073
        %v1403 = vpop.f32.mrf.mxu0
        %v1404 = vadd.f32 %v1315, %v1403
        %v1405 = vpop.f32.mrf.mxu0
        %v1406 = vadd.f32 %v1317, %v1405
        %1407 = vmatmul.bf16.gmra.mxu0 %v1075
        %v1408 = vpop.f32.mrf.mxu0
        %v1409 = vadd.f32 %v1320, %v1408
        %v1410 = vpop.f32.mrf.mxu0
        %v1411 = vadd.f32 %v1322, %v1410
        %1412 = vmatmul.bf16.gmra.mxu0 %v1077
        %v1413 = vpop.f32.mrf.mxu0
        %v1414 = vadd.f32 %v1325, %v1413
        %v1415 = vpop.f32.mrf.mxu0
        %v1416 = vadd.f32 %v1327, %v1415
        %1417 = vmatmul.bf16.gmra.mxu0 %v1079
        %v1418 = vpop.f32.mrf.mxu0
        %v1419 = vadd.f32 %v1330, %v1418
        %v1420 = vpop.f32.mrf.mxu0
        %v1421 = vadd.f32 %v1332, %v1420
        %1422 = vmatmul.bf16.gmra.mxu0 %v1081
        %v1423 = vpop.f32.mrf.mxu0
        %v1424 = vadd.f32 %v1335, %v1423
        %v1425 = vpop.f32.mrf.mxu0
        %v1426 = vadd.f32 %v1337, %v1425
        %1427 = vmatmul.bf16.gmra.mxu0 %v1083
        %v1428 = vpop.f32.mrf.mxu0
        %v1429 = vadd.f32 %v1340, %v1428
        %v1430 = vpop.f32.mrf.mxu0
        %v1431 = vadd.f32 %v1342, %v1430
        %1432 = vmatmul.bf16.gmra.mxu0 %v1085
        %v1433 = vpop.f32.mrf.mxu0
        %v1434 = vadd.f32 %v1345, %v1433
        %v1435 = vpop.f32.mrf.mxu0
        %v1436 = vadd.f32 %v1347, %v1435
        %1437 = vmatmul.bf16.gmra.mxu0 %v1087
        %v1438 = vpop.f32.mrf.mxu0
        %v1439 = vadd.f32 %v1350, %v1438
        %v1440 = vpop.f32.mrf.mxu0
        %v1441 = vadd.f32 %v1352, %v1440
        %1442 = vmatmul.bf16.gmra.mxu0 %v1089
        %v1443 = vpop.f32.mrf.mxu0
        %v1444 = vadd.f32 %v1355, %v1443
        %v1445 = vpop.f32.mrf.mxu0
        %v1446 = vadd.f32 %v1357, %v1445
        %1447 = vmatmul.bf16.gmra.mxu0 %v1091
        %v1448 = vpop.f32.mrf.mxu0
        %v1449 = vadd.f32 %v1360, %v1448
        %v1450 = vpop.f32.mrf.mxu0
        %v1451 = vadd.f32 %v1362, %v1450
        %1452 = vmatmul.bf16.gmra.mxu0 %v1093
        %v1453 = vpop.f32.mrf.mxu0
        %v1454 = vadd.f32 %v1365, %v1453
        %v1455 = vpop.f32.mrf.mxu0
        %v1456 = vadd.f32 %v1367, %v1455
        %1457 = vmatmul.bf16.gmra.mxu0 %v1095
        %v1458 = vpop.f32.mrf.mxu0
        %v1459 = vadd.f32 %v1370, %v1458
        %v1460 = vpop.f32.mrf.mxu0
        %v1461 = vadd.f32 %v1372, %v1460
        %1462 = vmatmul.bf16.gmra.mxu0 %v1097
        %v1463 = vpop.f32.mrf.mxu0
        %v1464 = vadd.f32 %v1375, %v1463
        %v1465 = vpop.f32.mrf.mxu0
        %v1466 = vadd.f32 %v1377, %v1465
        %1467 = vdwg.mxu0
        %1468 = vmatpush.bf16.xpose.msra.mxu0 %v1256
        %1469 = vmatpush.bf16.xpose.msra.mxu0 %v1254
        %1470 = vmatpush.bf16.xpose.msra.mxu0 %v1252
        %1471 = vmatpush.bf16.xpose.msra.mxu0 %v1250
        %1472 = vmatpush.bf16.xpose.msra.mxu0 %v1248
        %1473 = vmatpush.bf16.xpose.msra.mxu0 %v1246
        %1474 = vmatpush.bf16.xpose.msra.mxu0 %v1244
        %1475 = vmatpush.bf16.xpose.msra.mxu0 %v1242
        %1476 = vmatmul.bf16.gmra.mxu0 %v1066
        %v1477 = vpop.f32.mrf.mxu0
        %v1478 = vadd.f32 %v967, %v1477
        %v1479 = vpop.f32.mrf.mxu0
        %v1480 = vadd.f32 %v967, %v1479
        %1481 = vmatmul.bf16.gmra.mxu0 %v1068
        %v1482 = vpop.f32.mrf.mxu0
        %v1483 = vadd.f32 %v967, %v1482
        %v1484 = vpop.f32.mrf.mxu0
        %v1485 = vadd.f32 %v967, %v1484
        %1486 = vmatmul.bf16.gmra.mxu0 %v1070
        %v1487 = vpop.f32.mrf.mxu0
        %v1488 = vadd.f32 %v967, %v1487
        %v1489 = vpop.f32.mrf.mxu0
        %v1490 = vadd.f32 %v967, %v1489
        %1491 = vmatmul.bf16.gmra.mxu0 %v1072
        %v1492 = vpop.f32.mrf.mxu0
        %v1493 = vadd.f32 %v967, %v1492
        %v1494 = vpop.f32.mrf.mxu0
        %v1495 = vadd.f32 %v967, %v1494
        %1496 = vmatmul.bf16.gmra.mxu0 %v1074
        %v1497 = vpop.f32.mrf.mxu0
        %v1498 = vadd.f32 %v967, %v1497
        %v1499 = vpop.f32.mrf.mxu0
        %v1500 = vadd.f32 %v967, %v1499
        %1501 = vmatmul.bf16.gmra.mxu0 %v1076
        %v1502 = vpop.f32.mrf.mxu0
        %v1503 = vadd.f32 %v967, %v1502
        %v1504 = vpop.f32.mrf.mxu0
        %v1505 = vadd.f32 %v967, %v1504
        %1506 = vmatmul.bf16.gmra.mxu0 %v1078
        %v1507 = vpop.f32.mrf.mxu0
        %v1508 = vadd.f32 %v967, %v1507
        %v1509 = vpop.f32.mrf.mxu0
        %v1510 = vadd.f32 %v967, %v1509
        %1511 = vmatmul.bf16.gmra.mxu0 %v1080
        %v1512 = vpop.f32.mrf.mxu0
        %v1513 = vadd.f32 %v967, %v1512
        %v1514 = vpop.f32.mrf.mxu0
        %v1515 = vadd.f32 %v967, %v1514
        %1516 = vmatmul.bf16.gmra.mxu0 %v1082
        %v1517 = vpop.f32.mrf.mxu0
        %v1518 = vadd.f32 %v967, %v1517
        %v1519 = vpop.f32.mrf.mxu0
        %v1520 = vadd.f32 %v967, %v1519
        %1521 = vmatmul.bf16.gmra.mxu0 %v1084
        %v1522 = vpop.f32.mrf.mxu0
        %v1523 = vadd.f32 %v967, %v1522
        %v1524 = vpop.f32.mrf.mxu0
        %v1525 = vadd.f32 %v967, %v1524
        %1526 = vmatmul.bf16.gmra.mxu0 %v1086
        %v1527 = vpop.f32.mrf.mxu0
        %v1528 = vadd.f32 %v967, %v1527
        %v1529 = vpop.f32.mrf.mxu0
        %v1530 = vadd.f32 %v967, %v1529
        %1531 = vmatmul.bf16.gmra.mxu0 %v1088
        %v1532 = vpop.f32.mrf.mxu0
        %v1533 = vadd.f32 %v967, %v1532
        %v1534 = vpop.f32.mrf.mxu0
        %v1535 = vadd.f32 %v967, %v1534
        %1536 = vmatmul.bf16.gmra.mxu0 %v1090
        %v1537 = vpop.f32.mrf.mxu0
        %v1538 = vadd.f32 %v967, %v1537
        %v1539 = vpop.f32.mrf.mxu0
        %v1540 = vadd.f32 %v967, %v1539
        %1541 = vmatmul.bf16.gmra.mxu0 %v1092
        %v1542 = vpop.f32.mrf.mxu0
        %v1543 = vadd.f32 %v967, %v1542
        %v1544 = vpop.f32.mrf.mxu0
        %v1545 = vadd.f32 %v967, %v1544
        %1546 = vmatmul.bf16.gmra.mxu0 %v1094
        %v1547 = vpop.f32.mrf.mxu0
        %v1548 = vadd.f32 %v967, %v1547
        %v1549 = vpop.f32.mrf.mxu0
        %v1550 = vadd.f32 %v967, %v1549
        %1551 = vmatmul.bf16.gmra.mxu0 %v1096
        %v1552 = vpop.f32.mrf.mxu0
        %v1553 = vadd.f32 %v967, %v1552
        %v1554 = vpop.f32.mrf.mxu0
        %v1555 = vadd.f32 %v967, %v1554
        %1556 = vdwg.mxu0
        %1557 = vmatpush.bf16.xpose.msra.mxu0 %v1257
        %1558 = vmatpush.bf16.xpose.msra.mxu0 %v1255
        %1559 = vmatpush.bf16.xpose.msra.mxu0 %v1253
        %1560 = vmatpush.bf16.xpose.msra.mxu0 %v1251
        %1561 = vmatpush.bf16.xpose.msra.mxu0 %v1249
        %1562 = vmatpush.bf16.xpose.msra.mxu0 %v1247
        %1563 = vmatpush.bf16.xpose.msra.mxu0 %v1245
        %1564 = vmatpush.bf16.xpose.msra.mxu0 %v1243
        %1565 = vmatmul.bf16.gmra.mxu0 %v1067
        %v1566 = vpop.f32.mrf.mxu0
        %v1567 = vadd.f32 %v1478, %v1566
        %v1568 = vpop.f32.mrf.mxu0
        %v1569 = vadd.f32 %v1480, %v1568
        %1570 = vmatmul.bf16.gmra.mxu0 %v1069
        %v1571 = vpop.f32.mrf.mxu0
        %v1572 = vadd.f32 %v1483, %v1571
        %v1573 = vpop.f32.mrf.mxu0
        %v1574 = vadd.f32 %v1485, %v1573
        %1575 = vmatmul.bf16.gmra.mxu0 %v1071
        %v1576 = vpop.f32.mrf.mxu0
        %v1577 = vadd.f32 %v1488, %v1576
        %v1578 = vpop.f32.mrf.mxu0
        %v1579 = vadd.f32 %v1490, %v1578
        %1580 = vmatmul.bf16.gmra.mxu0 %v1073
        %v1581 = vpop.f32.mrf.mxu0
        %v1582 = vadd.f32 %v1493, %v1581
        %v1583 = vpop.f32.mrf.mxu0
        %v1584 = vadd.f32 %v1495, %v1583
        %1585 = vmatmul.bf16.gmra.mxu0 %v1075
        %v1586 = vpop.f32.mrf.mxu0
        %v1587 = vadd.f32 %v1498, %v1586
        %v1588 = vpop.f32.mrf.mxu0
        %v1589 = vadd.f32 %v1500, %v1588
        %1590 = vmatmul.bf16.gmra.mxu0 %v1077
        %v1591 = vpop.f32.mrf.mxu0
        %v1592 = vadd.f32 %v1503, %v1591
        %v1593 = vpop.f32.mrf.mxu0
        %v1594 = vadd.f32 %v1505, %v1593
        %1595 = vmatmul.bf16.gmra.mxu0 %v1079
        %v1596 = vpop.f32.mrf.mxu0
        %v1597 = vadd.f32 %v1508, %v1596
        %v1598 = vpop.f32.mrf.mxu0
        %v1599 = vadd.f32 %v1510, %v1598
        %1600 = vmatmul.bf16.gmra.mxu0 %v1081
        %v1601 = vpop.f32.mrf.mxu0
        %v1602 = vadd.f32 %v1513, %v1601
        %v1603 = vpop.f32.mrf.mxu0
        %v1604 = vadd.f32 %v1515, %v1603
        %1605 = vmatmul.bf16.gmra.mxu0 %v1083
        %v1606 = vpop.f32.mrf.mxu0
        %v1607 = vadd.f32 %v1518, %v1606
        %v1608 = vpop.f32.mrf.mxu0
        %v1609 = vadd.f32 %v1520, %v1608
        %1610 = vmatmul.bf16.gmra.mxu0 %v1085
        %v1611 = vpop.f32.mrf.mxu0
        %v1612 = vadd.f32 %v1523, %v1611
        %v1613 = vpop.f32.mrf.mxu0
        %v1614 = vadd.f32 %v1525, %v1613
        %1615 = vmatmul.bf16.gmra.mxu0 %v1087
        %v1616 = vpop.f32.mrf.mxu0
        %v1617 = vadd.f32 %v1528, %v1616
        %v1618 = vpop.f32.mrf.mxu0
        %v1619 = vadd.f32 %v1530, %v1618
        %1620 = vmatmul.bf16.gmra.mxu0 %v1089
        %v1621 = vpop.f32.mrf.mxu0
        %v1622 = vadd.f32 %v1533, %v1621
        %v1623 = vpop.f32.mrf.mxu0
        %v1624 = vadd.f32 %v1535, %v1623
        %1625 = vmatmul.bf16.gmra.mxu0 %v1091
        %v1626 = vpop.f32.mrf.mxu0
        %v1627 = vadd.f32 %v1538, %v1626
        %v1628 = vpop.f32.mrf.mxu0
        %v1629 = vadd.f32 %v1540, %v1628
        %1630 = vmatmul.bf16.gmra.mxu0 %v1093
        %v1631 = vpop.f32.mrf.mxu0
        %v1632 = vadd.f32 %v1543, %v1631
        %v1633 = vpop.f32.mrf.mxu0
        %v1634 = vadd.f32 %v1545, %v1633
        %1635 = vmatmul.bf16.gmra.mxu0 %v1095
        %v1636 = vpop.f32.mrf.mxu0
        %v1637 = vadd.f32 %v1548, %v1636
        %v1638 = vpop.f32.mrf.mxu0
        %v1639 = vadd.f32 %v1550, %v1638
        %1640 = vmatmul.bf16.gmra.mxu0 %v1097
        %v1641 = vpop.f32.mrf.mxu0
        %v1642 = vadd.f32 %v1553, %v1641
        %v1643 = vpop.f32.mrf.mxu0
        %v1644 = vadd.f32 %v1555, %v1643
        %1645 = vdwg.mxu0
        %v1646 = vpack.c.bf16 %v1567, %v1389
        %v1647 = vpack.c.bf16 %v1569, %v1391
        %v1648 = vpack.c.bf16 %v1572, %v1394
        %v1649 = vpack.c.bf16 %v1574, %v1396
        %v1650 = vpack.c.bf16 %v1577, %v1399
        %v1651 = vpack.c.bf16 %v1579, %v1401
        %v1652 = vpack.c.bf16 %v1582, %v1404
        %v1653 = vpack.c.bf16 %v1584, %v1406
        %v1654 = vpack.c.bf16 %v1587, %v1409
        %v1655 = vpack.c.bf16 %v1589, %v1411
        %v1656 = vpack.c.bf16 %v1592, %v1414
        %v1657 = vpack.c.bf16 %v1594, %v1416
        %v1658 = vpack.c.bf16 %v1597, %v1419
        %v1659 = vpack.c.bf16 %v1599, %v1421
        %v1660 = vpack.c.bf16 %v1602, %v1424
        %v1661 = vpack.c.bf16 %v1604, %v1426
        %v1662 = vpack.c.bf16 %v1607, %v1429
        %v1663 = vpack.c.bf16 %v1609, %v1431
        %v1664 = vpack.c.bf16 %v1612, %v1434
        %v1665 = vpack.c.bf16 %v1614, %v1436
        %v1666 = vpack.c.bf16 %v1617, %v1439
        %v1667 = vpack.c.bf16 %v1619, %v1441
        %v1668 = vpack.c.bf16 %v1622, %v1444
        %v1669 = vpack.c.bf16 %v1624, %v1446
        %v1670 = vpack.c.bf16 %v1627, %v1449
        %v1671 = vpack.c.bf16 %v1629, %v1451
        %v1672 = vpack.c.bf16 %v1632, %v1454
        %v1673 = vpack.c.bf16 %v1634, %v1456
        %v1674 = vpack.c.bf16 %v1637, %v1459
        %v1675 = vpack.c.bf16 %v1639, %v1461
        %v1676 = vpack.c.bf16 %v1642, %v1464
        %v1677 = vpack.c.bf16 %v1644, %v1466
        %v1678 = vld [vmem:[%s358] sm:$0xff]
        %v1679 = vld [vmem:[%s358 + $0x8] sm:$0xff]
        %v1680 = vld [vmem:[%s358 + $0x10] sm:$0xff]
        %v1681 = vld [vmem:[%s358 + $0x18] sm:$0xff]
        %v1682 = vld [vmem:[%s358 + $0x20] sm:$0xff]
        %v1683 = vld [vmem:[%s358 + $0x28] sm:$0xff]
        %v1684 = vld [vmem:[%s358 + $0x30] sm:$0xff]
        %v1685 = vld [vmem:[%s358 + $0x38] sm:$0xff]
        %v1686 = vld [vmem:[%s358 + $0x40] sm:$0xff]
        %v1687 = vld [vmem:[%s358 + $0x48] sm:$0xff]
        %v1688 = vld [vmem:[%s358 + $0x50] sm:$0xff]
        %v1689 = vld [vmem:[%s358 + $0x58] sm:$0xff]
        %v1690 = vld [vmem:[%s358 + $0x60] sm:$0xff]
        %v1691 = vld [vmem:[%s358 + $0x68] sm:$0xff]
        %v1692 = vld [vmem:[%s358 + $0x70] sm:$0xff]
        %v1693 = vld [vmem:[%s358 + $0x78] sm:$0xff]
        %v1694 = vld [vmem:[%s358 + $0x80] sm:$0xff]
        %v1695 = vld [vmem:[%s358 + $0x88] sm:$0xff]
        %v1696 = vld [vmem:[%s358 + $0x90] sm:$0xff]
        %v1697 = vld [vmem:[%s358 + $0x98] sm:$0xff]
        %v1698 = vld [vmem:[%s358 + $0xa0] sm:$0xff]
        %v1699 = vld [vmem:[%s358 + $0xa8] sm:$0xff]
        %v1700 = vld [vmem:[%s358 + $0xb0] sm:$0xff]
        %v1701 = vld [vmem:[%s358 + $0xb8] sm:$0xff]
        %v1702 = vld [vmem:[%s358 + $0xc0] sm:$0xff]
        %v1703 = vld [vmem:[%s358 + $0xc8] sm:$0xff]
        %v1704 = vld [vmem:[%s358 + $0xd0] sm:$0xff]
        %v1705 = vld [vmem:[%s358 + $0xd8] sm:$0xff]
        %v1706 = vld [vmem:[%s358 + $0xe0] sm:$0xff]
        %v1707 = vld [vmem:[%s358 + $0xe8] sm:$0xff]
        %v1708 = vld [vmem:[%s358 + $0xf0] sm:$0xff]
        %v1709 = vld [vmem:[%s358 + $0xf8] sm:$0xff]
        %s1710 = scalar_lea.vmem %s4, 512
        %v1711 = vld [vmem:[%s1710] sm:$0xff]
        %v1712 = vld [vmem:[%s1710 + $0x8] sm:$0xff]
        %v1713 = vld [vmem:[%s1710 + $0x10] sm:$0xff]
        %v1714 = vld [vmem:[%s1710 + $0x18] sm:$0xff]
        %v1715 = vld [vmem:[%s1710 + $0x20] sm:$0xff]
        %v1716 = vld [vmem:[%s1710 + $0x28] sm:$0xff]
        %v1717 = vld [vmem:[%s1710 + $0x30] sm:$0xff]
        %v1718 = vld [vmem:[%s1710 + $0x38] sm:$0xff]
        %v1719 = vld [vmem:[%s1710 + $0x40] sm:$0xff]
        %v1720 = vld [vmem:[%s1710 + $0x48] sm:$0xff]
        %v1721 = vld [vmem:[%s1710 + $0x50] sm:$0xff]
        %v1722 = vld [vmem:[%s1710 + $0x58] sm:$0xff]
        %v1723 = vld [vmem:[%s1710 + $0x60] sm:$0xff]
        %v1724 = vld [vmem:[%s1710 + $0x68] sm:$0xff]
        %v1725 = vld [vmem:[%s1710 + $0x70] sm:$0xff]
        %v1726 = vld [vmem:[%s1710 + $0x78] sm:$0xff]
        %v1727 = vld [vmem:[%s1710 + $0x80] sm:$0xff]
        %v1728 = vld [vmem:[%s1710 + $0x88] sm:$0xff]
        %v1729 = vld [vmem:[%s1710 + $0x90] sm:$0xff]
        %v1730 = vld [vmem:[%s1710 + $0x98] sm:$0xff]
        %v1731 = vld [vmem:[%s1710 + $0xa0] sm:$0xff]
        %v1732 = vld [vmem:[%s1710 + $0xa8] sm:$0xff]
        %v1733 = vld [vmem:[%s1710 + $0xb0] sm:$0xff]
        %v1734 = vld [vmem:[%s1710 + $0xb8] sm:$0xff]
        %v1735 = vld [vmem:[%s1710 + $0xc0] sm:$0xff]
        %v1736 = vld [vmem:[%s1710 + $0xc8] sm:$0xff]
        %v1737 = vld [vmem:[%s1710 + $0xd0] sm:$0xff]
        %v1738 = vld [vmem:[%s1710 + $0xd8] sm:$0xff]
        %v1739 = vld [vmem:[%s1710 + $0xe0] sm:$0xff]
        %v1740 = vld [vmem:[%s1710 + $0xe8] sm:$0xff]
        %v1741 = vld [vmem:[%s1710 + $0xf0] sm:$0xff]
        %v1742 = vld [vmem:[%s1710 + $0xf8] sm:$0xff]
        %s1743 = scalar_lea.vmem %s5, 4
        %v1744 = vld [vmem:[%s1743] sm:$0x3]
        %v1746 = vperm.slane %v1744, 0
        %v1747 = vperm.slane %v1744, 1
        %v1782 = vunpack.c.l.b16 %v1678
        %v1783 = vunpack.c.h.b16 %v1678
        %v1784 = vunpack.c.l.b16 %v1679
        %v1785 = vunpack.c.h.b16 %v1679
        %v1786 = vunpack.c.l.b16 %v1680
        %v1787 = vunpack.c.h.b16 %v1680
        %v1788 = vunpack.c.l.b16 %v1681
        %v1789 = vunpack.c.h.b16 %v1681
        %v1790 = vunpack.c.l.b16 %v1682
        %v1791 = vunpack.c.h.b16 %v1682
        %v1792 = vunpack.c.l.b16 %v1683
        %v1793 = vunpack.c.h.b16 %v1683
        %v1794 = vunpack.c.l.b16 %v1684
        %v1795 = vunpack.c.h.b16 %v1684
        %v1796 = vunpack.c.l.b16 %v1685
        %v1797 = vunpack.c.h.b16 %v1685
        %v1798 = vunpack.c.l.b16 %v1686
        %v1799 = vunpack.c.h.b16 %v1686
        %v1800 = vunpack.c.l.b16 %v1687
        %v1801 = vunpack.c.h.b16 %v1687
        %v1802 = vunpack.c.l.b16 %v1688
        %v1803 = vunpack.c.h.b16 %v1688
        %v1804 = vunpack.c.l.b16 %v1689
        %v1805 = vunpack.c.h.b16 %v1689
        %v1806 = vunpack.c.l.b16 %v1690
        %v1807 = vunpack.c.h.b16 %v1690
        %v1808 = vunpack.c.l.b16 %v1691
        %v1809 = vunpack.c.h.b16 %v1691
        %v1810 = vunpack.c.l.b16 %v1692
        %v1811 = vunpack.c.h.b16 %v1692
        %v1812 = vunpack.c.l.b16 %v1693
        %v1813 = vunpack.c.h.b16 %v1693
        %v1814 = vunpack.c.l.b16 %v1694
        %v1815 = vunpack.c.h.b16 %v1694
        %v1816 = vunpack.c.l.b16 %v1695
        %v1817 = vunpack.c.h.b16 %v1695
        %v1818 = vunpack.c.l.b16 %v1696
        %v1819 = vunpack.c.h.b16 %v1696
        %v1820 = vunpack.c.l.b16 %v1697
        %v1821 = vunpack.c.h.b16 %v1697
        %v1822 = vunpack.c.l.b16 %v1698
        %v1823 = vunpack.c.h.b16 %v1698
        %v1824 = vunpack.c.l.b16 %v1699
        %v1825 = vunpack.c.h.b16 %v1699
        %v1826 = vunpack.c.l.b16 %v1700
        %v1827 = vunpack.c.h.b16 %v1700
        %v1828 = vunpack.c.l.b16 %v1701
        %v1829 = vunpack.c.h.b16 %v1701
        %v1830 = vunpack.c.l.b16 %v1702
        %v1831 = vunpack.c.h.b16 %v1702
        %v1832 = vunpack.c.l.b16 %v1703
        %v1833 = vunpack.c.h.b16 %v1703
        %v1834 = vunpack.c.l.b16 %v1704
        %v1835 = vunpack.c.h.b16 %v1704
        %v1836 = vunpack.c.l.b16 %v1705
        %v1837 = vunpack.c.h.b16 %v1705
        %v1838 = vunpack.c.l.b16 %v1706
        %v1839 = vunpack.c.h.b16 %v1706
        %v1840 = vunpack.c.l.b16 %v1707
        %v1841 = vunpack.c.h.b16 %v1707
        %v1842 = vunpack.c.l.b16 %v1708
        %v1843 = vunpack.c.h.b16 %v1708
        %v1844 = vunpack.c.l.b16 %v1709
        %v1845 = vunpack.c.h.b16 %v1709
        %v1846 = vpack.c.b16 %v1784, %v1782
        %v1847 = vpack.c.b16 %v1785, %v1783
        %v1848 = vpack.c.b16 %v1788, %v1786
        %v1849 = vpack.c.b16 %v1789, %v1787
        %v1850 = vpack.c.b16 %v1792, %v1790
        %v1851 = vpack.c.b16 %v1793, %v1791
        %v1852 = vpack.c.b16 %v1796, %v1794
        %v1853 = vpack.c.b16 %v1797, %v1795
        %v1854 = vpack.c.b16 %v1800, %v1798
        %v1855 = vpack.c.b16 %v1801, %v1799
        %v1856 = vpack.c.b16 %v1804, %v1802
        %v1857 = vpack.c.b16 %v1805, %v1803
        %v1858 = vpack.c.b16 %v1808, %v1806
        %v1859 = vpack.c.b16 %v1809, %v1807
        %v1860 = vpack.c.b16 %v1812, %v1810
        %v1861 = vpack.c.b16 %v1813, %v1811
        %v1862 = vpack.c.b16 %v1816, %v1814
        %v1863 = vpack.c.b16 %v1817, %v1815
        %v1864 = vpack.c.b16 %v1820, %v1818
        %v1865 = vpack.c.b16 %v1821, %v1819
        %v1866 = vpack.c.b16 %v1824, %v1822
        %v1867 = vpack.c.b16 %v1825, %v1823
        %v1868 = vpack.c.b16 %v1828, %v1826
        %v1869 = vpack.c.b16 %v1829, %v1827
        %v1870 = vpack.c.b16 %v1832, %v1830
        %v1871 = vpack.c.b16 %v1833, %v1831
        %v1872 = vpack.c.b16 %v1836, %v1834
        %v1873 = vpack.c.b16 %v1837, %v1835
        %v1874 = vpack.c.b16 %v1840, %v1838
        %v1875 = vpack.c.b16 %v1841, %v1839
        %v1876 = vpack.c.b16 %v1844, %v1842
        %v1877 = vpack.c.b16 %v1845, %v1843
        %v1942 = vunpack.c.l.b16 %v1711
        %v1943 = vunpack.c.h.b16 %v1711
        %v1944 = vunpack.c.l.b16 %v1712
        %v1945 = vunpack.c.h.b16 %v1712
        %v1946 = vunpack.c.l.b16 %v1713
        %v1947 = vunpack.c.h.b16 %v1713
        %v1948 = vunpack.c.l.b16 %v1714
        %v1949 = vunpack.c.h.b16 %v1714
        %v1950 = vunpack.c.l.b16 %v1715
        %v1951 = vunpack.c.h.b16 %v1715
        %v1952 = vunpack.c.l.b16 %v1716
        %v1953 = vunpack.c.h.b16 %v1716
        %v1954 = vunpack.c.l.b16 %v1717
        %v1955 = vunpack.c.h.b16 %v1717
        %v1956 = vunpack.c.l.b16 %v1718
        %v1957 = vunpack.c.h.b16 %v1718
        %v1958 = vunpack.c.l.b16 %v1719
        %v1959 = vunpack.c.h.b16 %v1719
        %v1960 = vunpack.c.l.b16 %v1720
        %v1961 = vunpack.c.h.b16 %v1720
        %v1962 = vunpack.c.l.b16 %v1721
        %v1963 = vunpack.c.h.b16 %v1721
        %v1964 = vunpack.c.l.b16 %v1722
        %v1965 = vunpack.c.h.b16 %v1722
        %v1966 = vunpack.c.l.b16 %v1723
        %v1967 = vunpack.c.h.b16 %v1723
        %v1968 = vunpack.c.l.b16 %v1724
        %v1969 = vunpack.c.h.b16 %v1724
        %v1970 = vunpack.c.l.b16 %v1725
        %v1971 = vunpack.c.h.b16 %v1725
        %v1972 = vunpack.c.l.b16 %v1726
        %v1973 = vunpack.c.h.b16 %v1726
        %v1974 = vunpack.c.l.b16 %v1727
        %v1975 = vunpack.c.h.b16 %v1727
        %v1976 = vunpack.c.l.b16 %v1728
        %v1977 = vunpack.c.h.b16 %v1728
        %v1978 = vunpack.c.l.b16 %v1729
        %v1979 = vunpack.c.h.b16 %v1729
        %v1980 = vunpack.c.l.b16 %v1730
        %v1981 = vunpack.c.h.b16 %v1730
        %v1982 = vunpack.c.l.b16 %v1731
        %v1983 = vunpack.c.h.b16 %v1731
        %v1984 = vunpack.c.l.b16 %v1732
        %v1985 = vunpack.c.h.b16 %v1732
        %v1986 = vunpack.c.l.b16 %v1733
        %v1987 = vunpack.c.h.b16 %v1733
        %v1988 = vunpack.c.l.b16 %v1734
        %v1989 = vunpack.c.h.b16 %v1734
        %v1990 = vunpack.c.l.b16 %v1735
        %v1991 = vunpack.c.h.b16 %v1735
        %v1992 = vunpack.c.l.b16 %v1736
        %v1993 = vunpack.c.h.b16 %v1736
        %v1994 = vunpack.c.l.b16 %v1737
        %v1995 = vunpack.c.h.b16 %v1737
        %v1996 = vunpack.c.l.b16 %v1738
        %v1997 = vunpack.c.h.b16 %v1738
        %v1998 = vunpack.c.l.b16 %v1739
        %v1999 = vunpack.c.h.b16 %v1739
        %v2000 = vunpack.c.l.b16 %v1740
        %v2001 = vunpack.c.h.b16 %v1740
        %v2002 = vunpack.c.l.b16 %v1741
        %v2003 = vunpack.c.h.b16 %v1741
        %v2004 = vunpack.c.l.b16 %v1742
        %v2005 = vunpack.c.h.b16 %v1742
        %v2006 = vpack.c.b16 %v1944, %v1942
        %v2007 = vpack.c.b16 %v1945, %v1943
        %v2008 = vpack.c.b16 %v1948, %v1946
        %v2009 = vpack.c.b16 %v1949, %v1947
        %v2010 = vpack.c.b16 %v1952, %v1950
        %v2011 = vpack.c.b16 %v1953, %v1951
        %v2012 = vpack.c.b16 %v1956, %v1954
        %v2013 = vpack.c.b16 %v1957, %v1955
        %v2014 = vpack.c.b16 %v1960, %v1958
        %v2015 = vpack.c.b16 %v1961, %v1959
        %v2016 = vpack.c.b16 %v1964, %v1962
        %v2017 = vpack.c.b16 %v1965, %v1963
        %v2018 = vpack.c.b16 %v1968, %v1966
        %v2019 = vpack.c.b16 %v1969, %v1967
        %v2020 = vpack.c.b16 %v1972, %v1970
        %v2021 = vpack.c.b16 %v1973, %v1971
        %v2022 = vpack.c.b16 %v1976, %v1974
        %v2023 = vpack.c.b16 %v1977, %v1975
        %v2024 = vpack.c.b16 %v1980, %v1978
        %v2025 = vpack.c.b16 %v1981, %v1979
        %v2026 = vpack.c.b16 %v1984, %v1982
        %v2027 = vpack.c.b16 %v1985, %v1983
        %v2028 = vpack.c.b16 %v1988, %v1986
        %v2029 = vpack.c.b16 %v1989, %v1987
        %v2030 = vpack.c.b16 %v1992, %v1990
        %v2031 = vpack.c.b16 %v1993, %v1991
        %v2032 = vpack.c.b16 %v1996, %v1994
        %v2033 = vpack.c.b16 %v1997, %v1995
        %v2034 = vpack.c.b16 %v2000, %v1998
        %v2035 = vpack.c.b16 %v2001, %v1999
        %v2036 = vpack.c.b16 %v2004, %v2002
        %v2037 = vpack.c.b16 %v2005, %v2003
        %2070 = vmatpush.bf16.xpose.msra.mxu0 %v2020
        %2071 = vmatpush.bf16.xpose.msra.mxu0 %v2018
        %2072 = vmatpush.bf16.xpose.msra.mxu0 %v2016
        %2073 = vmatpush.bf16.xpose.msra.mxu0 %v2014
        %2074 = vmatpush.bf16.xpose.msra.mxu0 %v2012
        %2075 = vmatpush.bf16.xpose.msra.mxu0 %v2010
        %2076 = vmatpush.bf16.xpose.msra.mxu0 %v2008
        %2077 = vmatpush.bf16.xpose.msra.mxu0 %v2006
        %2078 = vmatmul.bf16.gmra.mxu0 %v1846
        %v2079 = vpop.f32.mrf.mxu0
        %v2080 = vadd.f32 %v1746, %v2079
        %v2081 = vpop.f32.mrf.mxu0
        %v2082 = vadd.f32 %v1746, %v2081
        %2083 = vmatmul.bf16.gmra.mxu0 %v1848
        %v2084 = vpop.f32.mrf.mxu0
        %v2085 = vadd.f32 %v1746, %v2084
        %v2086 = vpop.f32.mrf.mxu0
        %v2087 = vadd.f32 %v1746, %v2086
        %2088 = vmatmul.bf16.gmra.mxu0 %v1850
        %v2089 = vpop.f32.mrf.mxu0
        %v2090 = vadd.f32 %v1746, %v2089
        %v2091 = vpop.f32.mrf.mxu0
        %v2092 = vadd.f32 %v1746, %v2091
        %2093 = vmatmul.bf16.gmra.mxu0 %v1852
        %v2094 = vpop.f32.mrf.mxu0
        %v2095 = vadd.f32 %v1746, %v2094
        %v2096 = vpop.f32.mrf.mxu0
        %v2097 = vadd.f32 %v1746, %v2096
        %2098 = vmatmul.bf16.gmra.mxu0 %v1854
        %v2099 = vpop.f32.mrf.mxu0
        %v2100 = vadd.f32 %v1746, %v2099
        %v2101 = vpop.f32.mrf.mxu0
        %v2102 = vadd.f32 %v1746, %v2101
        %2103 = vmatmul.bf16.gmra.mxu0 %v1856
        %v2104 = vpop.f32.mrf.mxu0
        %v2105 = vadd.f32 %v1746, %v2104
        %v2106 = vpop.f32.mrf.mxu0
        %v2107 = vadd.f32 %v1746, %v2106
        %2108 = vmatmul.bf16.gmra.mxu0 %v1858
        %v2109 = vpop.f32.mrf.mxu0
        %v2110 = vadd.f32 %v1746, %v2109
        %v2111 = vpop.f32.mrf.mxu0
        %v2112 = vadd.f32 %v1746, %v2111
        %2113 = vmatmul.bf16.gmra.mxu0 %v1860
        %v2114 = vpop.f32.mrf.mxu0
        %v2115 = vadd.f32 %v1746, %v2114
        %v2116 = vpop.f32.mrf.mxu0
        %v2117 = vadd.f32 %v1746, %v2116
        %2118 = vmatmul.bf16.gmra.mxu0 %v1862
        %v2119 = vpop.f32.mrf.mxu0
        %v2120 = vadd.f32 %v1746, %v2119
        %v2121 = vpop.f32.mrf.mxu0
        %v2122 = vadd.f32 %v1746, %v2121
        %2123 = vmatmul.bf16.gmra.mxu0 %v1864
        %v2124 = vpop.f32.mrf.mxu0
        %v2125 = vadd.f32 %v1746, %v2124
        %v2126 = vpop.f32.mrf.mxu0
        %v2127 = vadd.f32 %v1746, %v2126
        %2128 = vmatmul.bf16.gmra.mxu0 %v1866
        %v2129 = vpop.f32.mrf.mxu0
        %v2130 = vadd.f32 %v1746, %v2129
        %v2131 = vpop.f32.mrf.mxu0
        %v2132 = vadd.f32 %v1746, %v2131
        %2133 = vmatmul.bf16.gmra.mxu0 %v1868
        %v2134 = vpop.f32.mrf.mxu0
        %v2135 = vadd.f32 %v1746, %v2134
        %v2136 = vpop.f32.mrf.mxu0
        %v2137 = vadd.f32 %v1746, %v2136
        %2138 = vmatmul.bf16.gmra.mxu0 %v1870
        %v2139 = vpop.f32.mrf.mxu0
        %v2140 = vadd.f32 %v1746, %v2139
        %v2141 = vpop.f32.mrf.mxu0
        %v2142 = vadd.f32 %v1746, %v2141
        %2143 = vmatmul.bf16.gmra.mxu0 %v1872
        %v2144 = vpop.f32.mrf.mxu0
        %v2145 = vadd.f32 %v1746, %v2144
        %v2146 = vpop.f32.mrf.mxu0
        %v2147 = vadd.f32 %v1746, %v2146
        %2148 = vmatmul.bf16.gmra.mxu0 %v1874
        %v2149 = vpop.f32.mrf.mxu0
        %v2150 = vadd.f32 %v1746, %v2149
        %v2151 = vpop.f32.mrf.mxu0
        %v2152 = vadd.f32 %v1746, %v2151
        %2153 = vmatmul.bf16.gmra.mxu0 %v1876
        %v2154 = vpop.f32.mrf.mxu0
        %v2155 = vadd.f32 %v1746, %v2154
        %v2156 = vpop.f32.mrf.mxu0
        %v2157 = vadd.f32 %v1746, %v2156
        %2158 = vdwg.mxu0
        %2159 = vmatpush.bf16.xpose.msra.mxu0 %v2021
        %2160 = vmatpush.bf16.xpose.msra.mxu0 %v2019
        %2161 = vmatpush.bf16.xpose.msra.mxu0 %v2017
        %2162 = vmatpush.bf16.xpose.msra.mxu0 %v2015
        %2163 = vmatpush.bf16.xpose.msra.mxu0 %v2013
        %2164 = vmatpush.bf16.xpose.msra.mxu0 %v2011
        %2165 = vmatpush.bf16.xpose.msra.mxu0 %v2009
        %2166 = vmatpush.bf16.xpose.msra.mxu0 %v2007
        %2167 = vmatmul.bf16.gmra.mxu0 %v1847
        %v2168 = vpop.f32.mrf.mxu0
        %v2169 = vadd.f32 %v2080, %v2168
        %v2170 = vpop.f32.mrf.mxu0
        %v2171 = vadd.f32 %v2082, %v2170
        %2172 = vmatmul.bf16.gmra.mxu0 %v1849
        %v2173 = vpop.f32.mrf.mxu0
        %v2174 = vadd.f32 %v2085, %v2173
        %v2175 = vpop.f32.mrf.mxu0
        %v2176 = vadd.f32 %v2087, %v2175
        %2177 = vmatmul.bf16.gmra.mxu0 %v1851
        %v2178 = vpop.f32.mrf.mxu0
        %v2179 = vadd.f32 %v2090, %v2178
        %v2180 = vpop.f32.mrf.mxu0
        %v2181 = vadd.f32 %v2092, %v2180
        %2182 = vmatmul.bf16.gmra.mxu0 %v1853
        %v2183 = vpop.f32.mrf.mxu0
        %v2184 = vadd.f32 %v2095, %v2183
        %v2185 = vpop.f32.mrf.mxu0
        %v2186 = vadd.f32 %v2097, %v2185
        %2187 = vmatmul.bf16.gmra.mxu0 %v1855
        %v2188 = vpop.f32.mrf.mxu0
        %v2189 = vadd.f32 %v2100, %v2188
        %v2190 = vpop.f32.mrf.mxu0
        %v2191 = vadd.f32 %v2102, %v2190
        %2192 = vmatmul.bf16.gmra.mxu0 %v1857
        %v2193 = vpop.f32.mrf.mxu0
        %v2194 = vadd.f32 %v2105, %v2193
        %v2195 = vpop.f32.mrf.mxu0
        %v2196 = vadd.f32 %v2107, %v2195
        %2197 = vmatmul.bf16.gmra.mxu0 %v1859
        %v2198 = vpop.f32.mrf.mxu0
        %v2199 = vadd.f32 %v2110, %v2198
        %v2200 = vpop.f32.mrf.mxu0
        %v2201 = vadd.f32 %v2112, %v2200
        %2202 = vmatmul.bf16.gmra.mxu0 %v1861
        %v2203 = vpop.f32.mrf.mxu0
        %v2204 = vadd.f32 %v2115, %v2203
        %v2205 = vpop.f32.mrf.mxu0
        %v2206 = vadd.f32 %v2117, %v2205
        %2207 = vmatmul.bf16.gmra.mxu0 %v1863
        %v2208 = vpop.f32.mrf.mxu0
        %v2209 = vadd.f32 %v2120, %v2208
        %v2210 = vpop.f32.mrf.mxu0
        %v2211 = vadd.f32 %v2122, %v2210
        %2212 = vmatmul.bf16.gmra.mxu0 %v1865
        %v2213 = vpop.f32.mrf.mxu0
        %v2214 = vadd.f32 %v2125, %v2213
        %v2215 = vpop.f32.mrf.mxu0
        %v2216 = vadd.f32 %v2127, %v2215
        %2217 = vmatmul.bf16.gmra.mxu0 %v1867
        %v2218 = vpop.f32.mrf.mxu0
        %v2219 = vadd.f32 %v2130, %v2218
        %v2220 = vpop.f32.mrf.mxu0
        %v2221 = vadd.f32 %v2132, %v2220
        %2222 = vmatmul.bf16.gmra.mxu0 %v1869
        %v2223 = vpop.f32.mrf.mxu0
        %v2224 = vadd.f32 %v2135, %v2223
        %v2225 = vpop.f32.mrf.mxu0
        %v2226 = vadd.f32 %v2137, %v2225
        %2227 = vmatmul.bf16.gmra.mxu0 %v1871
        %v2228 = vpop.f32.mrf.mxu0
        %v2229 = vadd.f32 %v2140, %v2228
        %v2230 = vpop.f32.mrf.mxu0
        %v2231 = vadd.f32 %v2142, %v2230
        %2232 = vmatmul.bf16.gmra.mxu0 %v1873
        %v2233 = vpop.f32.mrf.mxu0
        %v2234 = vadd.f32 %v2145, %v2233
        %v2235 = vpop.f32.mrf.mxu0
        %v2236 = vadd.f32 %v2147, %v2235
        %2237 = vmatmul.bf16.gmra.mxu0 %v1875
        %v2238 = vpop.f32.mrf.mxu0
        %v2239 = vadd.f32 %v2150, %v2238
        %v2240 = vpop.f32.mrf.mxu0
        %v2241 = vadd.f32 %v2152, %v2240
        %2242 = vmatmul.bf16.gmra.mxu0 %v1877
        %v2243 = vpop.f32.mrf.mxu0
        %v2244 = vadd.f32 %v2155, %v2243
        %v2245 = vpop.f32.mrf.mxu0
        %v2246 = vadd.f32 %v2157, %v2245
        %2247 = vdwg.mxu0
        %2248 = vmatpush.bf16.xpose.msra.mxu0 %v2036
        %2249 = vmatpush.bf16.xpose.msra.mxu0 %v2034
        %2250 = vmatpush.bf16.xpose.msra.mxu0 %v2032
        %2251 = vmatpush.bf16.xpose.msra.mxu0 %v2030
        %2252 = vmatpush.bf16.xpose.msra.mxu0 %v2028
        %2253 = vmatpush.bf16.xpose.msra.mxu0 %v2026
        %2254 = vmatpush.bf16.xpose.msra.mxu0 %v2024
        %2255 = vmatpush.bf16.xpose.msra.mxu0 %v2022
        %2256 = vmatmul.bf16.gmra.mxu0 %v1846
        %v2257 = vpop.f32.mrf.mxu0
        %v2258 = vadd.f32 %v1747, %v2257
        %v2259 = vpop.f32.mrf.mxu0
        %v2260 = vadd.f32 %v1747, %v2259
        %2261 = vmatmul.bf16.gmra.mxu0 %v1848
        %v2262 = vpop.f32.mrf.mxu0
        %v2263 = vadd.f32 %v1747, %v2262
        %v2264 = vpop.f32.mrf.mxu0
        %v2265 = vadd.f32 %v1747, %v2264
        %2266 = vmatmul.bf16.gmra.mxu0 %v1850
        %v2267 = vpop.f32.mrf.mxu0
        %v2268 = vadd.f32 %v1747, %v2267
        %v2269 = vpop.f32.mrf.mxu0
        %v2270 = vadd.f32 %v1747, %v2269
        %2271 = vmatmul.bf16.gmra.mxu0 %v1852
        %v2272 = vpop.f32.mrf.mxu0
        %v2273 = vadd.f32 %v1747, %v2272
        %v2274 = vpop.f32.mrf.mxu0
        %v2275 = vadd.f32 %v1747, %v2274
        %2276 = vmatmul.bf16.gmra.mxu0 %v1854
        %v2277 = vpop.f32.mrf.mxu0
        %v2278 = vadd.f32 %v1747, %v2277
        %v2279 = vpop.f32.mrf.mxu0
        %v2280 = vadd.f32 %v1747, %v2279
        %2281 = vmatmul.bf16.gmra.mxu0 %v1856
        %v2282 = vpop.f32.mrf.mxu0
        %v2283 = vadd.f32 %v1747, %v2282
        %v2284 = vpop.f32.mrf.mxu0
        %v2285 = vadd.f32 %v1747, %v2284
        %2286 = vmatmul.bf16.gmra.mxu0 %v1858
        %v2287 = vpop.f32.mrf.mxu0
        %v2288 = vadd.f32 %v1747, %v2287
        %v2289 = vpop.f32.mrf.mxu0
        %v2290 = vadd.f32 %v1747, %v2289
        %2291 = vmatmul.bf16.gmra.mxu0 %v1860
        %v2292 = vpop.f32.mrf.mxu0
        %v2293 = vadd.f32 %v1747, %v2292
        %v2294 = vpop.f32.mrf.mxu0
        %v2295 = vadd.f32 %v1747, %v2294
        %2296 = vmatmul.bf16.gmra.mxu0 %v1862
        %v2297 = vpop.f32.mrf.mxu0
        %v2298 = vadd.f32 %v1747, %v2297
        %v2299 = vpop.f32.mrf.mxu0
        %v2300 = vadd.f32 %v1747, %v2299
        %2301 = vmatmul.bf16.gmra.mxu0 %v1864
        %v2302 = vpop.f32.mrf.mxu0
        %v2303 = vadd.f32 %v1747, %v2302
        %v2304 = vpop.f32.mrf.mxu0
        %v2305 = vadd.f32 %v1747, %v2304
        %2306 = vmatmul.bf16.gmra.mxu0 %v1866
        %v2307 = vpop.f32.mrf.mxu0
        %v2308 = vadd.f32 %v1747, %v2307
        %v2309 = vpop.f32.mrf.mxu0
        %v2310 = vadd.f32 %v1747, %v2309
        %2311 = vmatmul.bf16.gmra.mxu0 %v1868
        %v2312 = vpop.f32.mrf.mxu0
        %v2313 = vadd.f32 %v1747, %v2312
        %v2314 = vpop.f32.mrf.mxu0
        %v2315 = vadd.f32 %v1747, %v2314
        %2316 = vmatmul.bf16.gmra.mxu0 %v1870
        %v2317 = vpop.f32.mrf.mxu0
        %v2318 = vadd.f32 %v1747, %v2317
        %v2319 = vpop.f32.mrf.mxu0
        %v2320 = vadd.f32 %v1747, %v2319
        %2321 = vmatmul.bf16.gmra.mxu0 %v1872
        %v2322 = vpop.f32.mrf.mxu0
        %v2323 = vadd.f32 %v1747, %v2322
        %v2324 = vpop.f32.mrf.mxu0
        %v2325 = vadd.f32 %v1747, %v2324
        %2326 = vmatmul.bf16.gmra.mxu0 %v1874
        %v2327 = vpop.f32.mrf.mxu0
        %v2328 = vadd.f32 %v1747, %v2327
        %v2329 = vpop.f32.mrf.mxu0
        %v2330 = vadd.f32 %v1747, %v2329
        %2331 = vmatmul.bf16.gmra.mxu0 %v1876
        %v2332 = vpop.f32.mrf.mxu0
        %v2333 = vadd.f32 %v1747, %v2332
        %v2334 = vpop.f32.mrf.mxu0
        %v2335 = vadd.f32 %v1747, %v2334
        %2336 = vdwg.mxu0
        %2337 = vmatpush.bf16.xpose.msra.mxu0 %v2037
        %2338 = vmatpush.bf16.xpose.msra.mxu0 %v2035
        %2339 = vmatpush.bf16.xpose.msra.mxu0 %v2033
        %2340 = vmatpush.bf16.xpose.msra.mxu0 %v2031
        %2341 = vmatpush.bf16.xpose.msra.mxu0 %v2029
        %2342 = vmatpush.bf16.xpose.msra.mxu0 %v2027
        %2343 = vmatpush.bf16.xpose.msra.mxu0 %v2025
        %2344 = vmatpush.bf16.xpose.msra.mxu0 %v2023
        %2345 = vmatmul.bf16.gmra.mxu0 %v1847
        %v2346 = vpop.f32.mrf.mxu0
        %v2347 = vadd.f32 %v2258, %v2346
        %v2348 = vpop.f32.mrf.mxu0
        %v2349 = vadd.f32 %v2260, %v2348
        %2350 = vmatmul.bf16.gmra.mxu0 %v1849
        %v2351 = vpop.f32.mrf.mxu0
        %v2352 = vadd.f32 %v2263, %v2351
        %v2353 = vpop.f32.mrf.mxu0
        %v2354 = vadd.f32 %v2265, %v2353
        %2355 = vmatmul.bf16.gmra.mxu0 %v1851
        %v2356 = vpop.f32.mrf.mxu0
        %v2357 = vadd.f32 %v2268, %v2356
        %v2358 = vpop.f32.mrf.mxu0
        %v2359 = vadd.f32 %v2270, %v2358
        %2360 = vmatmul.bf16.gmra.mxu0 %v1853
        %v2361 = vpop.f32.mrf.mxu0
        %v2362 = vadd.f32 %v2273, %v2361
        %v2363 = vpop.f32.mrf.mxu0
        %v2364 = vadd.f32 %v2275, %v2363
        %2365 = vmatmul.bf16.gmra.mxu0 %v1855
        %v2366 = vpop.f32.mrf.mxu0
        %v2367 = vadd.f32 %v2278, %v2366
        %v2368 = vpop.f32.mrf.mxu0
        %v2369 = vadd.f32 %v2280, %v2368
        %2370 = vmatmul.bf16.gmra.mxu0 %v1857
        %v2371 = vpop.f32.mrf.mxu0
        %v2372 = vadd.f32 %v2283, %v2371
        %v2373 = vpop.f32.mrf.mxu0
        %v2374 = vadd.f32 %v2285, %v2373
        %2375 = vmatmul.bf16.gmra.mxu0 %v1859
        %v2376 = vpop.f32.mrf.mxu0
        %v2377 = vadd.f32 %v2288, %v2376
        %v2378 = vpop.f32.mrf.mxu0
        %v2379 = vadd.f32 %v2290, %v2378
        %2380 = vmatmul.bf16.gmra.mxu0 %v1861
        %v2381 = vpop.f32.mrf.mxu0
        %v2382 = vadd.f32 %v2293, %v2381
        %v2383 = vpop.f32.mrf.mxu0
        %v2384 = vadd.f32 %v2295, %v2383
        %2385 = vmatmul.bf16.gmra.mxu0 %v1863
        %v2386 = vpop.f32.mrf.mxu0
        %v2387 = vadd.f32 %v2298, %v2386
        %v2388 = vpop.f32.mrf.mxu0
        %v2389 = vadd.f32 %v2300, %v2388
        %2390 = vmatmul.bf16.gmra.mxu0 %v1865
        %v2391 = vpop.f32.mrf.mxu0
        %v2392 = vadd.f32 %v2303, %v2391
        %v2393 = vpop.f32.mrf.mxu0
        %v2394 = vadd.f32 %v2305, %v2393
        %2395 = vmatmul.bf16.gmra.mxu0 %v1867
        %v2396 = vpop.f32.mrf.mxu0
        %v2397 = vadd.f32 %v2308, %v2396
        %v2398 = vpop.f32.mrf.mxu0
        %v2399 = vadd.f32 %v2310, %v2398
        %2400 = vmatmul.bf16.gmra.mxu0 %v1869
        %v2401 = vpop.f32.mrf.mxu0
        %v2402 = vadd.f32 %v2313, %v2401
        %v2403 = vpop.f32.mrf.mxu0
        %v2404 = vadd.f32 %v2315, %v2403
        %2405 = vmatmul.bf16.gmra.mxu0 %v1871
        %v2406 = vpop.f32.mrf.mxu0
        %v2407 = vadd.f32 %v2318, %v2406
        %v2408 = vpop.f32.mrf.mxu0
        %v2409 = vadd.f32 %v2320, %v2408
        %2410 = vmatmul.bf16.gmra.mxu0 %v1873
        %v2411 = vpop.f32.mrf.mxu0
        %v2412 = vadd.f32 %v2323, %v2411
        %v2413 = vpop.f32.mrf.mxu0
        %v2414 = vadd.f32 %v2325, %v2413
        %2415 = vmatmul.bf16.gmra.mxu0 %v1875
        %v2416 = vpop.f32.mrf.mxu0
        %v2417 = vadd.f32 %v2328, %v2416
        %v2418 = vpop.f32.mrf.mxu0
        %v2419 = vadd.f32 %v2330, %v2418
        %2420 = vmatmul.bf16.gmra.mxu0 %v1877
        %v2421 = vpop.f32.mrf.mxu0
        %v2422 = vadd.f32 %v2333, %v2421
        %v2423 = vpop.f32.mrf.mxu0
        %v2424 = vadd.f32 %v2335, %v2423
        %2425 = vdwg.mxu0
        %v2426 = vpack.c.bf16 %v2347, %v2169
        %v2427 = vpack.c.bf16 %v2349, %v2171
        %v2428 = vpack.c.bf16 %v2352, %v2174
        %v2429 = vpack.c.bf16 %v2354, %v2176
        %v2430 = vpack.c.bf16 %v2357, %v2179
        %v2431 = vpack.c.bf16 %v2359, %v2181
        %v2432 = vpack.c.bf16 %v2362, %v2184
        %v2433 = vpack.c.bf16 %v2364, %v2186
        %v2434 = vpack.c.bf16 %v2367, %v2189
        %v2435 = vpack.c.bf16 %v2369, %v2191
        %v2436 = vpack.c.bf16 %v2372, %v2194
        %v2437 = vpack.c.bf16 %v2374, %v2196
        %v2438 = vpack.c.bf16 %v2377, %v2199
        %v2439 = vpack.c.bf16 %v2379, %v2201
        %v2440 = vpack.c.bf16 %v2382, %v2204
        %v2441 = vpack.c.bf16 %v2384, %v2206
        %v2442 = vpack.c.bf16 %v2387, %v2209
        %v2443 = vpack.c.bf16 %v2389, %v2211
        %v2444 = vpack.c.bf16 %v2392, %v2214
        %v2445 = vpack.c.bf16 %v2394, %v2216
        %v2446 = vpack.c.bf16 %v2397, %v2219
        %v2447 = vpack.c.bf16 %v2399, %v2221
        %v2448 = vpack.c.bf16 %v2402, %v2224
        %v2449 = vpack.c.bf16 %v2404, %v2226
        %v2450 = vpack.c.bf16 %v2407, %v2229
        %v2451 = vpack.c.bf16 %v2409, %v2231
        %v2452 = vpack.c.bf16 %v2412, %v2234
        %v2453 = vpack.c.bf16 %v2414, %v2236
        %v2454 = vpack.c.bf16 %v2417, %v2239
        %v2455 = vpack.c.bf16 %v2419, %v2241
        %v2456 = vpack.c.bf16 %v2422, %v2244
        %v2457 = vpack.c.bf16 %v2424, %v2246
        %s2458 = sld [smem:[#allocation4 + %s34]]
        %v2459 = vlaneseq
        %v2460 = vand.u32 %v2459, 127
        %v2461 = vadd.s32 %v2460, 128
        %v2462 = vstv %s2458
        %vm2463 = vcmp.lt.s32.totalorder %v2460, %v2462
        %vm2464 = vcmp.lt.s32.totalorder %v2461, %v2462
        %v2465 = vsel %vm2463, 0.0, -1000000.0
        %v2466 = vsel %vm2464, 0.0, -1000000.0
        %v2483 = vunpack.c.l.b16 %v882
        %v2484 = vunpack.c.l.b16 %v883
        %v2485 = vunpack.c.l.b16 %v884
        %v2486 = vunpack.c.l.b16 %v885
        %v2487 = vunpack.c.l.b16 %v886
        %v2488 = vunpack.c.l.b16 %v887
        %v2489 = vunpack.c.l.b16 %v888
        %v2490 = vunpack.c.l.b16 %v889
        %v2491 = vunpack.c.l.b16 %v890
        %v2492 = vunpack.c.l.b16 %v891
        %v2493 = vunpack.c.l.b16 %v892
        %v2494 = vunpack.c.l.b16 %v893
        %v2495 = vunpack.c.l.b16 %v894
        %v2496 = vunpack.c.l.b16 %v895
        %v2497 = vunpack.c.l.b16 %v896
        %v2498 = vunpack.c.l.b16 %v897
        %v2499 = vpack.c.b16 %v2484, %v2483
        %v2500 = vpack.c.b16 %v2486, %v2485
        %v2501 = vpack.c.b16 %v2488, %v2487
        %v2502 = vpack.c.b16 %v2490, %v2489
        %v2503 = vpack.c.b16 %v2492, %v2491
        %v2504 = vpack.c.b16 %v2494, %v2493
        %v2505 = vpack.c.b16 %v2496, %v2495
        %v2506 = vpack.c.b16 %v2498, %v2497
        %v2539 = vunpack.c.l.b16 %v1646
        %v2540 = vunpack.c.l.b16 %v1647
        %v2541 = vunpack.c.l.b16 %v1648
        %v2542 = vunpack.c.l.b16 %v1649
        %v2543 = vunpack.c.l.b16 %v1650
        %v2544 = vunpack.c.l.b16 %v1651
        %v2545 = vunpack.c.l.b16 %v1652
        %v2546 = vunpack.c.l.b16 %v1653
        %v2547 = vunpack.c.l.b16 %v1654
        %v2548 = vunpack.c.l.b16 %v1655
        %v2549 = vunpack.c.l.b16 %v1656
        %v2550 = vunpack.c.l.b16 %v1657
        %v2551 = vunpack.c.l.b16 %v1658
        %v2552 = vunpack.c.l.b16 %v1659
        %v2553 = vunpack.c.l.b16 %v1660
        %v2554 = vunpack.c.l.b16 %v1661
        %v2555 = vunpack.c.l.b16 %v1662
        %v2556 = vunpack.c.l.b16 %v1663
        %v2557 = vunpack.c.l.b16 %v1664
        %v2558 = vunpack.c.l.b16 %v1665
        %v2559 = vunpack.c.l.b16 %v1666
        %v2560 = vunpack.c.l.b16 %v1667
        %v2561 = vunpack.c.l.b16 %v1668
        %v2562 = vunpack.c.l.b16 %v1669
        %v2563 = vunpack.c.l.b16 %v1670
        %v2564 = vunpack.c.l.b16 %v1671
        %v2565 = vunpack.c.l.b16 %v1672
        %v2566 = vunpack.c.l.b16 %v1673
        %v2567 = vunpack.c.l.b16 %v1674
        %v2568 = vunpack.c.l.b16 %v1675
        %v2569 = vunpack.c.l.b16 %v1676
        %v2570 = vunpack.c.l.b16 %v1677
        %v2571 = vpack.c.b16 %v2540, %v2539
        %v2572 = vpack.c.b16 %v2542, %v2541
        %v2573 = vpack.c.b16 %v2544, %v2543
        %v2574 = vpack.c.b16 %v2546, %v2545
        %v2575 = vpack.c.b16 %v2548, %v2547
        %v2576 = vpack.c.b16 %v2550, %v2549
        %v2577 = vpack.c.b16 %v2552, %v2551
        %v2578 = vpack.c.b16 %v2554, %v2553
        %v2579 = vpack.c.b16 %v2556, %v2555
        %v2580 = vpack.c.b16 %v2558, %v2557
        %v2581 = vpack.c.b16 %v2560, %v2559
        %v2582 = vpack.c.b16 %v2562, %v2561
        %v2583 = vpack.c.b16 %v2564, %v2563
        %v2584 = vpack.c.b16 %v2566, %v2565
        %v2585 = vpack.c.b16 %v2568, %v2567
        %v2586 = vpack.c.b16 %v2570, %v2569
        %vm2587 = vcmask 523264
        %v2589 = vsel %vm2587, %v2499, 0
        %v2592 = vsel %vm2587, %v2500, 0
        %v2595 = vsel %vm2587, %v2501, 0
        %v2598 = vsel %vm2587, %v2502, 0
        %v2601 = vsel %vm2587, %v2503, 0
        %v2604 = vsel %vm2587, %v2504, 0
        %v2607 = vsel %vm2587, %v2505, 0
        %v2610 = vsel %vm2587, %v2506, 0
        %v2613 = vsel %vm2587, %v2571, 0
        %v2616 = vsel %vm2587, %v2572, 0
        %v2619 = vsel %vm2587, %v2573, 0
        %v2622 = vsel %vm2587, %v2574, 0
        %v2625 = vsel %vm2587, %v2575, 0
        %v2628 = vsel %vm2587, %v2576, 0
        %v2631 = vsel %vm2587, %v2577, 0
        %v2634 = vsel %vm2587, %v2578, 0
        %v2637 = vsel %vm2587, %v2579, 0
        %v2640 = vsel %vm2587, %v2580, 0
        %v2643 = vsel %vm2587, %v2581, 0
        %v2646 = vsel %vm2587, %v2582, 0
        %v2649 = vsel %vm2587, %v2583, 0
        %v2652 = vsel %vm2587, %v2584, 0
        %v2655 = vsel %vm2587, %v2585, 0
        %v2658 = vsel %vm2587, %v2586, 0
        %2660 = vmatpush.bf16.xpose.msra.mxu0 %v2634
        %2661 = vmatpush.bf16.xpose.msra.mxu0 %v2631
        %2662 = vmatpush.bf16.xpose.msra.mxu0 %v2628
        %2663 = vmatpush.bf16.xpose.msra.mxu0 %v2625
        %2664 = vmatpush.bf16.xpose.msra.mxu0 %v2622
        %2665 = vmatpush.bf16.xpose.msra.mxu0 %v2619
        %2666 = vmatpush.bf16.xpose.msra.mxu0 %v2616
        %2667 = vmatpush.bf16.xpose.msra.mxu0 %v2613
        %2668 = vmatmul.bf16.gmra.mxu0 %v2589
        %v2669 = vpop.f32.mrf.mxu0
        %v2670 = vadd.f32 %v2465, %v2669
        %v2671 = vpop.f32.mrf.mxu0
        %v2672 = vadd.f32 %v2465, %v2671
        %2673 = vmatmul.bf16.gmra.mxu0 %v2592
        %v2674 = vpop.f32.mrf.mxu0
        %v2675 = vadd.f32 %v2465, %v2674
        %v2676 = vpop.f32.mrf.mxu0
        %v2677 = vadd.f32 %v2465, %v2676
        %2678 = vmatmul.bf16.gmra.mxu0 %v2595
        %v2679 = vpop.f32.mrf.mxu0
        %v2680 = vadd.f32 %v2465, %v2679
        %v2681 = vpop.f32.mrf.mxu0
        %v2682 = vadd.f32 %v2465, %v2681
        %2683 = vmatmul.bf16.gmra.mxu0 %v2598
        %v2684 = vpop.f32.mrf.mxu0
        %v2685 = vadd.f32 %v2465, %v2684
        %v2686 = vpop.f32.mrf.mxu0
        %v2687 = vadd.f32 %v2465, %v2686
        %2688 = vmatmul.bf16.gmra.mxu0 %v2601
        %v2689 = vpop.f32.mrf.mxu0
        %v2690 = vadd.f32 %v2465, %v2689
        %v2691 = vpop.f32.mrf.mxu0
        %v2692 = vadd.f32 %v2465, %v2691
        %2693 = vmatmul.bf16.gmra.mxu0 %v2604
        %v2694 = vpop.f32.mrf.mxu0
        %v2695 = vadd.f32 %v2465, %v2694
        %v2696 = vpop.f32.mrf.mxu0
        %v2697 = vadd.f32 %v2465, %v2696
        %2698 = vmatmul.bf16.gmra.mxu0 %v2607
        %v2699 = vpop.f32.mrf.mxu0
        %v2700 = vadd.f32 %v2465, %v2699
        %v2701 = vpop.f32.mrf.mxu0
        %v2702 = vadd.f32 %v2465, %v2701
        %2703 = vmatmul.bf16.gmra.mxu0 %v2610
        %v2704 = vpop.f32.mrf.mxu0
        %v2705 = vadd.f32 %v2465, %v2704
        %v2706 = vpop.f32.mrf.mxu0
        %v2707 = vadd.f32 %v2465, %v2706
        %2708 = vdwg.mxu0
        %2709 = vmatpush.bf16.xpose.msra.mxu0 %v2658
        %2710 = vmatpush.bf16.xpose.msra.mxu0 %v2655
        %2711 = vmatpush.bf16.xpose.msra.mxu0 %v2652
        %2712 = vmatpush.bf16.xpose.msra.mxu0 %v2649
        %2713 = vmatpush.bf16.xpose.msra.mxu0 %v2646
        %2714 = vmatpush.bf16.xpose.msra.mxu0 %v2643
        %2715 = vmatpush.bf16.xpose.msra.mxu0 %v2640
        %2716 = vmatpush.bf16.xpose.msra.mxu0 %v2637
        %2717 = vmatmul.bf16.gmra.mxu0 %v2589
        %v2718 = vpop.f32.mrf.mxu0
        %v2719 = vadd.f32 %v2466, %v2718
        %v2720 = vpop.f32.mrf.mxu0
        %v2721 = vadd.f32 %v2466, %v2720
        %2722 = vmatmul.bf16.gmra.mxu0 %v2592
        %v2723 = vpop.f32.mrf.mxu0
        %v2724 = vadd.f32 %v2466, %v2723
        %v2725 = vpop.f32.mrf.mxu0
        %v2726 = vadd.f32 %v2466, %v2725
        %2727 = vmatmul.bf16.gmra.mxu0 %v2595
        %v2728 = vpop.f32.mrf.mxu0
        %v2729 = vadd.f32 %v2466, %v2728
        %v2730 = vpop.f32.mrf.mxu0
        %v2731 = vadd.f32 %v2466, %v2730
        %2732 = vmatmul.bf16.gmra.mxu0 %v2598
        %v2733 = vpop.f32.mrf.mxu0
        %v2734 = vadd.f32 %v2466, %v2733
        %v2735 = vpop.f32.mrf.mxu0
        %v2736 = vadd.f32 %v2466, %v2735
        %2737 = vmatmul.bf16.gmra.mxu0 %v2601
        %v2738 = vpop.f32.mrf.mxu0
        %v2739 = vadd.f32 %v2466, %v2738
        %v2740 = vpop.f32.mrf.mxu0
        %v2741 = vadd.f32 %v2466, %v2740
        %2742 = vmatmul.bf16.gmra.mxu0 %v2604
        %v2743 = vpop.f32.mrf.mxu0
        %v2744 = vadd.f32 %v2466, %v2743
        %v2745 = vpop.f32.mrf.mxu0
        %v2746 = vadd.f32 %v2466, %v2745
        %2747 = vmatmul.bf16.gmra.mxu0 %v2607
        %v2748 = vpop.f32.mrf.mxu0
        %v2749 = vadd.f32 %v2466, %v2748
        %v2750 = vpop.f32.mrf.mxu0
        %v2751 = vadd.f32 %v2466, %v2750
        %2752 = vmatmul.bf16.gmra.mxu0 %v2610
        %v2753 = vpop.f32.mrf.mxu0
        %v2754 = vadd.f32 %v2466, %v2753
        %v2755 = vpop.f32.mrf.mxu0
        %v2756 = vadd.f32 %v2466, %v2755
        %2757 = vdwg.mxu0
        %v2758 = vmax.f32 %v2670, %v2719
        %2759 = vmax.xlane.f32.xlu0 %v2758
        %v2760 = vpop.xlane.xlu0 %2759
        %v2761 = vmax.f32 %v2672, %v2721
        %2762 = vmax.xlane.f32.xlu0 %v2761
        %v2763 = vpop.xlane.xlu0 %2762
        %v2764 = vmax.f32 %v2675, %v2724
        %2765 = vmax.xlane.f32.xlu0 %v2764
        %v2766 = vpop.xlane.xlu0 %2765
        %v2767 = vmax.f32 %v2677, %v2726
        %2768 = vmax.xlane.f32.xlu0 %v2767
        %v2769 = vpop.xlane.xlu0 %2768
        %v2770 = vmax.f32 %v2680, %v2729
        %2771 = vmax.xlane.f32.xlu0 %v2770
        %v2772 = vpop.xlane.xlu0 %2771
        %v2773 = vmax.f32 %v2682, %v2731
        %2774 = vmax.xlane.f32.xlu0 %v2773
        %v2775 = vpop.xlane.xlu0 %2774
        %v2776 = vmax.f32 %v2685, %v2734
        %2777 = vmax.xlane.f32.xlu0 %v2776
        %v2778 = vpop.xlane.xlu0 %2777
        %v2779 = vmax.f32 %v2687, %v2736
        %2780 = vmax.xlane.f32.xlu0 %v2779
        %v2781 = vpop.xlane.xlu0 %2780
        %v2782 = vmax.f32 %v2690, %v2739
        %2783 = vmax.xlane.f32.xlu0 %v2782
        %v2784 = vpop.xlane.xlu0 %2783
        %v2785 = vmax.f32 %v2692, %v2741
        %2786 = vmax.xlane.f32.xlu0 %v2785
        %v2787 = vpop.xlane.xlu0 %2786
        %v2788 = vmax.f32 %v2695, %v2744
        %2789 = vmax.xlane.f32.xlu0 %v2788
        %v2790 = vpop.xlane.xlu0 %2789
        %v2791 = vmax.f32 %v2697, %v2746
        %2792 = vmax.xlane.f32.xlu0 %v2791
        %v2793 = vpop.xlane.xlu0 %2792
        %v2794 = vmax.f32 %v2700, %v2749
        %2795 = vmax.xlane.f32.xlu0 %v2794
        %v2796 = vpop.xlane.xlu0 %2795
        %v2797 = vmax.f32 %v2702, %v2751
        %2798 = vmax.xlane.f32.xlu0 %v2797
        %v2799 = vpop.xlane.xlu0 %2798
        %v2800 = vmax.f32 %v2705, %v2754
        %2801 = vmax.xlane.f32.xlu0 %v2800
        %v2802 = vpop.xlane.xlu0 %2801
        %v2803 = vmax.f32 %v2707, %v2756
        %2804 = vmax.xlane.f32.xlu0 %v2803
        %v2805 = vpop.xlane.xlu0 %2804
        %v2806 = vsub.f32 %v2670, %v2760
        %v2807 = vsub.f32 %v2719, %v2760
        %v2808 = vsub.f32 %v2672, %v2763
        %v2809 = vsub.f32 %v2721, %v2763
        %v2810 = vsub.f32 %v2675, %v2766
        %v2811 = vsub.f32 %v2724, %v2766
        %v2812 = vsub.f32 %v2677, %v2769
        %v2813 = vsub.f32 %v2726, %v2769
        %v2814 = vsub.f32 %v2680, %v2772
        %v2815 = vsub.f32 %v2729, %v2772
        %v2816 = vsub.f32 %v2682, %v2775
        %v2817 = vsub.f32 %v2731, %v2775
        %v2818 = vsub.f32 %v2685, %v2778
        %v2819 = vsub.f32 %v2734, %v2778
        %v2820 = vsub.f32 %v2687, %v2781
        %v2821 = vsub.f32 %v2736, %v2781
        %v2822 = vsub.f32 %v2690, %v2784
        %v2823 = vsub.f32 %v2739, %v2784
        %v2824 = vsub.f32 %v2692, %v2787
        %v2825 = vsub.f32 %v2741, %v2787
        %v2826 = vsub.f32 %v2695, %v2790
        %v2827 = vsub.f32 %v2744, %v2790
        %v2828 = vsub.f32 %v2697, %v2793
        %v2829 = vsub.f32 %v2746, %v2793
        %v2830 = vsub.f32 %v2700, %v2796
        %v2831 = vsub.f32 %v2749, %v2796
        %v2832 = vsub.f32 %v2702, %v2799
        %v2833 = vsub.f32 %v2751, %v2799
        %v2834 = vsub.f32 %v2705, %v2802
        %v2835 = vsub.f32 %v2754, %v2802
        %v2836 = vsub.f32 %v2707, %v2805
        %v2837 = vsub.f32 %v2756, %v2805
        %v2838 = vmul.f32 %v2806, 1.442695
        %v2839 = vpow.pop %v2838
        %v2840 = vmul.f32 %v2807, 1.442695
        %v2841 = vpow.pop %v2840
        %v2842 = vmul.f32 %v2808, 1.442695
        %v2843 = vpow.pop %v2842
        %v2844 = vmul.f32 %v2809, 1.442695
        %v2845 = vpow.pop %v2844
        %v2846 = vmul.f32 %v2810, 1.442695
        %v2847 = vpow.pop %v2846
        %v2848 = vmul.f32 %v2811, 1.442695
        %v2849 = vpow.pop %v2848
        %v2850 = vmul.f32 %v2812, 1.442695
        %v2851 = vpow.pop %v2850
        %v2852 = vmul.f32 %v2813, 1.442695
        %v2853 = vpow.pop %v2852
        %v2854 = vmul.f32 %v2814, 1.442695
        %v2855 = vpow.pop %v2854
        %v2856 = vmul.f32 %v2815, 1.442695
        %v2857 = vpow.pop %v2856
        %v2858 = vmul.f32 %v2816, 1.442695
        %v2859 = vpow.pop %v2858
        %v2860 = vmul.f32 %v2817, 1.442695
        %v2861 = vpow.pop %v2860
        %v2862 = vmul.f32 %v2818, 1.442695
        %v2863 = vpow.pop %v2862
        %v2864 = vmul.f32 %v2819, 1.442695
        %v2865 = vpow.pop %v2864
        %v2866 = vmul.f32 %v2820, 1.442695
        %v2867 = vpow.pop %v2866
        %v2868 = vmul.f32 %v2821, 1.442695
        %v2869 = vpow.pop %v2868
        %v2870 = vmul.f32 %v2822, 1.442695
        %v2871 = vpow.pop %v2870
        %v2872 = vmul.f32 %v2823, 1.442695
        %v2873 = vpow.pop %v2872
        %v2874 = vmul.f32 %v2824, 1.442695
        %v2875 = vpow.pop %v2874
        %v2876 = vmul.f32 %v2825, 1.442695
        %v2877 = vpow.pop %v2876
        %v2878 = vmul.f32 %v2826, 1.442695
        %v2879 = vpow.pop %v2878
        %v2880 = vmul.f32 %v2827, 1.442695
        %v2881 = vpow.pop %v2880
        %v2882 = vmul.f32 %v2828, 1.442695
        %v2883 = vpow.pop %v2882
        %v2884 = vmul.f32 %v2829, 1.442695
        %v2885 = vpow.pop %v2884
        %v2886 = vmul.f32 %v2830, 1.442695
        %v2887 = vpow.pop %v2886
        %v2888 = vmul.f32 %v2831, 1.442695
        %v2889 = vpow.pop %v2888
        %v2890 = vmul.f32 %v2832, 1.442695
        %v2891 = vpow.pop %v2890
        %v2892 = vmul.f32 %v2833, 1.442695
        %v2893 = vpow.pop %v2892
        %v2894 = vmul.f32 %v2834, 1.442695
        %v2895 = vpow.pop %v2894
        %v2896 = vmul.f32 %v2835, 1.442695
        %v2897 = vpow.pop %v2896
        %v2898 = vmul.f32 %v2836, 1.442695
        %v2899 = vpow.pop %v2898
        %v2900 = vmul.f32 %v2837, 1.442695
        %v2901 = vpow.pop %v2900
        %v2902 = vadd.f32 %v2839, %v2841
        %2903 = vadd.xlane.f32.xlu0 %v2902
        %v2904 = vpop.xlane.xlu0 %2903
        %v2905 = vadd.f32 %v2843, %v2845
        %2906 = vadd.xlane.f32.xlu0 %v2905
        %v2907 = vpop.xlane.xlu0 %2906
        %v2908 = vadd.f32 %v2847, %v2849
        %2909 = vadd.xlane.f32.xlu0 %v2908
        %v2910 = vpop.xlane.xlu0 %2909
        %v2911 = vadd.f32 %v2851, %v2853
        %2912 = vadd.xlane.f32.xlu0 %v2911
        %v2913 = vpop.xlane.xlu0 %2912
        %v2914 = vadd.f32 %v2855, %v2857
        %2915 = vadd.xlane.f32.xlu0 %v2914
        %v2916 = vpop.xlane.xlu0 %2915
        %v2917 = vadd.f32 %v2859, %v2861
        %2918 = vadd.xlane.f32.xlu0 %v2917
        %v2919 = vpop.xlane.xlu0 %2918
        %v2920 = vadd.f32 %v2863, %v2865
        %2921 = vadd.xlane.f32.xlu0 %v2920
        %v2922 = vpop.xlane.xlu0 %2921
        %v2923 = vadd.f32 %v2867, %v2869
        %2924 = vadd.xlane.f32.xlu0 %v2923
        %v2925 = vpop.xlane.xlu0 %2924
        %v2926 = vadd.f32 %v2871, %v2873
        %2927 = vadd.xlane.f32.xlu0 %v2926
        %v2928 = vpop.xlane.xlu0 %2927
        %v2929 = vadd.f32 %v2875, %v2877
        %2930 = vadd.xlane.f32.xlu0 %v2929
        %v2931 = vpop.xlane.xlu0 %2930
        %v2932 = vadd.f32 %v2879, %v2881
        %2933 = vadd.xlane.f32.xlu0 %v2932
        %v2934 = vpop.xlane.xlu0 %2933
        %v2935 = vadd.f32 %v2883, %v2885
        %2936 = vadd.xlane.f32.xlu0 %v2935
        %v2937 = vpop.xlane.xlu0 %2936
        %v2938 = vadd.f32 %v2887, %v2889
        %2939 = vadd.xlane.f32.xlu0 %v2938
        %v2940 = vpop.xlane.xlu0 %2939
        %v2941 = vadd.f32 %v2891, %v2893
        %2942 = vadd.xlane.f32.xlu0 %v2941
        %v2943 = vpop.xlane.xlu0 %2942
        %v2944 = vadd.f32 %v2895, %v2897
        %2945 = vadd.xlane.f32.xlu0 %v2944
        %v2946 = vpop.xlane.xlu0 %2945
        %v2947 = vadd.f32 %v2899, %v2901
        %2948 = vadd.xlane.f32.xlu0 %v2947
        %v2949 = vpop.xlane.xlu0 %2948
        %v2950 = vrcp.pop %v2904
        %v2951 = vrcp.pop %v2907
        %v2952 = vrcp.pop %v2910
        %v2953 = vrcp.pop %v2913
        %v2954 = vrcp.pop %v2916
        %v2955 = vrcp.pop %v2919
        %v2956 = vrcp.pop %v2922
        %v2957 = vrcp.pop %v2925
        %v2958 = vrcp.pop %v2928
        %v2959 = vrcp.pop %v2931
        %v2960 = vrcp.pop %v2934
        %v2961 = vrcp.pop %v2937
        %v2962 = vrcp.pop %v2940
        %v2963 = vrcp.pop %v2943
        %v2964 = vrcp.pop %v2946
        %v2965 = vrcp.pop %v2949
        %v2966 = vmul.f32 %v2839, %v2950
        %v2967 = vmul.f32 %v2841, %v2950
        %v2968 = vmul.f32 %v2843, %v2951
        %v2969 = vmul.f32 %v2845, %v2951
        %v2970 = vmul.f32 %v2847, %v2952
        %v2971 = vmul.f32 %v2849, %v2952
        %v2972 = vmul.f32 %v2851, %v2953
        %v2973 = vmul.f32 %v2853, %v2953
        %v2974 = vmul.f32 %v2855, %v2954
        %v2975 = vmul.f32 %v2857, %v2954
        %v2976 = vmul.f32 %v2859, %v2955
        %v2977 = vmul.f32 %v2861, %v2955
        %v2978 = vmul.f32 %v2863, %v2956
        %v2979 = vmul.f32 %v2865, %v2956
        %v2980 = vmul.f32 %v2867, %v2957
        %v2981 = vmul.f32 %v2869, %v2957
        %v2982 = vmul.f32 %v2871, %v2958
        %v2983 = vmul.f32 %v2873, %v2958
        %v2984 = vmul.f32 %v2875, %v2959
        %v2985 = vmul.f32 %v2877, %v2959
        %v2986 = vmul.f32 %v2879, %v2960
        %v2987 = vmul.f32 %v2881, %v2960
        %v2988 = vmul.f32 %v2883, %v2961
        %v2989 = vmul.f32 %v2885, %v2961
        %v2990 = vmul.f32 %v2887, %v2962
        %v2991 = vmul.f32 %v2889, %v2962
        %v2992 = vmul.f32 %v2891, %v2963
        %v2993 = vmul.f32 %v2893, %v2963
        %v2994 = vmul.f32 %v2895, %v2964
        %v2995 = vmul.f32 %v2897, %v2964
        %v2996 = vmul.f32 %v2899, %v2965
        %v2997 = vmul.f32 %v2901, %v2965
        %v2998 = vpack.c.bf16 %v2968, %v2966
        %v2999 = vpack.c.bf16 %v2969, %v2967
        %v3000 = vpack.c.bf16 %v2972, %v2970
        %v3001 = vpack.c.bf16 %v2973, %v2971
        %v3002 = vpack.c.bf16 %v2976, %v2974
        %v3003 = vpack.c.bf16 %v2977, %v2975
        %v3004 = vpack.c.bf16 %v2980, %v2978
        %v3005 = vpack.c.bf16 %v2981, %v2979
        %v3006 = vpack.c.bf16 %v2984, %v2982
        %v3007 = vpack.c.bf16 %v2985, %v2983
        %v3008 = vpack.c.bf16 %v2988, %v2986
        %v3009 = vpack.c.bf16 %v2989, %v2987
        %v3010 = vpack.c.bf16 %v2992, %v2990
        %v3011 = vpack.c.bf16 %v2993, %v2991
        %v3012 = vpack.c.bf16 %v2996, %v2994
        %v3013 = vpack.c.bf16 %v2997, %v2995
        %v3046 = vunpack.c.l.b16 %v2426
        %v3047 = vunpack.c.l.b16 %v2427
        %v3048 = vunpack.c.l.b16 %v2428
        %v3049 = vunpack.c.l.b16 %v2429
        %v3050 = vunpack.c.l.b16 %v2430
        %v3051 = vunpack.c.l.b16 %v2431
        %v3052 = vunpack.c.l.b16 %v2432
        %v3053 = vunpack.c.l.b16 %v2433
        %v3054 = vunpack.c.l.b16 %v2434
        %v3055 = vunpack.c.l.b16 %v2435
        %v3056 = vunpack.c.l.b16 %v2436
        %v3057 = vunpack.c.l.b16 %v2437
        %v3058 = vunpack.c.l.b16 %v2438
        %v3059 = vunpack.c.l.b16 %v2439
        %v3060 = vunpack.c.l.b16 %v2440
        %v3061 = vunpack.c.l.b16 %v2441
        %v3062 = vunpack.c.l.b16 %v2442
        %v3063 = vunpack.c.l.b16 %v2443
        %v3064 = vunpack.c.l.b16 %v2444
        %v3065 = vunpack.c.l.b16 %v2445
        %v3066 = vunpack.c.l.b16 %v2446
        %v3067 = vunpack.c.l.b16 %v2447
        %v3068 = vunpack.c.l.b16 %v2448
        %v3069 = vunpack.c.l.b16 %v2449
        %v3070 = vunpack.c.l.b16 %v2450
        %v3071 = vunpack.c.l.b16 %v2451
        %v3072 = vunpack.c.l.b16 %v2452
        %v3073 = vunpack.c.l.b16 %v2453
        %v3074 = vunpack.c.l.b16 %v2454
        %v3075 = vunpack.c.l.b16 %v2455
        %v3076 = vunpack.c.l.b16 %v2456
        %v3077 = vunpack.c.l.b16 %v2457
        %v3078 = vpack.c.b16 %v3047, %v3046
        %v3079 = vpack.c.b16 %v3049, %v3048
        %v3080 = vpack.c.b16 %v3051, %v3050
        %v3081 = vpack.c.b16 %v3053, %v3052
        %v3082 = vpack.c.b16 %v3055, %v3054
        %v3083 = vpack.c.b16 %v3057, %v3056
        %v3084 = vpack.c.b16 %v3059, %v3058
        %v3085 = vpack.c.b16 %v3061, %v3060
        %v3086 = vpack.c.b16 %v3063, %v3062
        %v3087 = vpack.c.b16 %v3065, %v3064
        %v3088 = vpack.c.b16 %v3067, %v3066
        %v3089 = vpack.c.b16 %v3069, %v3068
        %v3090 = vpack.c.b16 %v3071, %v3070
        %v3091 = vpack.c.b16 %v3073, %v3072
        %v3092 = vpack.c.b16 %v3075, %v3074
        %v3093 = vpack.c.b16 %v3077, %v3076
        %3110 = vmatpush.bf16.msra.mxu0 %v3085
        %3111 = vmatpush.bf16.msra.mxu0 %v3084
        %3112 = vmatpush.bf16.msra.mxu0 %v3083
        %3113 = vmatpush.bf16.msra.mxu0 %v3082
        %3114 = vmatpush.bf16.msra.mxu0 %v3081
        %3115 = vmatpush.bf16.msra.mxu0 %v3080
        %3116 = vmatpush.bf16.msra.mxu0 %v3079
        %3117 = vmatpush.bf16.msra.mxu0 %v3078
        %3118 = vmatmul.bf16.gmra.mxu0 %v2998
        %v3119 = vpop.f32.mrf.mxu0
        %v3120 = vadd.f32 0.0, %v3119
        %v3121 = vpop.f32.mrf.mxu0
        %v3122 = vadd.f32 0.0, %v3121
        %3123 = vmatmul.bf16.gmra.mxu0 %v3000
        %v3124 = vpop.f32.mrf.mxu0
        %v3125 = vadd.f32 0.0, %v3124
        %v3126 = vpop.f32.mrf.mxu0
        %v3127 = vadd.f32 0.0, %v3126
        %3128 = vmatmul.bf16.gmra.mxu0 %v3002
        %v3129 = vpop.f32.mrf.mxu0
        %v3130 = vadd.f32 0.0, %v3129
        %v3131 = vpop.f32.mrf.mxu0
        %v3132 = vadd.f32 0.0, %v3131
        %3133 = vmatmul.bf16.gmra.mxu0 %v3004
        %v3134 = vpop.f32.mrf.mxu0
        %v3135 = vadd.f32 0.0, %v3134
        %v3136 = vpop.f32.mrf.mxu0
        %v3137 = vadd.f32 0.0, %v3136
        %3138 = vmatmul.bf16.gmra.mxu0 %v3006
        %v3139 = vpop.f32.mrf.mxu0
        %v3140 = vadd.f32 0.0, %v3139
        %v3141 = vpop.f32.mrf.mxu0
        %v3142 = vadd.f32 0.0, %v3141
        %3143 = vmatmul.bf16.gmra.mxu0 %v3008
        %v3144 = vpop.f32.mrf.mxu0
        %v3145 = vadd.f32 0.0, %v3144
        %v3146 = vpop.f32.mrf.mxu0
        %v3147 = vadd.f32 0.0, %v3146
        %3148 = vmatmul.bf16.gmra.mxu0 %v3010
        %v3149 = vpop.f32.mrf.mxu0
        %v3150 = vadd.f32 0.0, %v3149
        %v3151 = vpop.f32.mrf.mxu0
        %v3152 = vadd.f32 0.0, %v3151
        %3153 = vmatmul.bf16.gmra.mxu0 %v3012
        %v3154 = vpop.f32.mrf.mxu0
        %v3155 = vadd.f32 0.0, %v3154
        %v3156 = vpop.f32.mrf.mxu0
        %v3157 = vadd.f32 0.0, %v3156
        %3158 = vdwg.mxu0
        %3159 = vmatpush.bf16.msra.mxu0 %v3093
        %3160 = vmatpush.bf16.msra.mxu0 %v3092
        %3161 = vmatpush.bf16.msra.mxu0 %v3091
        %3162 = vmatpush.bf16.msra.mxu0 %v3090
        %3163 = vmatpush.bf16.msra.mxu0 %v3089
        %3164 = vmatpush.bf16.msra.mxu0 %v3088
        %3165 = vmatpush.bf16.msra.mxu0 %v3087
        %3166 = vmatpush.bf16.msra.mxu0 %v3086
        %3167 = vmatmul.bf16.gmra.mxu0 %v2999
        %v3168 = vpop.f32.mrf.mxu0
        %v3169 = vadd.f32 %v3120, %v3168
        %v3170 = vpop.f32.mrf.mxu0
        %v3171 = vadd.f32 %v3122, %v3170
        %3172 = vmatmul.bf16.gmra.mxu0 %v3001
        %v3173 = vpop.f32.mrf.mxu0
        %v3174 = vadd.f32 %v3125, %v3173
        %v3175 = vpop.f32.mrf.mxu0
        %v3176 = vadd.f32 %v3127, %v3175
        %3177 = vmatmul.bf16.gmra.mxu0 %v3003
        %v3178 = vpop.f32.mrf.mxu0
        %v3179 = vadd.f32 %v3130, %v3178
        %v3180 = vpop.f32.mrf.mxu0
        %v3181 = vadd.f32 %v3132, %v3180
        %3182 = vmatmul.bf16.gmra.mxu0 %v3005
        %v3183 = vpop.f32.mrf.mxu0
        %v3184 = vadd.f32 %v3135, %v3183
        %v3185 = vpop.f32.mrf.mxu0
        %v3186 = vadd.f32 %v3137, %v3185
        %3187 = vmatmul.bf16.gmra.mxu0 %v3007
        %v3188 = vpop.f32.mrf.mxu0
        %v3189 = vadd.f32 %v3140, %v3188
        %v3190 = vpop.f32.mrf.mxu0
        %v3191 = vadd.f32 %v3142, %v3190
        %3192 = vmatmul.bf16.gmra.mxu0 %v3009
        %v3193 = vpop.f32.mrf.mxu0
        %v3194 = vadd.f32 %v3145, %v3193
        %v3195 = vpop.f32.mrf.mxu0
        %v3196 = vadd.f32 %v3147, %v3195
        %3197 = vmatmul.bf16.gmra.mxu0 %v3011
        %v3198 = vpop.f32.mrf.mxu0
        %v3199 = vadd.f32 %v3150, %v3198
        %v3200 = vpop.f32.mrf.mxu0
        %v3201 = vadd.f32 %v3152, %v3200
        %3202 = vmatmul.bf16.gmra.mxu0 %v3013
        %v3203 = vpop.f32.mrf.mxu0
        %v3204 = vadd.f32 %v3155, %v3203
        %v3205 = vpop.f32.mrf.mxu0
        %v3206 = vadd.f32 %v3157, %v3205
        %3207 = vdwg.mxu0
        %v3208 = vpack.c.bf16 %v3169, %v3169
        %v3209 = vpack.c.bf16 %v3171, %v3171
        %v3210 = vpack.c.bf16 %v3174, %v3174
        %v3211 = vpack.c.bf16 %v3176, %v3176
        %v3212 = vpack.c.bf16 %v3179, %v3179
        %v3213 = vpack.c.bf16 %v3181, %v3181
        %v3214 = vpack.c.bf16 %v3184, %v3184
        %v3215 = vpack.c.bf16 %v3186, %v3186
        %v3216 = vpack.c.bf16 %v3189, %v3189
        %v3217 = vpack.c.bf16 %v3191, %v3191
        %v3218 = vpack.c.bf16 %v3194, %v3194
        %v3219 = vpack.c.bf16 %v3196, %v3196
        %v3220 = vpack.c.bf16 %v3199, %v3199
        %v3221 = vpack.c.bf16 %v3201, %v3201
        %v3222 = vpack.c.bf16 %v3204, %v3204
        %v3223 = vpack.c.bf16 %v3206, %v3206
        %vm3224 = vcmask 519168
        %3225 = vst.msk [vmem:[#allocation2] sm:$0xf] %vm3224, %v3208
        %3226 = vst.msk [vmem:[#allocation2 + $0x8] sm:$0xf] %vm3224, %v3209
        %3227 = vst.msk [vmem:[#allocation2 + $0x10] sm:$0xf] %vm3224, %v3210
        %3228 = vst.msk [vmem:[#allocation2 + $0x18] sm:$0xf] %vm3224, %v3211
        %3229 = vst.msk [vmem:[#allocation2 + $0x20] sm:$0xf] %vm3224, %v3212
        %3230 = vst.msk [vmem:[#allocation2 + $0x28] sm:$0xf] %vm3224, %v3213
        %3231 = vst.msk [vmem:[#allocation2 + $0x30] sm:$0xf] %vm3224, %v3214
        %3232 = vst.msk [vmem:[#allocation2 + $0x38] sm:$0xf] %vm3224, %v3215
        %3233 = vst.msk [vmem:[#allocation2 + $0x40] sm:$0xf] %vm3224, %v3216
        %3234 = vst.msk [vmem:[#allocation2 + $0x48] sm:$0xf] %vm3224, %v3217
        %3235 = vst.msk [vmem:[#allocation2 + $0x50] sm:$0xf] %vm3224, %v3218
        %3236 = vst.msk [vmem:[#allocation2 + $0x58] sm:$0xf] %vm3224, %v3219
        %3237 = vst.msk [vmem:[#allocation2 + $0x60] sm:$0xf] %vm3224, %v3220
        %3238 = vst.msk [vmem:[#allocation2 + $0x68] sm:$0xf] %vm3224, %v3221
        %3239 = vst.msk [vmem:[#allocation2 + $0x70] sm:$0xf] %vm3224, %v3222
        %3240 = vst.msk [vmem:[#allocation2 + $0x78] sm:$0xf] %vm3224, %v3223
        %3241 = vrot.lane.b32.xlu0 %v2499, 64
        %v3242 = vpop.permute.xlu0 %3241
        %3243 = vrot.lane.b32.xlu0 %v2500, 64
        %v3244 = vpop.permute.xlu0 %3243
        %3245 = vrot.lane.b32.xlu0 %v2501, 64
        %v3246 = vpop.permute.xlu0 %3245
        %3247 = vrot.lane.b32.xlu0 %v2502, 64
        %v3248 = vpop.permute.xlu0 %3247
        %3249 = vrot.lane.b32.xlu0 %v2503, 64
        %v3250 = vpop.permute.xlu0 %3249
        %3251 = vrot.lane.b32.xlu0 %v2504, 64
        %v3252 = vpop.permute.xlu0 %3251
        %3253 = vrot.lane.b32.xlu0 %v2505, 64
        %v3254 = vpop.permute.xlu0 %3253
        %3255 = vrot.lane.b32.xlu0 %v2506, 64
        %v3256 = vpop.permute.xlu0 %3255
        %3257 = vrot.lane.b32.xlu0 %v2571, 64
        %v3258 = vpop.permute.xlu0 %3257
        %3259 = vrot.lane.b32.xlu0 %v2572, 64
        %v3260 = vpop.permute.xlu0 %3259
        %3261 = vrot.lane.b32.xlu0 %v2573, 64
        %v3262 = vpop.permute.xlu0 %3261
        %3263 = vrot.lane.b32.xlu0 %v2574, 64
        %v3264 = vpop.permute.xlu0 %3263
        %3265 = vrot.lane.b32.xlu0 %v2575, 64
        %v3266 = vpop.permute.xlu0 %3265
        %3267 = vrot.lane.b32.xlu0 %v2576, 64
        %v3268 = vpop.permute.xlu0 %3267
        %3269 = vrot.lane.b32.xlu0 %v2577, 64
        %v3270 = vpop.permute.xlu0 %3269
        %3271 = vrot.lane.b32.xlu0 %v2578, 64
        %v3272 = vpop.permute.xlu0 %3271
        %3273 = vrot.lane.b32.xlu0 %v2579, 64
        %v3274 = vpop.permute.xlu0 %3273
        %3275 = vrot.lane.b32.xlu0 %v2580, 64
        %v3276 = vpop.permute.xlu0 %3275
        %3277 = vrot.lane.b32.xlu0 %v2581, 64
        %v3278 = vpop.permute.xlu0 %3277
        %3279 = vrot.lane.b32.xlu0 %v2582, 64
        %v3280 = vpop.permute.xlu0 %3279
        %3281 = vrot.lane.b32.xlu0 %v2583, 64
        %v3282 = vpop.permute.xlu0 %3281
        %3283 = vrot.lane.b32.xlu0 %v2584, 64
        %v3284 = vpop.permute.xlu0 %3283
        %3285 = vrot.lane.b32.xlu0 %v2585, 64
        %v3286 = vpop.permute.xlu0 %3285
        %3287 = vrot.lane.b32.xlu0 %v2586, 64
        %v3288 = vpop.permute.xlu0 %3287
        %v3290 = vsel %vm2587, %v3242, 0
        %v3293 = vsel %vm2587, %v3244, 0
        %v3296 = vsel %vm2587, %v3246, 0
        %v3299 = vsel %vm2587, %v3248, 0
        %v3302 = vsel %vm2587, %v3250, 0
        %v3305 = vsel %vm2587, %v3252, 0
        %v3308 = vsel %vm2587, %v3254, 0
        %v3311 = vsel %vm2587, %v3256, 0
        %v3314 = vsel %vm2587, %v3258, 0
        %v3317 = vsel %vm2587, %v3260, 0
        %v3320 = vsel %vm2587, %v3262, 0
        %v3323 = vsel %vm2587, %v3264, 0
        %v3326 = vsel %vm2587, %v3266, 0
        %v3329 = vsel %vm2587, %v3268, 0
        %v3332 = vsel %vm2587, %v3270, 0
        %v3335 = vsel %vm2587, %v3272, 0
        %v3338 = vsel %vm2587, %v3274, 0
        %v3341 = vsel %vm2587, %v3276, 0
        %v3344 = vsel %vm2587, %v3278, 0
        %v3347 = vsel %vm2587, %v3280, 0
        %v3350 = vsel %vm2587, %v3282, 0
        %v3353 = vsel %vm2587, %v3284, 0
        %v3356 = vsel %vm2587, %v3286, 0
        %v3359 = vsel %vm2587, %v3288, 0
        %3361 = vmatpush.bf16.xpose.msra.mxu0 %v3335
        %3362 = vmatpush.bf16.xpose.msra.mxu0 %v3332
        %3363 = vmatpush.bf16.xpose.msra.mxu0 %v3329
        %3364 = vmatpush.bf16.xpose.msra.mxu0 %v3326
        %3365 = vmatpush.bf16.xpose.msra.mxu0 %v3323
        %3366 = vmatpush.bf16.xpose.msra.mxu0 %v3320
        %3367 = vmatpush.bf16.xpose.msra.mxu0 %v3317
        %3368 = vmatpush.bf16.xpose.msra.mxu0 %v3314
        %3369 = vmatmul.bf16.gmra.mxu0 %v3290
        %v3370 = vpop.f32.mrf.mxu0
        %v3371 = vadd.f32 %v2465, %v3370
        %v3372 = vpop.f32.mrf.mxu0
        %v3373 = vadd.f32 %v2465, %v3372
        %3374 = vmatmul.bf16.gmra.mxu0 %v3293
        %v3375 = vpop.f32.mrf.mxu0
        %v3376 = vadd.f32 %v2465, %v3375
        %v3377 = vpop.f32.mrf.mxu0
        %v3378 = vadd.f32 %v2465, %v3377
        %3379 = vmatmul.bf16.gmra.mxu0 %v3296
        %v3380 = vpop.f32.mrf.mxu0
        %v3381 = vadd.f32 %v2465, %v3380
        %v3382 = vpop.f32.mrf.mxu0
        %v3383 = vadd.f32 %v2465, %v3382
        %3384 = vmatmul.bf16.gmra.mxu0 %v3299
        %v3385 = vpop.f32.mrf.mxu0
        %v3386 = vadd.f32 %v2465, %v3385
        %v3387 = vpop.f32.mrf.mxu0
        %v3388 = vadd.f32 %v2465, %v3387
        %3389 = vmatmul.bf16.gmra.mxu0 %v3302
        %v3390 = vpop.f32.mrf.mxu0
        %v3391 = vadd.f32 %v2465, %v3390
        %v3392 = vpop.f32.mrf.mxu0
        %v3393 = vadd.f32 %v2465, %v3392
        %3394 = vmatmul.bf16.gmra.mxu0 %v3305
        %v3395 = vpop.f32.mrf.mxu0
        %v3396 = vadd.f32 %v2465, %v3395
        %v3397 = vpop.f32.mrf.mxu0
        %v3398 = vadd.f32 %v2465, %v3397
        %3399 = vmatmul.bf16.gmra.mxu0 %v3308
        %v3400 = vpop.f32.mrf.mxu0
        %v3401 = vadd.f32 %v2465, %v3400
        %v3402 = vpop.f32.mrf.mxu0
        %v3403 = vadd.f32 %v2465, %v3402
        %3404 = vmatmul.bf16.gmra.mxu0 %v3311
        %v3405 = vpop.f32.mrf.mxu0
        %v3406 = vadd.f32 %v2465, %v3405
        %v3407 = vpop.f32.mrf.mxu0
        %v3408 = vadd.f32 %v2465, %v3407
        %3409 = vdwg.mxu0
        %3410 = vmatpush.bf16.xpose.msra.mxu0 %v3359
        %3411 = vmatpush.bf16.xpose.msra.mxu0 %v3356
        %3412 = vmatpush.bf16.xpose.msra.mxu0 %v3353
        %3413 = vmatpush.bf16.xpose.msra.mxu0 %v3350
        %3414 = vmatpush.bf16.xpose.msra.mxu0 %v3347
        %3415 = vmatpush.bf16.xpose.msra.mxu0 %v3344
        %3416 = vmatpush.bf16.xpose.msra.mxu0 %v3341
        %3417 = vmatpush.bf16.xpose.msra.mxu0 %v3338
        %3418 = vmatmul.bf16.gmra.mxu0 %v3290
        %v3419 = vpop.f32.mrf.mxu0
        %v3420 = vadd.f32 %v2466, %v3419
        %v3421 = vpop.f32.mrf.mxu0
        %v3422 = vadd.f32 %v2466, %v3421
        %3423 = vmatmul.bf16.gmra.mxu0 %v3293
        %v3424 = vpop.f32.mrf.mxu0
        %v3425 = vadd.f32 %v2466, %v3424
        %v3426 = vpop.f32.mrf.mxu0
        %v3427 = vadd.f32 %v2466, %v3426
        %3428 = vmatmul.bf16.gmra.mxu0 %v3296
        %v3429 = vpop.f32.mrf.mxu0
        %v3430 = vadd.f32 %v2466, %v3429
        %v3431 = vpop.f32.mrf.mxu0
        %v3432 = vadd.f32 %v2466, %v3431
        %3433 = vmatmul.bf16.gmra.mxu0 %v3299
        %v3434 = vpop.f32.mrf.mxu0
        %v3435 = vadd.f32 %v2466, %v3434
        %v3436 = vpop.f32.mrf.mxu0
        %v3437 = vadd.f32 %v2466, %v3436
        %3438 = vmatmul.bf16.gmra.mxu0 %v3302
        %v3439 = vpop.f32.mrf.mxu0
        %v3440 = vadd.f32 %v2466, %v3439
        %v3441 = vpop.f32.mrf.mxu0
        %v3442 = vadd.f32 %v2466, %v3441
        %3443 = vmatmul.bf16.gmra.mxu0 %v3305
        %v3444 = vpop.f32.mrf.mxu0
        %v3445 = vadd.f32 %v2466, %v3444
        %v3446 = vpop.f32.mrf.mxu0
        %v3447 = vadd.f32 %v2466, %v3446
        %3448 = vmatmul.bf16.gmra.mxu0 %v3308
        %v3449 = vpop.f32.mrf.mxu0
        %v3450 = vadd.f32 %v2466, %v3449
        %v3451 = vpop.f32.mrf.mxu0
        %v3452 = vadd.f32 %v2466, %v3451
        %3453 = vmatmul.bf16.gmra.mxu0 %v3311
        %v3454 = vpop.f32.mrf.mxu0
        %v3455 = vadd.f32 %v2466, %v3454
        %v3456 = vpop.f32.mrf.mxu0
        %v3457 = vadd.f32 %v2466, %v3456
        %3458 = vdwg.mxu0
        %v3459 = vmax.f32 %v3371, %v3420
        %3460 = vmax.xlane.f32.xlu0 %v3459
        %v3461 = vpop.xlane.xlu0 %3460
        %v3462 = vmax.f32 %v3373, %v3422
        %3463 = vmax.xlane.f32.xlu0 %v3462
        %v3464 = vpop.xlane.xlu0 %3463
        %v3465 = vmax.f32 %v3376, %v3425
        %3466 = vmax.xlane.f32.xlu0 %v3465
        %v3467 = vpop.xlane.xlu0 %3466
        %v3468 = vmax.f32 %v3378, %v3427
        %3469 = vmax.xlane.f32.xlu0 %v3468
        %v3470 = vpop.xlane.xlu0 %3469
        %v3471 = vmax.f32 %v3381, %v3430
        %3472 = vmax.xlane.f32.xlu0 %v3471
        %v3473 = vpop.xlane.xlu0 %3472
        %v3474 = vmax.f32 %v3383, %v3432
        %3475 = vmax.xlane.f32.xlu0 %v3474
        %v3476 = vpop.xlane.xlu0 %3475
        %v3477 = vmax.f32 %v3386, %v3435
        %3478 = vmax.xlane.f32.xlu0 %v3477
        %v3479 = vpop.xlane.xlu0 %3478
        %v3480 = vmax.f32 %v3388, %v3437
        %3481 = vmax.xlane.f32.xlu0 %v3480
        %v3482 = vpop.xlane.xlu0 %3481
        %v3483 = vmax.f32 %v3391, %v3440
        %3484 = vmax.xlane.f32.xlu0 %v3483
        %v3485 = vpop.xlane.xlu0 %3484
        %v3486 = vmax.f32 %v3393, %v3442
        %3487 = vmax.xlane.f32.xlu0 %v3486
        %v3488 = vpop.xlane.xlu0 %3487
        %v3489 = vmax.f32 %v3396, %v3445
        %3490 = vmax.xlane.f32.xlu0 %v3489
        %v3491 = vpop.xlane.xlu0 %3490
        %v3492 = vmax.f32 %v3398, %v3447
        %3493 = vmax.xlane.f32.xlu0 %v3492
        %v3494 = vpop.xlane.xlu0 %3493
        %v3495 = vmax.f32 %v3401, %v3450
        %3496 = vmax.xlane.f32.xlu0 %v3495
        %v3497 = vpop.xlane.xlu0 %3496
        %v3498 = vmax.f32 %v3403, %v3452
        %3499 = vmax.xlane.f32.xlu0 %v3498
        %v3500 = vpop.xlane.xlu0 %3499
        %v3501 = vmax.f32 %v3406, %v3455
        %3502 = vmax.xlane.f32.xlu0 %v3501
        %v3503 = vpop.xlane.xlu0 %3502
        %v3504 = vmax.f32 %v3408, %v3457
        %3505 = vmax.xlane.f32.xlu0 %v3504
        %v3506 = vpop.xlane.xlu0 %3505
        %v3507 = vsub.f32 %v3371, %v3461
        %v3508 = vsub.f32 %v3420, %v3461
        %v3509 = vsub.f32 %v3373, %v3464
        %v3510 = vsub.f32 %v3422, %v3464
        %v3511 = vsub.f32 %v3376, %v3467
        %v3512 = vsub.f32 %v3425, %v3467
        %v3513 = vsub.f32 %v3378, %v3470
        %v3514 = vsub.f32 %v3427, %v3470
        %v3515 = vsub.f32 %v3381, %v3473
        %v3516 = vsub.f32 %v3430, %v3473
        %v3517 = vsub.f32 %v3383, %v3476
        %v3518 = vsub.f32 %v3432, %v3476
        %v3519 = vsub.f32 %v3386, %v3479
        %v3520 = vsub.f32 %v3435, %v3479
        %v3521 = vsub.f32 %v3388, %v3482
        %v3522 = vsub.f32 %v3437, %v3482
        %v3523 = vsub.f32 %v3391, %v3485
        %v3524 = vsub.f32 %v3440, %v3485
        %v3525 = vsub.f32 %v3393, %v3488
        %v3526 = vsub.f32 %v3442, %v3488
        %v3527 = vsub.f32 %v3396, %v3491
        %v3528 = vsub.f32 %v3445, %v3491
        %v3529 = vsub.f32 %v3398, %v3494
        %v3530 = vsub.f32 %v3447, %v3494
        %v3531 = vsub.f32 %v3401, %v3497
        %v3532 = vsub.f32 %v3450, %v3497
        %v3533 = vsub.f32 %v3403, %v3500
        %v3534 = vsub.f32 %v3452, %v3500
        %v3535 = vsub.f32 %v3406, %v3503
        %v3536 = vsub.f32 %v3455, %v3503
        %v3537 = vsub.f32 %v3408, %v3506
        %v3538 = vsub.f32 %v3457, %v3506
        %v3539 = vmul.f32 %v3507, 1.442695
        %v3540 = vpow.pop %v3539
        %v3541 = vmul.f32 %v3508, 1.442695
        %v3542 = vpow.pop %v3541
        %v3543 = vmul.f32 %v3509, 1.442695
        %v3544 = vpow.pop %v3543
        %v3545 = vmul.f32 %v3510, 1.442695
        %v3546 = vpow.pop %v3545
        %v3547 = vmul.f32 %v3511, 1.442695
        %v3548 = vpow.pop %v3547
        %v3549 = vmul.f32 %v3512, 1.442695
        %v3550 = vpow.pop %v3549
        %v3551 = vmul.f32 %v3513, 1.442695
        %v3552 = vpow.pop %v3551
        %v3553 = vmul.f32 %v3514, 1.442695
        %v3554 = vpow.pop %v3553
        %v3555 = vmul.f32 %v3515, 1.442695
        %v3556 = vpow.pop %v3555
        %v3557 = vmul.f32 %v3516, 1.442695
        %v3558 = vpow.pop %v3557
        %v3559 = vmul.f32 %v3517, 1.442695
        %v3560 = vpow.pop %v3559
        %v3561 = vmul.f32 %v3518, 1.442695
        %v3562 = vpow.pop %v3561
        %v3563 = vmul.f32 %v3519, 1.442695
        %v3564 = vpow.pop %v3563
        %v3565 = vmul.f32 %v3520, 1.442695
        %v3566 = vpow.pop %v3565
        %v3567 = vmul.f32 %v3521, 1.442695
        %v3568 = vpow.pop %v3567
        %v3569 = vmul.f32 %v3522, 1.442695
        %v3570 = vpow.pop %v3569
        %v3571 = vmul.f32 %v3523, 1.442695
        %v3572 = vpow.pop %v3571
        %v3573 = vmul.f32 %v3524, 1.442695
        %v3574 = vpow.pop %v3573
        %v3575 = vmul.f32 %v3525, 1.442695
        %v3576 = vpow.pop %v3575
        %v3577 = vmul.f32 %v3526, 1.442695
        %v3578 = vpow.pop %v3577
        %v3579 = vmul.f32 %v3527, 1.442695
        %v3580 = vpow.pop %v3579
        %v3581 = vmul.f32 %v3528, 1.442695
        %v3582 = vpow.pop %v3581
        %v3583 = vmul.f32 %v3529, 1.442695
        %v3584 = vpow.pop %v3583
        %v3585 = vmul.f32 %v3530, 1.442695
        %v3586 = vpow.pop %v3585
        %v3587 = vmul.f32 %v3531, 1.442695
        %v3588 = vpow.pop %v3587
        %v3589 = vmul.f32 %v3532, 1.442695
        %v3590 = vpow.pop %v3589
        %v3591 = vmul.f32 %v3533, 1.442695
        %v3592 = vpow.pop %v3591
        %v3593 = vmul.f32 %v3534, 1.442695
        %v3594 = vpow.pop %v3593
        %v3595 = vmul.f32 %v3535, 1.442695
        %v3596 = vpow.pop %v3595
        %v3597 = vmul.f32 %v3536, 1.442695
        %v3598 = vpow.pop %v3597
        %v3599 = vmul.f32 %v3537, 1.442695
        %v3600 = vpow.pop %v3599
        %v3601 = vmul.f32 %v3538, 1.442695
        %v3602 = vpow.pop %v3601
        %v3603 = vadd.f32 %v3540, %v3542
        %3604 = vadd.xlane.f32.xlu0 %v3603
        %v3605 = vpop.xlane.xlu0 %3604
        %v3606 = vadd.f32 %v3544, %v3546
        %3607 = vadd.xlane.f32.xlu0 %v3606
        %v3608 = vpop.xlane.xlu0 %3607
        %v3609 = vadd.f32 %v3548, %v3550
        %3610 = vadd.xlane.f32.xlu0 %v3609
        %v3611 = vpop.xlane.xlu0 %3610
        %v3612 = vadd.f32 %v3552, %v3554
        %3613 = vadd.xlane.f32.xlu0 %v3612
        %v3614 = vpop.xlane.xlu0 %3613
        %v3615 = vadd.f32 %v3556, %v3558
        %3616 = vadd.xlane.f32.xlu0 %v3615
        %v3617 = vpop.xlane.xlu0 %3616
        %v3618 = vadd.f32 %v3560, %v3562
        %3619 = vadd.xlane.f32.xlu0 %v3618
        %v3620 = vpop.xlane.xlu0 %3619
        %v3621 = vadd.f32 %v3564, %v3566
        %3622 = vadd.xlane.f32.xlu0 %v3621
        %v3623 = vpop.xlane.xlu0 %3622
        %v3624 = vadd.f32 %v3568, %v3570
        %3625 = vadd.xlane.f32.xlu0 %v3624
        %v3626 = vpop.xlane.xlu0 %3625
        %v3627 = vadd.f32 %v3572, %v3574
        %3628 = vadd.xlane.f32.xlu0 %v3627
        %v3629 = vpop.xlane.xlu0 %3628
        %v3630 = vadd.f32 %v3576, %v3578
        %3631 = vadd.xlane.f32.xlu0 %v3630
        %v3632 = vpop.xlane.xlu0 %3631
        %v3633 = vadd.f32 %v3580, %v3582
        %3634 = vadd.xlane.f32.xlu0 %v3633
        %v3635 = vpop.xlane.xlu0 %3634
        %v3636 = vadd.f32 %v3584, %v3586
        %3637 = vadd.xlane.f32.xlu0 %v3636
        %v3638 = vpop.xlane.xlu0 %3637
        %v3639 = vadd.f32 %v3588, %v3590
        %3640 = vadd.xlane.f32.xlu0 %v3639
        %v3641 = vpop.xlane.xlu0 %3640
        %v3642 = vadd.f32 %v3592, %v3594
        %3643 = vadd.xlane.f32.xlu0 %v3642
        %v3644 = vpop.xlane.xlu0 %3643
        %v3645 = vadd.f32 %v3596, %v3598
        %3646 = vadd.xlane.f32.xlu0 %v3645
        %v3647 = vpop.xlane.xlu0 %3646
        %v3648 = vadd.f32 %v3600, %v3602
        %3649 = vadd.xlane.f32.xlu0 %v3648
        %v3650 = vpop.xlane.xlu0 %3649
        %v3651 = vrcp.pop %v3605
        %v3652 = vrcp.pop %v3608
        %v3653 = vrcp.pop %v3611
        %v3654 = vrcp.pop %v3614
        %v3655 = vrcp.pop %v3617
        %v3656 = vrcp.pop %v3620
        %v3657 = vrcp.pop %v3623
        %v3658 = vrcp.pop %v3626
        %v3659 = vrcp.pop %v3629
        %v3660 = vrcp.pop %v3632
        %v3661 = vrcp.pop %v3635
        %v3662 = vrcp.pop %v3638
        %v3663 = vrcp.pop %v3641
        %v3664 = vrcp.pop %v3644
        %v3665 = vrcp.pop %v3647
        %v3666 = vrcp.pop %v3650
        %v3667 = vmul.f32 %v3540, %v3651
        %v3668 = vmul.f32 %v3542, %v3651
        %v3669 = vmul.f32 %v3544, %v3652
        %v3670 = vmul.f32 %v3546, %v3652
        %v3671 = vmul.f32 %v3548, %v3653
        %v3672 = vmul.f32 %v3550, %v3653
        %v3673 = vmul.f32 %v3552, %v3654
        %v3674 = vmul.f32 %v3554, %v3654
        %v3675 = vmul.f32 %v3556, %v3655
        %v3676 = vmul.f32 %v3558, %v3655
        %v3677 = vmul.f32 %v3560, %v3656
        %v3678 = vmul.f32 %v3562, %v3656
        %v3679 = vmul.f32 %v3564, %v3657
        %v3680 = vmul.f32 %v3566, %v3657
        %v3681 = vmul.f32 %v3568, %v3658
        %v3682 = vmul.f32 %v3570, %v3658
        %v3683 = vmul.f32 %v3572, %v3659
        %v3684 = vmul.f32 %v3574, %v3659
        %v3685 = vmul.f32 %v3576, %v3660
        %v3686 = vmul.f32 %v3578, %v3660
        %v3687 = vmul.f32 %v3580, %v3661
        %v3688 = vmul.f32 %v3582, %v3661
        %v3689 = vmul.f32 %v3584, %v3662
        %v3690 = vmul.f32 %v3586, %v3662
        %v3691 = vmul.f32 %v3588, %v3663
        %v3692 = vmul.f32 %v3590, %v3663
        %v3693 = vmul.f32 %v3592, %v3664
        %v3694 = vmul.f32 %v3594, %v3664
        %v3695 = vmul.f32 %v3596, %v3665
        %v3696 = vmul.f32 %v3598, %v3665
        %v3697 = vmul.f32 %v3600, %v3666
        %v3698 = vmul.f32 %v3602, %v3666
        %v3699 = vpack.c.bf16 %v3669, %v3667
        %v3700 = vpack.c.bf16 %v3670, %v3668
        %v3701 = vpack.c.bf16 %v3673, %v3671
        %v3702 = vpack.c.bf16 %v3674, %v3672
        %v3703 = vpack.c.bf16 %v3677, %v3675
        %v3704 = vpack.c.bf16 %v3678, %v3676
        %v3705 = vpack.c.bf16 %v3681, %v3679
        %v3706 = vpack.c.bf16 %v3682, %v3680
        %v3707 = vpack.c.bf16 %v3685, %v3683
        %v3708 = vpack.c.bf16 %v3686, %v3684
        %v3709 = vpack.c.bf16 %v3689, %v3687
        %v3710 = vpack.c.bf16 %v3690, %v3688
        %v3711 = vpack.c.bf16 %v3693, %v3691
        %v3712 = vpack.c.bf16 %v3694, %v3692
        %v3713 = vpack.c.bf16 %v3697, %v3695
        %v3714 = vpack.c.bf16 %v3698, %v3696
        %3715 = vrot.lane.b32.xlu0 %v3078, 64
        %v3716 = vpop.permute.xlu0 %3715
        %3717 = vrot.lane.b32.xlu0 %v3079, 64
        %v3718 = vpop.permute.xlu0 %3717
        %3719 = vrot.lane.b32.xlu0 %v3080, 64
        %v3720 = vpop.permute.xlu0 %3719
        %3721 = vrot.lane.b32.xlu0 %v3081, 64
        %v3722 = vpop.permute.xlu0 %3721
        %3723 = vrot.lane.b32.xlu0 %v3082, 64
        %v3724 = vpop.permute.xlu0 %3723
        %3725 = vrot.lane.b32.xlu0 %v3083, 64
        %v3726 = vpop.permute.xlu0 %3725
        %3727 = vrot.lane.b32.xlu0 %v3084, 64
        %v3728 = vpop.permute.xlu0 %3727
        %3729 = vrot.lane.b32.xlu0 %v3085, 64
        %v3730 = vpop.permute.xlu0 %3729
        %3731 = vrot.lane.b32.xlu0 %v3086, 64
        %v3732 = vpop.permute.xlu0 %3731
        %3733 = vrot.lane.b32.xlu0 %v3087, 64
        %v3734 = vpop.permute.xlu0 %3733
        %3735 = vrot.lane.b32.xlu0 %v3088, 64
        %v3736 = vpop.permute.xlu0 %3735
        %3737 = vrot.lane.b32.xlu0 %v3089, 64
        %v3738 = vpop.permute.xlu0 %3737
        %3739 = vrot.lane.b32.xlu0 %v3090, 64
        %v3740 = vpop.permute.xlu0 %3739
        %3741 = vrot.lane.b32.xlu0 %v3091, 64
        %v3742 = vpop.permute.xlu0 %3741
        %3743 = vrot.lane.b32.xlu0 %v3092, 64
        %v3744 = vpop.permute.xlu0 %3743
        %3745 = vrot.lane.b32.xlu0 %v3093, 64
        %v3746 = vpop.permute.xlu0 %3745
        %3763 = vmatpush.bf16.msra.mxu0 %v3730
        %3764 = vmatpush.bf16.msra.mxu0 %v3728
        %3765 = vmatpush.bf16.msra.mxu0 %v3726
        %3766 = vmatpush.bf16.msra.mxu0 %v3724
        %3767 = vmatpush.bf16.msra.mxu0 %v3722
        %3768 = vmatpush.bf16.msra.mxu0 %v3720
        %3769 = vmatpush.bf16.msra.mxu0 %v3718
        %3770 = vmatpush.bf16.msra.mxu0 %v3716
        %3771 = vmatmul.bf16.gmra.mxu0 %v3699
        %v3772 = vpop.f32.mrf.mxu0
        %v3773 = vadd.f32 0.0, %v3772
        %v3774 = vpop.f32.mrf.mxu0
        %v3775 = vadd.f32 0.0, %v3774
        %3776 = vmatmul.bf16.gmra.mxu0 %v3701
        %v3777 = vpop.f32.mrf.mxu0
        %v3778 = vadd.f32 0.0, %v3777
        %v3779 = vpop.f32.mrf.mxu0
        %v3780 = vadd.f32 0.0, %v3779
        %3781 = vmatmul.bf16.gmra.mxu0 %v3703
        %v3782 = vpop.f32.mrf.mxu0
        %v3783 = vadd.f32 0.0, %v3782
        %v3784 = vpop.f32.mrf.mxu0
        %v3785 = vadd.f32 0.0, %v3784
        %3786 = vmatmul.bf16.gmra.mxu0 %v3705
        %v3787 = vpop.f32.mrf.mxu0
        %v3788 = vadd.f32 0.0, %v3787
        %v3789 = vpop.f32.mrf.mxu0
        %v3790 = vadd.f32 0.0, %v3789
        %3791 = vmatmul.bf16.gmra.mxu0 %v3707
        %v3792 = vpop.f32.mrf.mxu0
        %v3793 = vadd.f32 0.0, %v3792
        %v3794 = vpop.f32.mrf.mxu0
        %v3795 = vadd.f32 0.0, %v3794
        %3796 = vmatmul.bf16.gmra.mxu0 %v3709
        %v3797 = vpop.f32.mrf.mxu0
        %v3798 = vadd.f32 0.0, %v3797
        %v3799 = vpop.f32.mrf.mxu0
        %v3800 = vadd.f32 0.0, %v3799
        %3801 = vmatmul.bf16.gmra.mxu0 %v3711
        %v3802 = vpop.f32.mrf.mxu0
        %v3803 = vadd.f32 0.0, %v3802
        %v3804 = vpop.f32.mrf.mxu0
        %v3805 = vadd.f32 0.0, %v3804
        %3806 = vmatmul.bf16.gmra.mxu0 %v3713
        %v3807 = vpop.f32.mrf.mxu0
        %v3808 = vadd.f32 0.0, %v3807
        %v3809 = vpop.f32.mrf.mxu0
        %v3810 = vadd.f32 0.0, %v3809
        %3811 = vdwg.mxu0
        %3812 = vmatpush.bf16.msra.mxu0 %v3746
        %3813 = vmatpush.bf16.msra.mxu0 %v3744
        %3814 = vmatpush.bf16.msra.mxu0 %v3742
        %3815 = vmatpush.bf16.msra.mxu0 %v3740
        %3816 = vmatpush.bf16.msra.mxu0 %v3738
        %3817 = vmatpush.bf16.msra.mxu0 %v3736
        %3818 = vmatpush.bf16.msra.mxu0 %v3734
        %3819 = vmatpush.bf16.msra.mxu0 %v3732
        %3820 = vmatmul.bf16.gmra.mxu0 %v3700
        %v3821 = vpop.f32.mrf.mxu0
        %v3822 = vadd.f32 %v3773, %v3821
        %v3823 = vpop.f32.mrf.mxu0
        %v3824 = vadd.f32 %v3775, %v3823
        %3825 = vmatmul.bf16.gmra.mxu0 %v3702
        %v3826 = vpop.f32.mrf.mxu0
        %v3827 = vadd.f32 %v3778, %v3826
        %v3828 = vpop.f32.mrf.mxu0
        %v3829 = vadd.f32 %v3780, %v3828
        %3830 = vmatmul.bf16.gmra.mxu0 %v3704
        %v3831 = vpop.f32.mrf.mxu0
        %v3832 = vadd.f32 %v3783, %v3831
        %v3833 = vpop.f32.mrf.mxu0
        %v3834 = vadd.f32 %v3785, %v3833
        %3835 = vmatmul.bf16.gmra.mxu0 %v3706
        %v3836 = vpop.f32.mrf.mxu0
        %v3837 = vadd.f32 %v3788, %v3836
        %v3838 = vpop.f32.mrf.mxu0
        %v3839 = vadd.f32 %v3790, %v3838
        %3840 = vmatmul.bf16.gmra.mxu0 %v3708
        %v3841 = vpop.f32.mrf.mxu0
        %v3842 = vadd.f32 %v3793, %v3841
        %v3843 = vpop.f32.mrf.mxu0
        %v3844 = vadd.f32 %v3795, %v3843
        %3845 = vmatmul.bf16.gmra.mxu0 %v3710
        %v3846 = vpop.f32.mrf.mxu0
        %v3847 = vadd.f32 %v3798, %v3846
        %v3848 = vpop.f32.mrf.mxu0
        %v3849 = vadd.f32 %v3800, %v3848
        %3850 = vmatmul.bf16.gmra.mxu0 %v3712
        %v3851 = vpop.f32.mrf.mxu0
        %v3852 = vadd.f32 %v3803, %v3851
        %v3853 = vpop.f32.mrf.mxu0
        %v3854 = vadd.f32 %v3805, %v3853
        %3855 = vmatmul.bf16.gmra.mxu0 %v3714
        %v3856 = vpop.f32.mrf.mxu0
        %v3857 = vadd.f32 %v3808, %v3856
        %v3858 = vpop.f32.mrf.mxu0
        %v3859 = vadd.f32 %v3810, %v3858
        %3860 = vdwg.mxu0
        %v3861 = vpack.c.bf16 %v3822, %v3822
        %v3862 = vpack.c.bf16 %v3824, %v3824
        %v3863 = vpack.c.bf16 %v3827, %v3827
        %v3864 = vpack.c.bf16 %v3829, %v3829
        %v3865 = vpack.c.bf16 %v3832, %v3832
        %v3866 = vpack.c.bf16 %v3834, %v3834
        %v3867 = vpack.c.bf16 %v3837, %v3837
        %v3868 = vpack.c.bf16 %v3839, %v3839
        %v3869 = vpack.c.bf16 %v3842, %v3842
        %v3870 = vpack.c.bf16 %v3844, %v3844
        %v3871 = vpack.c.bf16 %v3847, %v3847
        %v3872 = vpack.c.bf16 %v3849, %v3849
        %v3873 = vpack.c.bf16 %v3852, %v3852
        %v3874 = vpack.c.bf16 %v3854, %v3854
        %v3875 = vpack.c.bf16 %v3857, %v3857
        %v3876 = vpack.c.bf16 %v3859, %v3859
        %3893 = vrot.lane.b32.xlu0 %v3861, 64
        %v3894 = vpop.permute.xlu0 %3893
        %3895 = vrot.lane.b32.xlu0 %v3862, 64
        %v3896 = vpop.permute.xlu0 %3895
        %3897 = vrot.lane.b32.xlu0 %v3863, 64
        %v3898 = vpop.permute.xlu0 %3897
        %3899 = vrot.lane.b32.xlu0 %v3864, 64
        %v3900 = vpop.permute.xlu0 %3899
        %3901 = vrot.lane.b32.xlu0 %v3865, 64
        %v3902 = vpop.permute.xlu0 %3901
        %3903 = vrot.lane.b32.xlu0 %v3866, 64
        %v3904 = vpop.permute.xlu0 %3903
        %3905 = vrot.lane.b32.xlu0 %v3867, 64
        %v3906 = vpop.permute.xlu0 %3905
        %3907 = vrot.lane.b32.xlu0 %v3868, 64
        %v3908 = vpop.permute.xlu0 %3907
        %3909 = vrot.lane.b32.xlu0 %v3869, 64
        %v3910 = vpop.permute.xlu0 %3909
        %3911 = vrot.lane.b32.xlu0 %v3870, 64
        %v3912 = vpop.permute.xlu0 %3911
        %3913 = vrot.lane.b32.xlu0 %v3871, 64
        %v3914 = vpop.permute.xlu0 %3913
        %3915 = vrot.lane.b32.xlu0 %v3872, 64
        %v3916 = vpop.permute.xlu0 %3915
        %3917 = vrot.lane.b32.xlu0 %v3873, 64
        %v3918 = vpop.permute.xlu0 %3917
        %3919 = vrot.lane.b32.xlu0 %v3874, 64
        %v3920 = vpop.permute.xlu0 %3919
        %3921 = vrot.lane.b32.xlu0 %v3875, 64
        %v3922 = vpop.permute.xlu0 %3921
        %3923 = vrot.lane.b32.xlu0 %v3876, 64
        %v3924 = vpop.permute.xlu0 %3923
        %vm3941 = vcmask 1043968
        %3942 = vst.msk [vmem:[#allocation2] sm:$0xf] %vm3941, %v3894
        %3943 = vst.msk [vmem:[#allocation2 + $0x8] sm:$0xf] %vm3941, %v3896
        %3944 = vst.msk [vmem:[#allocation2 + $0x10] sm:$0xf] %vm3941, %v3898
        %3945 = vst.msk [vmem:[#allocation2 + $0x18] sm:$0xf] %vm3941, %v3900
        %3946 = vst.msk [vmem:[#allocation2 + $0x20] sm:$0xf] %vm3941, %v3902
        %3947 = vst.msk [vmem:[#allocation2 + $0x28] sm:$0xf] %vm3941, %v3904
        %3948 = vst.msk [vmem:[#allocation2 + $0x30] sm:$0xf] %vm3941, %v3906
        %3949 = vst.msk [vmem:[#allocation2 + $0x38] sm:$0xf] %vm3941, %v3908
        %3950 = vst.msk [vmem:[#allocation2 + $0x40] sm:$0xf] %vm3941, %v3910
        %3951 = vst.msk [vmem:[#allocation2 + $0x48] sm:$0xf] %vm3941, %v3912
        %3952 = vst.msk [vmem:[#allocation2 + $0x50] sm:$0xf] %vm3941, %v3914
        %3953 = vst.msk [vmem:[#allocation2 + $0x58] sm:$0xf] %vm3941, %v3916
        %3954 = vst.msk [vmem:[#allocation2 + $0x60] sm:$0xf] %vm3941, %v3918
        %3955 = vst.msk [vmem:[#allocation2 + $0x68] sm:$0xf] %vm3941, %v3920
        %3956 = vst.msk [vmem:[#allocation2 + $0x70] sm:$0xf] %vm3941, %v3922
        %3957 = vst.msk [vmem:[#allocation2 + $0x78] sm:$0xf] %vm3941, %v3924
        %v3958 = vunpack.c.h.b16 %v882
        %v3959 = vunpack.c.h.b16 %v883
        %v3960 = vunpack.c.h.b16 %v884
        %v3961 = vunpack.c.h.b16 %v885
        %v3962 = vunpack.c.h.b16 %v886
        %v3963 = vunpack.c.h.b16 %v887
        %v3964 = vunpack.c.h.b16 %v888
        %v3965 = vunpack.c.h.b16 %v889
        %v3966 = vunpack.c.h.b16 %v890
        %v3967 = vunpack.c.h.b16 %v891
        %v3968 = vunpack.c.h.b16 %v892
        %v3969 = vunpack.c.h.b16 %v893
        %v3970 = vunpack.c.h.b16 %v894
        %v3971 = vunpack.c.h.b16 %v895
        %v3972 = vunpack.c.h.b16 %v896
        %v3973 = vunpack.c.h.b16 %v897
        %v3974 = vpack.c.b16 %v3959, %v3958
        %v3975 = vpack.c.b16 %v3961, %v3960
        %v3976 = vpack.c.b16 %v3963, %v3962
        %v3977 = vpack.c.b16 %v3965, %v3964
        %v3978 = vpack.c.b16 %v3967, %v3966
        %v3979 = vpack.c.b16 %v3969, %v3968
        %v3980 = vpack.c.b16 %v3971, %v3970
        %v3981 = vpack.c.b16 %v3973, %v3972
        %v3982 = vunpack.c.h.b16 %v1646
        %v3983 = vunpack.c.h.b16 %v1647
        %v3984 = vunpack.c.h.b16 %v1648
        %v3985 = vunpack.c.h.b16 %v1649
        %v3986 = vunpack.c.h.b16 %v1650
        %v3987 = vunpack.c.h.b16 %v1651
        %v3988 = vunpack.c.h.b16 %v1652
        %v3989 = vunpack.c.h.b16 %v1653
        %v3990 = vunpack.c.h.b16 %v1654
        %v3991 = vunpack.c.h.b16 %v1655
        %v3992 = vunpack.c.h.b16 %v1656
        %v3993 = vunpack.c.h.b16 %v1657
        %v3994 = vunpack.c.h.b16 %v1658
        %v3995 = vunpack.c.h.b16 %v1659
        %v3996 = vunpack.c.h.b16 %v1660
        %v3997 = vunpack.c.h.b16 %v1661
        %v3998 = vunpack.c.h.b16 %v1662
        %v3999 = vunpack.c.h.b16 %v1663
        %v4000 = vunpack.c.h.b16 %v1664
        %v4001 = vunpack.c.h.b16 %v1665
        %v4002 = vunpack.c.h.b16 %v1666
        %v4003 = vunpack.c.h.b16 %v1667
        %v4004 = vunpack.c.h.b16 %v1668
        %v4005 = vunpack.c.h.b16 %v1669
        %v4006 = vunpack.c.h.b16 %v1670
        %v4007 = vunpack.c.h.b16 %v1671
        %v4008 = vunpack.c.h.b16 %v1672
        %v4009 = vunpack.c.h.b16 %v1673
        %v4010 = vunpack.c.h.b16 %v1674
        %v4011 = vunpack.c.h.b16 %v1675
        %v4012 = vunpack.c.h.b16 %v1676
        %v4013 = vunpack.c.h.b16 %v1677
        %v4014 = vpack.c.b16 %v3983, %v3982
        %v4015 = vpack.c.b16 %v3985, %v3984
        %v4016 = vpack.c.b16 %v3987, %v3986
        %v4017 = vpack.c.b16 %v3989, %v3988
        %v4018 = vpack.c.b16 %v3991, %v3990
        %v4019 = vpack.c.b16 %v3993, %v3992
        %v4020 = vpack.c.b16 %v3995, %v3994
        %v4021 = vpack.c.b16 %v3997, %v3996
        %v4022 = vpack.c.b16 %v3999, %v3998
        %v4023 = vpack.c.b16 %v4001, %v4000
        %v4024 = vpack.c.b16 %v4003, %v4002
        %v4025 = vpack.c.b16 %v4005, %v4004
        %v4026 = vpack.c.b16 %v4007, %v4006
        %v4027 = vpack.c.b16 %v4009, %v4008
        %v4028 = vpack.c.b16 %v4011, %v4010
        %v4029 = vpack.c.b16 %v4013, %v4012
        %v4031 = vsel %vm2587, %v3974, 0
        %v4034 = vsel %vm2587, %v3975, 0
        %v4037 = vsel %vm2587, %v3976, 0
        %v4040 = vsel %vm2587, %v3977, 0
        %v4043 = vsel %vm2587, %v3978, 0
        %v4046 = vsel %vm2587, %v3979, 0
        %v4049 = vsel %vm2587, %v3980, 0
        %v4052 = vsel %vm2587, %v3981, 0
        %v4055 = vsel %vm2587, %v4014, 0
        %v4058 = vsel %vm2587, %v4015, 0
        %v4061 = vsel %vm2587, %v4016, 0
        %v4064 = vsel %vm2587, %v4017, 0
        %v4067 = vsel %vm2587, %v4018, 0
        %v4070 = vsel %vm2587, %v4019, 0
        %v4073 = vsel %vm2587, %v4020, 0
        %v4076 = vsel %vm2587, %v4021, 0
        %v4079 = vsel %vm2587, %v4022, 0
        %v4082 = vsel %vm2587, %v4023, 0
        %v4085 = vsel %vm2587, %v4024, 0
        %v4088 = vsel %vm2587, %v4025, 0
        %v4091 = vsel %vm2587, %v4026, 0
        %v4094 = vsel %vm2587, %v4027, 0
        %v4097 = vsel %vm2587, %v4028, 0
        %v4100 = vsel %vm2587, %v4029, 0
        %4102 = vmatpush.bf16.xpose.msra.mxu0 %v4076
        %4103 = vmatpush.bf16.xpose.msra.mxu0 %v4073
        %4104 = vmatpush.bf16.xpose.msra.mxu0 %v4070
        %4105 = vmatpush.bf16.xpose.msra.mxu0 %v4067
        %4106 = vmatpush.bf16.xpose.msra.mxu0 %v4064
        %4107 = vmatpush.bf16.xpose.msra.mxu0 %v4061
        %4108 = vmatpush.bf16.xpose.msra.mxu0 %v4058
        %4109 = vmatpush.bf16.xpose.msra.mxu0 %v4055
        %4110 = vmatmul.bf16.gmra.mxu0 %v4031
        %v4111 = vpop.f32.mrf.mxu0
        %v4112 = vadd.f32 %v2465, %v4111
        %v4113 = vpop.f32.mrf.mxu0
        %v4114 = vadd.f32 %v2465, %v4113
        %4115 = vmatmul.bf16.gmra.mxu0 %v4034
        %v4116 = vpop.f32.mrf.mxu0
        %v4117 = vadd.f32 %v2465, %v4116
        %v4118 = vpop.f32.mrf.mxu0
        %v4119 = vadd.f32 %v2465, %v4118
        %4120 = vmatmul.bf16.gmra.mxu0 %v4037
        %v4121 = vpop.f32.mrf.mxu0
        %v4122 = vadd.f32 %v2465, %v4121
        %v4123 = vpop.f32.mrf.mxu0
        %v4124 = vadd.f32 %v2465, %v4123
        %4125 = vmatmul.bf16.gmra.mxu0 %v4040
        %v4126 = vpop.f32.mrf.mxu0
        %v4127 = vadd.f32 %v2465, %v4126
        %v4128 = vpop.f32.mrf.mxu0
        %v4129 = vadd.f32 %v2465, %v4128
        %4130 = vmatmul.bf16.gmra.mxu0 %v4043
        %v4131 = vpop.f32.mrf.mxu0
        %v4132 = vadd.f32 %v2465, %v4131
        %v4133 = vpop.f32.mrf.mxu0
        %v4134 = vadd.f32 %v2465, %v4133
        %4135 = vmatmul.bf16.gmra.mxu0 %v4046
        %v4136 = vpop.f32.mrf.mxu0
        %v4137 = vadd.f32 %v2465, %v4136
        %v4138 = vpop.f32.mrf.mxu0
        %v4139 = vadd.f32 %v2465, %v4138
        %4140 = vmatmul.bf16.gmra.mxu0 %v4049
        %v4141 = vpop.f32.mrf.mxu0
        %v4142 = vadd.f32 %v2465, %v4141
        %v4143 = vpop.f32.mrf.mxu0
        %v4144 = vadd.f32 %v2465, %v4143
        %4145 = vmatmul.bf16.gmra.mxu0 %v4052
        %v4146 = vpop.f32.mrf.mxu0
        %v4147 = vadd.f32 %v2465, %v4146
        %v4148 = vpop.f32.mrf.mxu0
        %v4149 = vadd.f32 %v2465, %v4148
        %4150 = vdwg.mxu0
        %4151 = vmatpush.bf16.xpose.msra.mxu0 %v4100
        %4152 = vmatpush.bf16.xpose.msra.mxu0 %v4097
        %4153 = vmatpush.bf16.xpose.msra.mxu0 %v4094
        %4154 = vmatpush.bf16.xpose.msra.mxu0 %v4091
        %4155 = vmatpush.bf16.xpose.msra.mxu0 %v4088
        %4156 = vmatpush.bf16.xpose.msra.mxu0 %v4085
        %4157 = vmatpush.bf16.xpose.msra.mxu0 %v4082
        %4158 = vmatpush.bf16.xpose.msra.mxu0 %v4079
        %4159 = vmatmul.bf16.gmra.mxu0 %v4031
        %v4160 = vpop.f32.mrf.mxu0
        %v4161 = vadd.f32 %v2466, %v4160
        %v4162 = vpop.f32.mrf.mxu0
        %v4163 = vadd.f32 %v2466, %v4162
        %4164 = vmatmul.bf16.gmra.mxu0 %v4034
        %v4165 = vpop.f32.mrf.mxu0
        %v4166 = vadd.f32 %v2466, %v4165
        %v4167 = vpop.f32.mrf.mxu0
        %v4168 = vadd.f32 %v2466, %v4167
        %4169 = vmatmul.bf16.gmra.mxu0 %v4037
        %v4170 = vpop.f32.mrf.mxu0
        %v4171 = vadd.f32 %v2466, %v4170
        %v4172 = vpop.f32.mrf.mxu0
        %v4173 = vadd.f32 %v2466, %v4172
        %4174 = vmatmul.bf16.gmra.mxu0 %v4040
        %v4175 = vpop.f32.mrf.mxu0
        %v4176 = vadd.f32 %v2466, %v4175
        %v4177 = vpop.f32.mrf.mxu0
        %v4178 = vadd.f32 %v2466, %v4177
        %4179 = vmatmul.bf16.gmra.mxu0 %v4043
        %v4180 = vpop.f32.mrf.mxu0
        %v4181 = vadd.f32 %v2466, %v4180
        %v4182 = vpop.f32.mrf.mxu0
        %v4183 = vadd.f32 %v2466, %v4182
        %4184 = vmatmul.bf16.gmra.mxu0 %v4046
        %v4185 = vpop.f32.mrf.mxu0
        %v4186 = vadd.f32 %v2466, %v4185
        %v4187 = vpop.f32.mrf.mxu0
        %v4188 = vadd.f32 %v2466, %v4187
        %4189 = vmatmul.bf16.gmra.mxu0 %v4049
        %v4190 = vpop.f32.mrf.mxu0
        %v4191 = vadd.f32 %v2466, %v4190
        %v4192 = vpop.f32.mrf.mxu0
        %v4193 = vadd.f32 %v2466, %v4192
        %4194 = vmatmul.bf16.gmra.mxu0 %v4052
        %v4195 = vpop.f32.mrf.mxu0
        %v4196 = vadd.f32 %v2466, %v4195
        %v4197 = vpop.f32.mrf.mxu0
        %v4198 = vadd.f32 %v2466, %v4197
        %4199 = vdwg.mxu0
        %v4200 = vmax.f32 %v4112, %v4161
        %4201 = vmax.xlane.f32.xlu0 %v4200
        %v4202 = vpop.xlane.xlu0 %4201
        %v4203 = vmax.f32 %v4114, %v4163
        %4204 = vmax.xlane.f32.xlu0 %v4203
        %v4205 = vpop.xlane.xlu0 %4204
        %v4206 = vmax.f32 %v4117, %v4166
        %4207 = vmax.xlane.f32.xlu0 %v4206
        %v4208 = vpop.xlane.xlu0 %4207
        %v4209 = vmax.f32 %v4119, %v4168
        %4210 = vmax.xlane.f32.xlu0 %v4209
        %v4211 = vpop.xlane.xlu0 %4210
        %v4212 = vmax.f32 %v4122, %v4171
        %4213 = vmax.xlane.f32.xlu0 %v4212
        %v4214 = vpop.xlane.xlu0 %4213
        %v4215 = vmax.f32 %v4124, %v4173
        %4216 = vmax.xlane.f32.xlu0 %v4215
        %v4217 = vpop.xlane.xlu0 %4216
        %v4218 = vmax.f32 %v4127, %v4176
        %4219 = vmax.xlane.f32.xlu0 %v4218
        %v4220 = vpop.xlane.xlu0 %4219
        %v4221 = vmax.f32 %v4129, %v4178
        %4222 = vmax.xlane.f32.xlu0 %v4221
        %v4223 = vpop.xlane.xlu0 %4222
        %v4224 = vmax.f32 %v4132, %v4181
        %4225 = vmax.xlane.f32.xlu0 %v4224
        %v4226 = vpop.xlane.xlu0 %4225
        %v4227 = vmax.f32 %v4134, %v4183
        %4228 = vmax.xlane.f32.xlu0 %v4227
        %v4229 = vpop.xlane.xlu0 %4228
        %v4230 = vmax.f32 %v4137, %v4186
        %4231 = vmax.xlane.f32.xlu0 %v4230
        %v4232 = vpop.xlane.xlu0 %4231
        %v4233 = vmax.f32 %v4139, %v4188
        %4234 = vmax.xlane.f32.xlu0 %v4233
        %v4235 = vpop.xlane.xlu0 %4234
        %v4236 = vmax.f32 %v4142, %v4191
        %4237 = vmax.xlane.f32.xlu0 %v4236
        %v4238 = vpop.xlane.xlu0 %4237
        %v4239 = vmax.f32 %v4144, %v4193
        %4240 = vmax.xlane.f32.xlu0 %v4239
        %v4241 = vpop.xlane.xlu0 %4240
        %v4242 = vmax.f32 %v4147, %v4196
        %4243 = vmax.xlane.f32.xlu0 %v4242
        %v4244 = vpop.xlane.xlu0 %4243
        %v4245 = vmax.f32 %v4149, %v4198
        %4246 = vmax.xlane.f32.xlu0 %v4245
        %v4247 = vpop.xlane.xlu0 %4246
        %v4248 = vsub.f32 %v4112, %v4202
        %v4249 = vsub.f32 %v4161, %v4202
        %v4250 = vsub.f32 %v4114, %v4205
        %v4251 = vsub.f32 %v4163, %v4205
        %v4252 = vsub.f32 %v4117, %v4208
        %v4253 = vsub.f32 %v4166, %v4208
        %v4254 = vsub.f32 %v4119, %v4211
        %v4255 = vsub.f32 %v4168, %v4211
        %v4256 = vsub.f32 %v4122, %v4214
        %v4257 = vsub.f32 %v4171, %v4214
        %v4258 = vsub.f32 %v4124, %v4217
        %v4259 = vsub.f32 %v4173, %v4217
        %v4260 = vsub.f32 %v4127, %v4220
        %v4261 = vsub.f32 %v4176, %v4220
        %v4262 = vsub.f32 %v4129, %v4223
        %v4263 = vsub.f32 %v4178, %v4223
        %v4264 = vsub.f32 %v4132, %v4226
        %v4265 = vsub.f32 %v4181, %v4226
        %v4266 = vsub.f32 %v4134, %v4229
        %v4267 = vsub.f32 %v4183, %v4229
        %v4268 = vsub.f32 %v4137, %v4232
        %v4269 = vsub.f32 %v4186, %v4232
        %v4270 = vsub.f32 %v4139, %v4235
        %v4271 = vsub.f32 %v4188, %v4235
        %v4272 = vsub.f32 %v4142, %v4238
        %v4273 = vsub.f32 %v4191, %v4238
        %v4274 = vsub.f32 %v4144, %v4241
        %v4275 = vsub.f32 %v4193, %v4241
        %v4276 = vsub.f32 %v4147, %v4244
        %v4277 = vsub.f32 %v4196, %v4244
        %v4278 = vsub.f32 %v4149, %v4247
        %v4279 = vsub.f32 %v4198, %v4247
        %v4280 = vmul.f32 %v4248, 1.442695
        %v4281 = vpow.pop %v4280
        %v4282 = vmul.f32 %v4249, 1.442695
        %v4283 = vpow.pop %v4282
        %v4284 = vmul.f32 %v4250, 1.442695
        %v4285 = vpow.pop %v4284
        %v4286 = vmul.f32 %v4251, 1.442695
        %v4287 = vpow.pop %v4286
        %v4288 = vmul.f32 %v4252, 1.442695
        %v4289 = vpow.pop %v4288
        %v4290 = vmul.f32 %v4253, 1.442695
        %v4291 = vpow.pop %v4290
        %v4292 = vmul.f32 %v4254, 1.442695
        %v4293 = vpow.pop %v4292
        %v4294 = vmul.f32 %v4255, 1.442695
        %v4295 = vpow.pop %v4294
        %v4296 = vmul.f32 %v4256, 1.442695
        %v4297 = vpow.pop %v4296
        %v4298 = vmul.f32 %v4257, 1.442695
        %v4299 = vpow.pop %v4298
        %v4300 = vmul.f32 %v4258, 1.442695
        %v4301 = vpow.pop %v4300
        %v4302 = vmul.f32 %v4259, 1.442695
        %v4303 = vpow.pop %v4302
        %v4304 = vmul.f32 %v4260, 1.442695
        %v4305 = vpow.pop %v4304
        %v4306 = vmul.f32 %v4261, 1.442695
        %v4307 = vpow.pop %v4306
        %v4308 = vmul.f32 %v4262, 1.442695
        %v4309 = vpow.pop %v4308
        %v4310 = vmul.f32 %v4263, 1.442695
        %v4311 = vpow.pop %v4310
        %v4312 = vmul.f32 %v4264, 1.442695
        %v4313 = vpow.pop %v4312
        %v4314 = vmul.f32 %v4265, 1.442695
        %v4315 = vpow.pop %v4314
        %v4316 = vmul.f32 %v4266, 1.442695
        %v4317 = vpow.pop %v4316
        %v4318 = vmul.f32 %v4267, 1.442695
        %v4319 = vpow.pop %v4318
        %v4320 = vmul.f32 %v4268, 1.442695
        %v4321 = vpow.pop %v4320
        %v4322 = vmul.f32 %v4269, 1.442695
        %v4323 = vpow.pop %v4322
        %v4324 = vmul.f32 %v4270, 1.442695
        %v4325 = vpow.pop %v4324
        %v4326 = vmul.f32 %v4271, 1.442695
        %v4327 = vpow.pop %v4326
        %v4328 = vmul.f32 %v4272, 1.442695
        %v4329 = vpow.pop %v4328
        %v4330 = vmul.f32 %v4273, 1.442695
        %v4331 = vpow.pop %v4330
        %v4332 = vmul.f32 %v4274, 1.442695
        %v4333 = vpow.pop %v4332
        %v4334 = vmul.f32 %v4275, 1.442695
        %v4335 = vpow.pop %v4334
        %v4336 = vmul.f32 %v4276, 1.442695
        %v4337 = vpow.pop %v4336
        %v4338 = vmul.f32 %v4277, 1.442695
        %v4339 = vpow.pop %v4338
        %v4340 = vmul.f32 %v4278, 1.442695
        %v4341 = vpow.pop %v4340
        %v4342 = vmul.f32 %v4279, 1.442695
        %v4343 = vpow.pop %v4342
        %v4344 = vadd.f32 %v4281, %v4283
        %4345 = vadd.xlane.f32.xlu0 %v4344
        %v4346 = vpop.xlane.xlu0 %4345
        %v4347 = vadd.f32 %v4285, %v4287
        %4348 = vadd.xlane.f32.xlu0 %v4347
        %v4349 = vpop.xlane.xlu0 %4348
        %v4350 = vadd.f32 %v4289, %v4291
        %4351 = vadd.xlane.f32.xlu0 %v4350
        %v4352 = vpop.xlane.xlu0 %4351
        %v4353 = vadd.f32 %v4293, %v4295
        %4354 = vadd.xlane.f32.xlu0 %v4353
        %v4355 = vpop.xlane.xlu0 %4354
        %v4356 = vadd.f32 %v4297, %v4299
        %4357 = vadd.xlane.f32.xlu0 %v4356
        %v4358 = vpop.xlane.xlu0 %4357
        %v4359 = vadd.f32 %v4301, %v4303
        %4360 = vadd.xlane.f32.xlu0 %v4359
        %v4361 = vpop.xlane.xlu0 %4360
        %v4362 = vadd.f32 %v4305, %v4307
        %4363 = vadd.xlane.f32.xlu0 %v4362
        %v4364 = vpop.xlane.xlu0 %4363
        %v4365 = vadd.f32 %v4309, %v4311
        %4366 = vadd.xlane.f32.xlu0 %v4365
        %v4367 = vpop.xlane.xlu0 %4366
        %v4368 = vadd.f32 %v4313, %v4315
        %4369 = vadd.xlane.f32.xlu0 %v4368
        %v4370 = vpop.xlane.xlu0 %4369
        %v4371 = vadd.f32 %v4317, %v4319
        %4372 = vadd.xlane.f32.xlu0 %v4371
        %v4373 = vpop.xlane.xlu0 %4372
        %v4374 = vadd.f32 %v4321, %v4323
        %4375 = vadd.xlane.f32.xlu0 %v4374
        %v4376 = vpop.xlane.xlu0 %4375
        %v4377 = vadd.f32 %v4325, %v4327
        %4378 = vadd.xlane.f32.xlu0 %v4377
        %v4379 = vpop.xlane.xlu0 %4378
        %v4380 = vadd.f32 %v4329, %v4331
        %4381 = vadd.xlane.f32.xlu0 %v4380
        %v4382 = vpop.xlane.xlu0 %4381
        %v4383 = vadd.f32 %v4333, %v4335
        %4384 = vadd.xlane.f32.xlu0 %v4383
        %v4385 = vpop.xlane.xlu0 %4384
        %v4386 = vadd.f32 %v4337, %v4339
        %4387 = vadd.xlane.f32.xlu0 %v4386
        %v4388 = vpop.xlane.xlu0 %4387
        %v4389 = vadd.f32 %v4341, %v4343
        %4390 = vadd.xlane.f32.xlu0 %v4389
        %v4391 = vpop.xlane.xlu0 %4390
        %v4392 = vrcp.pop %v4346
        %v4393 = vrcp.pop %v4349
        %v4394 = vrcp.pop %v4352
        %v4395 = vrcp.pop %v4355
        %v4396 = vrcp.pop %v4358
        %v4397 = vrcp.pop %v4361
        %v4398 = vrcp.pop %v4364
        %v4399 = vrcp.pop %v4367
        %v4400 = vrcp.pop %v4370
        %v4401 = vrcp.pop %v4373
        %v4402 = vrcp.pop %v4376
        %v4403 = vrcp.pop %v4379
        %v4404 = vrcp.pop %v4382
        %v4405 = vrcp.pop %v4385
        %v4406 = vrcp.pop %v4388
        %v4407 = vrcp.pop %v4391
        %v4408 = vmul.f32 %v4281, %v4392
        %v4409 = vmul.f32 %v4283, %v4392
        %v4410 = vmul.f32 %v4285, %v4393
        %v4411 = vmul.f32 %v4287, %v4393
        %v4412 = vmul.f32 %v4289, %v4394
        %v4413 = vmul.f32 %v4291, %v4394
        %v4414 = vmul.f32 %v4293, %v4395
        %v4415 = vmul.f32 %v4295, %v4395
        %v4416 = vmul.f32 %v4297, %v4396
        %v4417 = vmul.f32 %v4299, %v4396
        %v4418 = vmul.f32 %v4301, %v4397
        %v4419 = vmul.f32 %v4303, %v4397
        %v4420 = vmul.f32 %v4305, %v4398
        %v4421 = vmul.f32 %v4307, %v4398
        %v4422 = vmul.f32 %v4309, %v4399
        %v4423 = vmul.f32 %v4311, %v4399
        %v4424 = vmul.f32 %v4313, %v4400
        %v4425 = vmul.f32 %v4315, %v4400
        %v4426 = vmul.f32 %v4317, %v4401
        %v4427 = vmul.f32 %v4319, %v4401
        %v4428 = vmul.f32 %v4321, %v4402
        %v4429 = vmul.f32 %v4323, %v4402
        %v4430 = vmul.f32 %v4325, %v4403
        %v4431 = vmul.f32 %v4327, %v4403
        %v4432 = vmul.f32 %v4329, %v4404
        %v4433 = vmul.f32 %v4331, %v4404
        %v4434 = vmul.f32 %v4333, %v4405
        %v4435 = vmul.f32 %v4335, %v4405
        %v4436 = vmul.f32 %v4337, %v4406
        %v4437 = vmul.f32 %v4339, %v4406
        %v4438 = vmul.f32 %v4341, %v4407
        %v4439 = vmul.f32 %v4343, %v4407
        %v4440 = vpack.c.bf16 %v4410, %v4408
        %v4441 = vpack.c.bf16 %v4411, %v4409
        %v4442 = vpack.c.bf16 %v4414, %v4412
        %v4443 = vpack.c.bf16 %v4415, %v4413
        %v4444 = vpack.c.bf16 %v4418, %v4416
        %v4445 = vpack.c.bf16 %v4419, %v4417
        %v4446 = vpack.c.bf16 %v4422, %v4420
        %v4447 = vpack.c.bf16 %v4423, %v4421
        %v4448 = vpack.c.bf16 %v4426, %v4424
        %v4449 = vpack.c.bf16 %v4427, %v4425
        %v4450 = vpack.c.bf16 %v4430, %v4428
        %v4451 = vpack.c.bf16 %v4431, %v4429
        %v4452 = vpack.c.bf16 %v4434, %v4432
        %v4453 = vpack.c.bf16 %v4435, %v4433
        %v4454 = vpack.c.bf16 %v4438, %v4436
        %v4455 = vpack.c.bf16 %v4439, %v4437
        %v4456 = vunpack.c.h.b16 %v2426
        %v4457 = vunpack.c.h.b16 %v2427
        %v4458 = vunpack.c.h.b16 %v2428
        %v4459 = vunpack.c.h.b16 %v2429
        %v4460 = vunpack.c.h.b16 %v2430
        %v4461 = vunpack.c.h.b16 %v2431
        %v4462 = vunpack.c.h.b16 %v2432
        %v4463 = vunpack.c.h.b16 %v2433
        %v4464 = vunpack.c.h.b16 %v2434
        %v4465 = vunpack.c.h.b16 %v2435
        %v4466 = vunpack.c.h.b16 %v2436
        %v4467 = vunpack.c.h.b16 %v2437
        %v4468 = vunpack.c.h.b16 %v2438
        %v4469 = vunpack.c.h.b16 %v2439
        %v4470 = vunpack.c.h.b16 %v2440
        %v4471 = vunpack.c.h.b16 %v2441
        %v4472 = vunpack.c.h.b16 %v2442
        %v4473 = vunpack.c.h.b16 %v2443
        %v4474 = vunpack.c.h.b16 %v2444
        %v4475 = vunpack.c.h.b16 %v2445
        %v4476 = vunpack.c.h.b16 %v2446
        %v4477 = vunpack.c.h.b16 %v2447
        %v4478 = vunpack.c.h.b16 %v2448
        %v4479 = vunpack.c.h.b16 %v2449
        %v4480 = vunpack.c.h.b16 %v2450
        %v4481 = vunpack.c.h.b16 %v2451
        %v4482 = vunpack.c.h.b16 %v2452
        %v4483 = vunpack.c.h.b16 %v2453
        %v4484 = vunpack.c.h.b16 %v2454
        %v4485 = vunpack.c.h.b16 %v2455
        %v4486 = vunpack.c.h.b16 %v2456
        %v4487 = vunpack.c.h.b16 %v2457
        %v4488 = vpack.c.b16 %v4457, %v4456
        %v4489 = vpack.c.b16 %v4459, %v4458
        %v4490 = vpack.c.b16 %v4461, %v4460
        %v4491 = vpack.c.b16 %v4463, %v4462
        %v4492 = vpack.c.b16 %v4465, %v4464
        %v4493 = vpack.c.b16 %v4467, %v4466
        %v4494 = vpack.c.b16 %v4469, %v4468
        %v4495 = vpack.c.b16 %v4471, %v4470
        %v4496 = vpack.c.b16 %v4473, %v4472
        %v4497 = vpack.c.b16 %v4475, %v4474
        %v4498 = vpack.c.b16 %v4477, %v4476
        %v4499 = vpack.c.b16 %v4479, %v4478
        %v4500 = vpack.c.b16 %v4481, %v4480
        %v4501 = vpack.c.b16 %v4483, %v4482
        %v4502 = vpack.c.b16 %v4485, %v4484
        %v4503 = vpack.c.b16 %v4487, %v4486
        %4520 = vmatpush.bf16.msra.mxu0 %v4495
        %4521 = vmatpush.bf16.msra.mxu0 %v4494
        %4522 = vmatpush.bf16.msra.mxu0 %v4493
        %4523 = vmatpush.bf16.msra.mxu0 %v4492
        %4524 = vmatpush.bf16.msra.mxu0 %v4491
        %4525 = vmatpush.bf16.msra.mxu0 %v4490
        %4526 = vmatpush.bf16.msra.mxu0 %v4489
        %4527 = vmatpush.bf16.msra.mxu0 %v4488
        %4528 = vmatmul.bf16.gmra.mxu0 %v4440
        %v4529 = vpop.f32.mrf.mxu0
        %v4530 = vadd.f32 0.0, %v4529
        %v4531 = vpop.f32.mrf.mxu0
        %v4532 = vadd.f32 0.0, %v4531
        %4533 = vmatmul.bf16.gmra.mxu0 %v4442
        %v4534 = vpop.f32.mrf.mxu0
        %v4535 = vadd.f32 0.0, %v4534
        %v4536 = vpop.f32.mrf.mxu0
        %v4537 = vadd.f32 0.0, %v4536
        %4538 = vmatmul.bf16.gmra.mxu0 %v4444
        %v4539 = vpop.f32.mrf.mxu0
        %v4540 = vadd.f32 0.0, %v4539
        %v4541 = vpop.f32.mrf.mxu0
        %v4542 = vadd.f32 0.0, %v4541
        %4543 = vmatmul.bf16.gmra.mxu0 %v4446
        %v4544 = vpop.f32.mrf.mxu0
        %v4545 = vadd.f32 0.0, %v4544
        %v4546 = vpop.f32.mrf.mxu0
        %v4547 = vadd.f32 0.0, %v4546
        %4548 = vmatmul.bf16.gmra.mxu0 %v4448
        %v4549 = vpop.f32.mrf.mxu0
        %v4550 = vadd.f32 0.0, %v4549
        %v4551 = vpop.f32.mrf.mxu0
        %v4552 = vadd.f32 0.0, %v4551
        %4553 = vmatmul.bf16.gmra.mxu0 %v4450
        %v4554 = vpop.f32.mrf.mxu0
        %v4555 = vadd.f32 0.0, %v4554
        %v4556 = vpop.f32.mrf.mxu0
        %v4557 = vadd.f32 0.0, %v4556
        %4558 = vmatmul.bf16.gmra.mxu0 %v4452
        %v4559 = vpop.f32.mrf.mxu0
        %v4560 = vadd.f32 0.0, %v4559
        %v4561 = vpop.f32.mrf.mxu0
        %v4562 = vadd.f32 0.0, %v4561
        %4563 = vmatmul.bf16.gmra.mxu0 %v4454
        %v4564 = vpop.f32.mrf.mxu0
        %v4565 = vadd.f32 0.0, %v4564
        %v4566 = vpop.f32.mrf.mxu0
        %v4567 = vadd.f32 0.0, %v4566
        %4568 = vdwg.mxu0
        %4569 = vmatpush.bf16.msra.mxu0 %v4503
        %4570 = vmatpush.bf16.msra.mxu0 %v4502
        %4571 = vmatpush.bf16.msra.mxu0 %v4501
        %4572 = vmatpush.bf16.msra.mxu0 %v4500
        %4573 = vmatpush.bf16.msra.mxu0 %v4499
        %4574 = vmatpush.bf16.msra.mxu0 %v4498
        %4575 = vmatpush.bf16.msra.mxu0 %v4497
        %4576 = vmatpush.bf16.msra.mxu0 %v4496
        %4577 = vmatmul.bf16.gmra.mxu0 %v4441
        %v4578 = vpop.f32.mrf.mxu0
        %v4579 = vadd.f32 %v4530, %v4578
        %v4580 = vpop.f32.mrf.mxu0
        %v4581 = vadd.f32 %v4532, %v4580
        %4582 = vmatmul.bf16.gmra.mxu0 %v4443
        %v4583 = vpop.f32.mrf.mxu0
        %v4584 = vadd.f32 %v4535, %v4583
        %v4585 = vpop.f32.mrf.mxu0
        %v4586 = vadd.f32 %v4537, %v4585
        %4587 = vmatmul.bf16.gmra.mxu0 %v4445
        %v4588 = vpop.f32.mrf.mxu0
        %v4589 = vadd.f32 %v4540, %v4588
        %v4590 = vpop.f32.mrf.mxu0
        %v4591 = vadd.f32 %v4542, %v4590
        %4592 = vmatmul.bf16.gmra.mxu0 %v4447
        %v4593 = vpop.f32.mrf.mxu0
        %v4594 = vadd.f32 %v4545, %v4593
        %v4595 = vpop.f32.mrf.mxu0
        %v4596 = vadd.f32 %v4547, %v4595
        %4597 = vmatmul.bf16.gmra.mxu0 %v4449
        %v4598 = vpop.f32.mrf.mxu0
        %v4599 = vadd.f32 %v4550, %v4598
        %v4600 = vpop.f32.mrf.mxu0
        %v4601 = vadd.f32 %v4552, %v4600
        %4602 = vmatmul.bf16.gmra.mxu0 %v4451
        %v4603 = vpop.f32.mrf.mxu0
        %v4604 = vadd.f32 %v4555, %v4603
        %v4605 = vpop.f32.mrf.mxu0
        %v4606 = vadd.f32 %v4557, %v4605
        %4607 = vmatmul.bf16.gmra.mxu0 %v4453
        %v4608 = vpop.f32.mrf.mxu0
        %v4609 = vadd.f32 %v4560, %v4608
        %v4610 = vpop.f32.mrf.mxu0
        %v4611 = vadd.f32 %v4562, %v4610
        %4612 = vmatmul.bf16.gmra.mxu0 %v4455
        %v4613 = vpop.f32.mrf.mxu0
        %v4614 = vadd.f32 %v4565, %v4613
        %v4615 = vpop.f32.mrf.mxu0
        %v4616 = vadd.f32 %v4567, %v4615
        %4617 = vdwg.mxu0
        %v4618 = vpack.c.bf16 %v4579, %v4579
        %v4619 = vpack.c.bf16 %v4581, %v4581
        %v4620 = vpack.c.bf16 %v4584, %v4584
        %v4621 = vpack.c.bf16 %v4586, %v4586
        %v4622 = vpack.c.bf16 %v4589, %v4589
        %v4623 = vpack.c.bf16 %v4591, %v4591
        %v4624 = vpack.c.bf16 %v4594, %v4594
        %v4625 = vpack.c.bf16 %v4596, %v4596
        %v4626 = vpack.c.bf16 %v4599, %v4599
        %v4627 = vpack.c.bf16 %v4601, %v4601
        %v4628 = vpack.c.bf16 %v4604, %v4604
        %v4629 = vpack.c.bf16 %v4606, %v4606
        %v4630 = vpack.c.bf16 %v4609, %v4609
        %v4631 = vpack.c.bf16 %v4611, %v4611
        %v4632 = vpack.c.bf16 %v4614, %v4614
        %v4633 = vpack.c.bf16 %v4616, %v4616
        %4634 = vst.msk [vmem:[#allocation2 + $0x4] sm:$0xf] %vm3224, %v4618
        %4635 = vst.msk [vmem:[#allocation2 + $0xc] sm:$0xf] %vm3224, %v4619
        %4636 = vst.msk [vmem:[#allocation2 + $0x14] sm:$0xf] %vm3224, %v4620
        %4637 = vst.msk [vmem:[#allocation2 + $0x1c] sm:$0xf] %vm3224, %v4621
        %4638 = vst.msk [vmem:[#allocation2 + $0x24] sm:$0xf] %vm3224, %v4622
        %4639 = vst.msk [vmem:[#allocation2 + $0x2c] sm:$0xf] %vm3224, %v4623
        %4640 = vst.msk [vmem:[#allocation2 + $0x34] sm:$0xf] %vm3224, %v4624
        %4641 = vst.msk [vmem:[#allocation2 + $0x3c] sm:$0xf] %vm3224, %v4625
        %4642 = vst.msk [vmem:[#allocation2 + $0x44] sm:$0xf] %vm3224, %v4626
        %4643 = vst.msk [vmem:[#allocation2 + $0x4c] sm:$0xf] %vm3224, %v4627
        %4644 = vst.msk [vmem:[#allocation2 + $0x54] sm:$0xf] %vm3224, %v4628
        %4645 = vst.msk [vmem:[#allocation2 + $0x5c] sm:$0xf] %vm3224, %v4629
        %4646 = vst.msk [vmem:[#allocation2 + $0x64] sm:$0xf] %vm3224, %v4630
        %4647 = vst.msk [vmem:[#allocation2 + $0x6c] sm:$0xf] %vm3224, %v4631
        %4648 = vst.msk [vmem:[#allocation2 + $0x74] sm:$0xf] %vm3224, %v4632
        %4649 = vst.msk [vmem:[#allocation2 + $0x7c] sm:$0xf] %vm3224, %v4633
        %4650 = vrot.lane.b32.xlu0 %v3974, 64
        %v4651 = vpop.permute.xlu0 %4650
        %4652 = vrot.lane.b32.xlu0 %v3975, 64
        %v4653 = vpop.permute.xlu0 %4652
        %4654 = vrot.lane.b32.xlu0 %v3976, 64
        %v4655 = vpop.permute.xlu0 %4654
        %4656 = vrot.lane.b32.xlu0 %v3977, 64
        %v4657 = vpop.permute.xlu0 %4656
        %4658 = vrot.lane.b32.xlu0 %v3978, 64
        %v4659 = vpop.permute.xlu0 %4658
        %4660 = vrot.lane.b32.xlu0 %v3979, 64
        %v4661 = vpop.permute.xlu0 %4660
        %4662 = vrot.lane.b32.xlu0 %v3980, 64
        %v4663 = vpop.permute.xlu0 %4662
        %4664 = vrot.lane.b32.xlu0 %v3981, 64
        %v4665 = vpop.permute.xlu0 %4664
        %4666 = vrot.lane.b32.xlu0 %v4014, 64
        %v4667 = vpop.permute.xlu0 %4666
        %4668 = vrot.lane.b32.xlu0 %v4015, 64
        %v4669 = vpop.permute.xlu0 %4668
        %4670 = vrot.lane.b32.xlu0 %v4016, 64
        %v4671 = vpop.permute.xlu0 %4670
        %4672 = vrot.lane.b32.xlu0 %v4017, 64
        %v4673 = vpop.permute.xlu0 %4672
        %4674 = vrot.lane.b32.xlu0 %v4018, 64
        %v4675 = vpop.permute.xlu0 %4674
        %4676 = vrot.lane.b32.xlu0 %v4019, 64
        %v4677 = vpop.permute.xlu0 %4676
        %4678 = vrot.lane.b32.xlu0 %v4020, 64
        %v4679 = vpop.permute.xlu0 %4678
        %4680 = vrot.lane.b32.xlu0 %v4021, 64
        %v4681 = vpop.permute.xlu0 %4680
        %4682 = vrot.lane.b32.xlu0 %v4022, 64
        %v4683 = vpop.permute.xlu0 %4682
        %4684 = vrot.lane.b32.xlu0 %v4023, 64
        %v4685 = vpop.permute.xlu0 %4684
        %4686 = vrot.lane.b32.xlu0 %v4024, 64
        %v4687 = vpop.permute.xlu0 %4686
        %4688 = vrot.lane.b32.xlu0 %v4025, 64
        %v4689 = vpop.permute.xlu0 %4688
        %4690 = vrot.lane.b32.xlu0 %v4026, 64
        %v4691 = vpop.permute.xlu0 %4690
        %4692 = vrot.lane.b32.xlu0 %v4027, 64
        %v4693 = vpop.permute.xlu0 %4692
        %4694 = vrot.lane.b32.xlu0 %v4028, 64
        %v4695 = vpop.permute.xlu0 %4694
        %4696 = vrot.lane.b32.xlu0 %v4029, 64
        %v4697 = vpop.permute.xlu0 %4696
        %v4699 = vsel %vm2587, %v4651, 0
        %v4702 = vsel %vm2587, %v4653, 0
        %v4705 = vsel %vm2587, %v4655, 0
        %v4708 = vsel %vm2587, %v4657, 0
        %v4711 = vsel %vm2587, %v4659, 0
        %v4714 = vsel %vm2587, %v4661, 0
        %v4717 = vsel %vm2587, %v4663, 0
        %v4720 = vsel %vm2587, %v4665, 0
        %v4723 = vsel %vm2587, %v4667, 0
        %v4726 = vsel %vm2587, %v4669, 0
        %v4729 = vsel %vm2587, %v4671, 0
        %v4732 = vsel %vm2587, %v4673, 0
        %v4735 = vsel %vm2587, %v4675, 0
        %v4738 = vsel %vm2587, %v4677, 0
        %v4741 = vsel %vm2587, %v4679, 0
        %v4744 = vsel %vm2587, %v4681, 0
        %v4747 = vsel %vm2587, %v4683, 0
        %v4750 = vsel %vm2587, %v4685, 0
        %v4753 = vsel %vm2587, %v4687, 0
        %v4756 = vsel %vm2587, %v4689, 0
        %v4759 = vsel %vm2587, %v4691, 0
        %v4762 = vsel %vm2587, %v4693, 0
        %v4765 = vsel %vm2587, %v4695, 0
        %v4768 = vsel %vm2587, %v4697, 0
        %4770 = vmatpush.bf16.xpose.msra.mxu0 %v4744
        %4771 = vmatpush.bf16.xpose.msra.mxu0 %v4741
        %4772 = vmatpush.bf16.xpose.msra.mxu0 %v4738
        %4773 = vmatpush.bf16.xpose.msra.mxu0 %v4735
        %4774 = vmatpush.bf16.xpose.msra.mxu0 %v4732
        %4775 = vmatpush.bf16.xpose.msra.mxu0 %v4729
        %4776 = vmatpush.bf16.xpose.msra.mxu0 %v4726
        %4777 = vmatpush.bf16.xpose.msra.mxu0 %v4723
        %4778 = vmatmul.bf16.gmra.mxu0 %v4699
        %v4779 = vpop.f32.mrf.mxu0
        %v4780 = vadd.f32 %v2465, %v4779
        %v4781 = vpop.f32.mrf.mxu0
        %v4782 = vadd.f32 %v2465, %v4781
        %4783 = vmatmul.bf16.gmra.mxu0 %v4702
        %v4784 = vpop.f32.mrf.mxu0
        %v4785 = vadd.f32 %v2465, %v4784
        %v4786 = vpop.f32.mrf.mxu0
        %v4787 = vadd.f32 %v2465, %v4786
        %4788 = vmatmul.bf16.gmra.mxu0 %v4705
        %v4789 = vpop.f32.mrf.mxu0
        %v4790 = vadd.f32 %v2465, %v4789
        %v4791 = vpop.f32.mrf.mxu0
        %v4792 = vadd.f32 %v2465, %v4791
        %4793 = vmatmul.bf16.gmra.mxu0 %v4708
        %v4794 = vpop.f32.mrf.mxu0
        %v4795 = vadd.f32 %v2465, %v4794
        %v4796 = vpop.f32.mrf.mxu0
        %v4797 = vadd.f32 %v2465, %v4796
        %4798 = vmatmul.bf16.gmra.mxu0 %v4711
        %v4799 = vpop.f32.mrf.mxu0
        %v4800 = vadd.f32 %v2465, %v4799
        %v4801 = vpop.f32.mrf.mxu0
        %v4802 = vadd.f32 %v2465, %v4801
        %4803 = vmatmul.bf16.gmra.mxu0 %v4714
        %v4804 = vpop.f32.mrf.mxu0
        %v4805 = vadd.f32 %v2465, %v4804
        %v4806 = vpop.f32.mrf.mxu0
        %v4807 = vadd.f32 %v2465, %v4806
        %4808 = vmatmul.bf16.gmra.mxu0 %v4717
        %v4809 = vpop.f32.mrf.mxu0
        %v4810 = vadd.f32 %v2465, %v4809
        %v4811 = vpop.f32.mrf.mxu0
        %v4812 = vadd.f32 %v2465, %v4811
        %4813 = vmatmul.bf16.gmra.mxu0 %v4720
        %v4814 = vpop.f32.mrf.mxu0
        %v4815 = vadd.f32 %v2465, %v4814
        %v4816 = vpop.f32.mrf.mxu0
        %v4817 = vadd.f32 %v2465, %v4816
        %4818 = vdwg.mxu0
        %4819 = vmatpush.bf16.xpose.msra.mxu0 %v4768
        %4820 = vmatpush.bf16.xpose.msra.mxu0 %v4765
        %4821 = vmatpush.bf16.xpose.msra.mxu0 %v4762
        %4822 = vmatpush.bf16.xpose.msra.mxu0 %v4759
        %4823 = vmatpush.bf16.xpose.msra.mxu0 %v4756
        %4824 = vmatpush.bf16.xpose.msra.mxu0 %v4753
        %4825 = vmatpush.bf16.xpose.msra.mxu0 %v4750
        %4826 = vmatpush.bf16.xpose.msra.mxu0 %v4747
        %4827 = vmatmul.bf16.gmra.mxu0 %v4699
        %v4828 = vpop.f32.mrf.mxu0
        %v4829 = vadd.f32 %v2466, %v4828
        %v4830 = vpop.f32.mrf.mxu0
        %v4831 = vadd.f32 %v2466, %v4830
        %4832 = vmatmul.bf16.gmra.mxu0 %v4702
        %v4833 = vpop.f32.mrf.mxu0
        %v4834 = vadd.f32 %v2466, %v4833
        %v4835 = vpop.f32.mrf.mxu0
        %v4836 = vadd.f32 %v2466, %v4835
        %4837 = vmatmul.bf16.gmra.mxu0 %v4705
        %v4838 = vpop.f32.mrf.mxu0
        %v4839 = vadd.f32 %v2466, %v4838
        %v4840 = vpop.f32.mrf.mxu0
        %v4841 = vadd.f32 %v2466, %v4840
        %4842 = vmatmul.bf16.gmra.mxu0 %v4708
        %v4843 = vpop.f32.mrf.mxu0
        %v4844 = vadd.f32 %v2466, %v4843
        %v4845 = vpop.f32.mrf.mxu0
        %v4846 = vadd.f32 %v2466, %v4845
        %4847 = vmatmul.bf16.gmra.mxu0 %v4711
        %v4848 = vpop.f32.mrf.mxu0
        %v4849 = vadd.f32 %v2466, %v4848
        %v4850 = vpop.f32.mrf.mxu0
        %v4851 = vadd.f32 %v2466, %v4850
        %4852 = vmatmul.bf16.gmra.mxu0 %v4714
        %v4853 = vpop.f32.mrf.mxu0
        %v4854 = vadd.f32 %v2466, %v4853
        %v4855 = vpop.f32.mrf.mxu0
        %v4856 = vadd.f32 %v2466, %v4855
        %4857 = vmatmul.bf16.gmra.mxu0 %v4717
        %v4858 = vpop.f32.mrf.mxu0
        %v4859 = vadd.f32 %v2466, %v4858
        %v4860 = vpop.f32.mrf.mxu0
        %v4861 = vadd.f32 %v2466, %v4860
        %4862 = vmatmul.bf16.gmra.mxu0 %v4720
        %v4863 = vpop.f32.mrf.mxu0
        %v4864 = vadd.f32 %v2466, %v4863
        %v4865 = vpop.f32.mrf.mxu0
        %v4866 = vadd.f32 %v2466, %v4865
        %4867 = vdwg.mxu0
        %v4868 = vmax.f32 %v4780, %v4829
        %4869 = vmax.xlane.f32.xlu0 %v4868
        %v4870 = vpop.xlane.xlu0 %4869
        %v4871 = vmax.f32 %v4782, %v4831
        %4872 = vmax.xlane.f32.xlu0 %v4871
        %v4873 = vpop.xlane.xlu0 %4872
        %v4874 = vmax.f32 %v4785, %v4834
        %4875 = vmax.xlane.f32.xlu0 %v4874
        %v4876 = vpop.xlane.xlu0 %4875
        %v4877 = vmax.f32 %v4787, %v4836
        %4878 = vmax.xlane.f32.xlu0 %v4877
        %v4879 = vpop.xlane.xlu0 %4878
        %v4880 = vmax.f32 %v4790, %v4839
        %4881 = vmax.xlane.f32.xlu0 %v4880
        %v4882 = vpop.xlane.xlu0 %4881
        %v4883 = vmax.f32 %v4792, %v4841
        %4884 = vmax.xlane.f32.xlu0 %v4883
        %v4885 = vpop.xlane.xlu0 %4884
        %v4886 = vmax.f32 %v4795, %v4844
        %4887 = vmax.xlane.f32.xlu0 %v4886
        %v4888 = vpop.xlane.xlu0 %4887
        %v4889 = vmax.f32 %v4797, %v4846
        %4890 = vmax.xlane.f32.xlu0 %v4889
        %v4891 = vpop.xlane.xlu0 %4890
        %v4892 = vmax.f32 %v4800, %v4849
        %4893 = vmax.xlane.f32.xlu0 %v4892
        %v4894 = vpop.xlane.xlu0 %4893
        %v4895 = vmax.f32 %v4802, %v4851
        %4896 = vmax.xlane.f32.xlu0 %v4895
        %v4897 = vpop.xlane.xlu0 %4896
        %v4898 = vmax.f32 %v4805, %v4854
        %4899 = vmax.xlane.f32.xlu0 %v4898
        %v4900 = vpop.xlane.xlu0 %4899
        %v4901 = vmax.f32 %v4807, %v4856
        %4902 = vmax.xlane.f32.xlu0 %v4901
        %v4903 = vpop.xlane.xlu0 %4902
        %v4904 = vmax.f32 %v4810, %v4859
        %4905 = vmax.xlane.f32.xlu0 %v4904
        %v4906 = vpop.xlane.xlu0 %4905
        %v4907 = vmax.f32 %v4812, %v4861
        %4908 = vmax.xlane.f32.xlu0 %v4907
        %v4909 = vpop.xlane.xlu0 %4908
        %v4910 = vmax.f32 %v4815, %v4864
        %4911 = vmax.xlane.f32.xlu0 %v4910
        %v4912 = vpop.xlane.xlu0 %4911
        %v4913 = vmax.f32 %v4817, %v4866
        %4914 = vmax.xlane.f32.xlu0 %v4913
        %v4915 = vpop.xlane.xlu0 %4914
        %v4916 = vsub.f32 %v4780, %v4870
        %v4917 = vsub.f32 %v4829, %v4870
        %v4918 = vsub.f32 %v4782, %v4873
        %v4919 = vsub.f32 %v4831, %v4873
        %v4920 = vsub.f32 %v4785, %v4876
        %v4921 = vsub.f32 %v4834, %v4876
        %v4922 = vsub.f32 %v4787, %v4879
        %v4923 = vsub.f32 %v4836, %v4879
        %v4924 = vsub.f32 %v4790, %v4882
        %v4925 = vsub.f32 %v4839, %v4882
        %v4926 = vsub.f32 %v4792, %v4885
        %v4927 = vsub.f32 %v4841, %v4885
        %v4928 = vsub.f32 %v4795, %v4888
        %v4929 = vsub.f32 %v4844, %v4888
        %v4930 = vsub.f32 %v4797, %v4891
        %v4931 = vsub.f32 %v4846, %v4891
        %v4932 = vsub.f32 %v4800, %v4894
        %v4933 = vsub.f32 %v4849, %v4894
        %v4934 = vsub.f32 %v4802, %v4897
        %v4935 = vsub.f32 %v4851, %v4897
        %v4936 = vsub.f32 %v4805, %v4900
        %v4937 = vsub.f32 %v4854, %v4900
        %v4938 = vsub.f32 %v4807, %v4903
        %v4939 = vsub.f32 %v4856, %v4903
        %v4940 = vsub.f32 %v4810, %v4906
        %v4941 = vsub.f32 %v4859, %v4906
        %v4942 = vsub.f32 %v4812, %v4909
        %v4943 = vsub.f32 %v4861, %v4909
        %v4944 = vsub.f32 %v4815, %v4912
        %v4945 = vsub.f32 %v4864, %v4912
        %v4946 = vsub.f32 %v4817, %v4915
        %v4947 = vsub.f32 %v4866, %v4915
        %v4948 = vmul.f32 %v4916, 1.442695
        %v4949 = vpow.pop %v4948
        %v4950 = vmul.f32 %v4917, 1.442695
        %v4951 = vpow.pop %v4950
        %v4952 = vmul.f32 %v4918, 1.442695
        %v4953 = vpow.pop %v4952
        %v4954 = vmul.f32 %v4919, 1.442695
        %v4955 = vpow.pop %v4954
        %v4956 = vmul.f32 %v4920, 1.442695
        %v4957 = vpow.pop %v4956
        %v4958 = vmul.f32 %v4921, 1.442695
        %v4959 = vpow.pop %v4958
        %v4960 = vmul.f32 %v4922, 1.442695
        %v4961 = vpow.pop %v4960
        %v4962 = vmul.f32 %v4923, 1.442695
        %v4963 = vpow.pop %v4962
        %v4964 = vmul.f32 %v4924, 1.442695
        %v4965 = vpow.pop %v4964
        %v4966 = vmul.f32 %v4925, 1.442695
        %v4967 = vpow.pop %v4966
        %v4968 = vmul.f32 %v4926, 1.442695
        %v4969 = vpow.pop %v4968
        %v4970 = vmul.f32 %v4927, 1.442695
        %v4971 = vpow.pop %v4970
        %v4972 = vmul.f32 %v4928, 1.442695
        %v4973 = vpow.pop %v4972
        %v4974 = vmul.f32 %v4929, 1.442695
        %v4975 = vpow.pop %v4974
        %v4976 = vmul.f32 %v4930, 1.442695
        %v4977 = vpow.pop %v4976
        %v4978 = vmul.f32 %v4931, 1.442695
        %v4979 = vpow.pop %v4978
        %v4980 = vmul.f32 %v4932, 1.442695
        %v4981 = vpow.pop %v4980
        %v4982 = vmul.f32 %v4933, 1.442695
        %v4983 = vpow.pop %v4982
        %v4984 = vmul.f32 %v4934, 1.442695
        %v4985 = vpow.pop %v4984
        %v4986 = vmul.f32 %v4935, 1.442695
        %v4987 = vpow.pop %v4986
        %v4988 = vmul.f32 %v4936, 1.442695
        %v4989 = vpow.pop %v4988
        %v4990 = vmul.f32 %v4937, 1.442695
        %v4991 = vpow.pop %v4990
        %v4992 = vmul.f32 %v4938, 1.442695
        %v4993 = vpow.pop %v4992
        %v4994 = vmul.f32 %v4939, 1.442695
        %v4995 = vpow.pop %v4994
        %v4996 = vmul.f32 %v4940, 1.442695
        %v4997 = vpow.pop %v4996
        %v4998 = vmul.f32 %v4941, 1.442695
        %v4999 = vpow.pop %v4998
        %v5000 = vmul.f32 %v4942, 1.442695
        %v5001 = vpow.pop %v5000
        %v5002 = vmul.f32 %v4943, 1.442695
        %v5003 = vpow.pop %v5002
        %v5004 = vmul.f32 %v4944, 1.442695
        %v5005 = vpow.pop %v5004
        %v5006 = vmul.f32 %v4945, 1.442695
        %v5007 = vpow.pop %v5006
        %v5008 = vmul.f32 %v4946, 1.442695
        %v5009 = vpow.pop %v5008
        %v5010 = vmul.f32 %v4947, 1.442695
        %v5011 = vpow.pop %v5010
        %v5012 = vadd.f32 %v4949, %v4951
        %5013 = vadd.xlane.f32.xlu0 %v5012
        %v5014 = vpop.xlane.xlu0 %5013
        %v5015 = vadd.f32 %v4953, %v4955
        %5016 = vadd.xlane.f32.xlu0 %v5015
        %v5017 = vpop.xlane.xlu0 %5016
        %v5018 = vadd.f32 %v4957, %v4959
        %5019 = vadd.xlane.f32.xlu0 %v5018
        %v5020 = vpop.xlane.xlu0 %5019
        %v5021 = vadd.f32 %v4961, %v4963
        %5022 = vadd.xlane.f32.xlu0 %v5021
        %v5023 = vpop.xlane.xlu0 %5022
        %v5024 = vadd.f32 %v4965, %v4967
        %5025 = vadd.xlane.f32.xlu0 %v5024
        %v5026 = vpop.xlane.xlu0 %5025
        %v5027 = vadd.f32 %v4969, %v4971
        %5028 = vadd.xlane.f32.xlu0 %v5027
        %v5029 = vpop.xlane.xlu0 %5028
        %v5030 = vadd.f32 %v4973, %v4975
        %5031 = vadd.xlane.f32.xlu0 %v5030
        %v5032 = vpop.xlane.xlu0 %5031
        %v5033 = vadd.f32 %v4977, %v4979
        %5034 = vadd.xlane.f32.xlu0 %v5033
        %v5035 = vpop.xlane.xlu0 %5034
        %v5036 = vadd.f32 %v4981, %v4983
        %5037 = vadd.xlane.f32.xlu0 %v5036
        %v5038 = vpop.xlane.xlu0 %5037
        %v5039 = vadd.f32 %v4985, %v4987
        %5040 = vadd.xlane.f32.xlu0 %v5039
        %v5041 = vpop.xlane.xlu0 %5040
        %v5042 = vadd.f32 %v4989, %v4991
        %5043 = vadd.xlane.f32.xlu0 %v5042
        %v5044 = vpop.xlane.xlu0 %5043
        %v5045 = vadd.f32 %v4993, %v4995
        %5046 = vadd.xlane.f32.xlu0 %v5045
        %v5047 = vpop.xlane.xlu0 %5046
        %v5048 = vadd.f32 %v4997, %v4999
        %5049 = vadd.xlane.f32.xlu0 %v5048
        %v5050 = vpop.xlane.xlu0 %5049
        %v5051 = vadd.f32 %v5001, %v5003
        %5052 = vadd.xlane.f32.xlu0 %v5051
        %v5053 = vpop.xlane.xlu0 %5052
        %v5054 = vadd.f32 %v5005, %v5007
        %5055 = vadd.xlane.f32.xlu0 %v5054
        %v5056 = vpop.xlane.xlu0 %5055
        %v5057 = vadd.f32 %v5009, %v5011
        %5058 = vadd.xlane.f32.xlu0 %v5057
        %v5059 = vpop.xlane.xlu0 %5058
        %v5060 = vrcp.pop %v5014
        %v5061 = vrcp.pop %v5017
        %v5062 = vrcp.pop %v5020
        %v5063 = vrcp.pop %v5023
        %v5064 = vrcp.pop %v5026
        %v5065 = vrcp.pop %v5029
        %v5066 = vrcp.pop %v5032
        %v5067 = vrcp.pop %v5035
        %v5068 = vrcp.pop %v5038
        %v5069 = vrcp.pop %v5041
        %v5070 = vrcp.pop %v5044
        %v5071 = vrcp.pop %v5047
        %v5072 = vrcp.pop %v5050
        %v5073 = vrcp.pop %v5053
        %v5074 = vrcp.pop %v5056
        %v5075 = vrcp.pop %v5059
        %v5076 = vmul.f32 %v4949, %v5060
        %v5077 = vmul.f32 %v4951, %v5060
        %v5078 = vmul.f32 %v4953, %v5061
        %v5079 = vmul.f32 %v4955, %v5061
        %v5080 = vmul.f32 %v4957, %v5062
        %v5081 = vmul.f32 %v4959, %v5062
        %v5082 = vmul.f32 %v4961, %v5063
        %v5083 = vmul.f32 %v4963, %v5063
        %v5084 = vmul.f32 %v4965, %v5064
        %v5085 = vmul.f32 %v4967, %v5064
        %v5086 = vmul.f32 %v4969, %v5065
        %v5087 = vmul.f32 %v4971, %v5065
        %v5088 = vmul.f32 %v4973, %v5066
        %v5089 = vmul.f32 %v4975, %v5066
        %v5090 = vmul.f32 %v4977, %v5067
        %v5091 = vmul.f32 %v4979, %v5067
        %v5092 = vmul.f32 %v4981, %v5068
        %v5093 = vmul.f32 %v4983, %v5068
        %v5094 = vmul.f32 %v4985, %v5069
        %v5095 = vmul.f32 %v4987, %v5069
        %v5096 = vmul.f32 %v4989, %v5070
        %v5097 = vmul.f32 %v4991, %v5070
        %v5098 = vmul.f32 %v4993, %v5071
        %v5099 = vmul.f32 %v4995, %v5071
        %v5100 = vmul.f32 %v4997, %v5072
        %v5101 = vmul.f32 %v4999, %v5072
        %v5102 = vmul.f32 %v5001, %v5073
        %v5103 = vmul.f32 %v5003, %v5073
        %v5104 = vmul.f32 %v5005, %v5074
        %v5105 = vmul.f32 %v5007, %v5074
        %v5106 = vmul.f32 %v5009, %v5075
        %v5107 = vmul.f32 %v5011, %v5075
        %v5108 = vpack.c.bf16 %v5078, %v5076
        %v5109 = vpack.c.bf16 %v5079, %v5077
        %v5110 = vpack.c.bf16 %v5082, %v5080
        %v5111 = vpack.c.bf16 %v5083, %v5081
        %v5112 = vpack.c.bf16 %v5086, %v5084
        %v5113 = vpack.c.bf16 %v5087, %v5085
        %v5114 = vpack.c.bf16 %v5090, %v5088
        %v5115 = vpack.c.bf16 %v5091, %v5089
        %v5116 = vpack.c.bf16 %v5094, %v5092
        %v5117 = vpack.c.bf16 %v5095, %v5093
        %v5118 = vpack.c.bf16 %v5098, %v5096
        %v5119 = vpack.c.bf16 %v5099, %v5097
        %v5120 = vpack.c.bf16 %v5102, %v5100
        %v5121 = vpack.c.bf16 %v5103, %v5101
        %v5122 = vpack.c.bf16 %v5106, %v5104
        %v5123 = vpack.c.bf16 %v5107, %v5105
        %5124 = vrot.lane.b32.xlu0 %v4488, 64
        %v5125 = vpop.permute.xlu0 %5124
        %5126 = vrot.lane.b32.xlu0 %v4489, 64
        %v5127 = vpop.permute.xlu0 %5126
        %5128 = vrot.lane.b32.xlu0 %v4490, 64
        %v5129 = vpop.permute.xlu0 %5128
        %5130 = vrot.lane.b32.xlu0 %v4491, 64
        %v5131 = vpop.permute.xlu0 %5130
        %5132 = vrot.lane.b32.xlu0 %v4492, 64
        %v5133 = vpop.permute.xlu0 %5132
        %5134 = vrot.lane.b32.xlu0 %v4493, 64
        %v5135 = vpop.permute.xlu0 %5134
        %5136 = vrot.lane.b32.xlu0 %v4494, 64
        %v5137 = vpop.permute.xlu0 %5136
        %5138 = vrot.lane.b32.xlu0 %v4495, 64
        %v5139 = vpop.permute.xlu0 %5138
        %5140 = vrot.lane.b32.xlu0 %v4496, 64
        %v5141 = vpop.permute.xlu0 %5140
        %5142 = vrot.lane.b32.xlu0 %v4497, 64
        %v5143 = vpop.permute.xlu0 %5142
        %5144 = vrot.lane.b32.xlu0 %v4498, 64
        %v5145 = vpop.permute.xlu0 %5144
        %5146 = vrot.lane.b32.xlu0 %v4499, 64
        %v5147 = vpop.permute.xlu0 %5146
        %5148 = vrot.lane.b32.xlu0 %v4500, 64
        %v5149 = vpop.permute.xlu0 %5148
        %5150 = vrot.lane.b32.xlu0 %v4501, 64
        %v5151 = vpop.permute.xlu0 %5150
        %5152 = vrot.lane.b32.xlu0 %v4502, 64
        %v5153 = vpop.permute.xlu0 %5152
        %5154 = vrot.lane.b32.xlu0 %v4503, 64
        %v5155 = vpop.permute.xlu0 %5154
        %5172 = vmatpush.bf16.msra.mxu0 %v5139
        %5173 = vmatpush.bf16.msra.mxu0 %v5137
        %5174 = vmatpush.bf16.msra.mxu0 %v5135
        %5175 = vmatpush.bf16.msra.mxu0 %v5133
        %5176 = vmatpush.bf16.msra.mxu0 %v5131
        %5177 = vmatpush.bf16.msra.mxu0 %v5129
        %5178 = vmatpush.bf16.msra.mxu0 %v5127
        %5179 = vmatpush.bf16.msra.mxu0 %v5125
        %5180 = vmatmul.bf16.gmra.mxu0 %v5108
        %v5181 = vpop.f32.mrf.mxu0
        %v5182 = vadd.f32 0.0, %v5181
        %v5183 = vpop.f32.mrf.mxu0
        %v5184 = vadd.f32 0.0, %v5183
        %5185 = vmatmul.bf16.gmra.mxu0 %v5110
        %v5186 = vpop.f32.mrf.mxu0
        %v5187 = vadd.f32 0.0, %v5186
        %v5188 = vpop.f32.mrf.mxu0
        %v5189 = vadd.f32 0.0, %v5188
        %5190 = vmatmul.bf16.gmra.mxu0 %v5112
        %v5191 = vpop.f32.mrf.mxu0
        %v5192 = vadd.f32 0.0, %v5191
        %v5193 = vpop.f32.mrf.mxu0
        %v5194 = vadd.f32 0.0, %v5193
        %5195 = vmatmul.bf16.gmra.mxu0 %v5114
        %v5196 = vpop.f32.mrf.mxu0
        %v5197 = vadd.f32 0.0, %v5196
        %v5198 = vpop.f32.mrf.mxu0
        %v5199 = vadd.f32 0.0, %v5198
        %5200 = vmatmul.bf16.gmra.mxu0 %v5116
        %v5201 = vpop.f32.mrf.mxu0
        %v5202 = vadd.f32 0.0, %v5201
        %v5203 = vpop.f32.mrf.mxu0
        %v5204 = vadd.f32 0.0, %v5203
        %5205 = vmatmul.bf16.gmra.mxu0 %v5118
        %v5206 = vpop.f32.mrf.mxu0
        %v5207 = vadd.f32 0.0, %v5206
        %v5208 = vpop.f32.mrf.mxu0
        %v5209 = vadd.f32 0.0, %v5208
        %5210 = vmatmul.bf16.gmra.mxu0 %v5120
        %v5211 = vpop.f32.mrf.mxu0
        %v5212 = vadd.f32 0.0, %v5211
        %v5213 = vpop.f32.mrf.mxu0
        %v5214 = vadd.f32 0.0, %v5213
        %5215 = vmatmul.bf16.gmra.mxu0 %v5122
        %v5216 = vpop.f32.mrf.mxu0
        %v5217 = vadd.f32 0.0, %v5216
        %v5218 = vpop.f32.mrf.mxu0
        %v5219 = vadd.f32 0.0, %v5218
        %5220 = vdwg.mxu0
        %5221 = vmatpush.bf16.msra.mxu0 %v5155
        %5222 = vmatpush.bf16.msra.mxu0 %v5153
        %5223 = vmatpush.bf16.msra.mxu0 %v5151
        %5224 = vmatpush.bf16.msra.mxu0 %v5149
        %5225 = vmatpush.bf16.msra.mxu0 %v5147
        %5226 = vmatpush.bf16.msra.mxu0 %v5145
        %5227 = vmatpush.bf16.msra.mxu0 %v5143
        %5228 = vmatpush.bf16.msra.mxu0 %v5141
        %5229 = vmatmul.bf16.gmra.mxu0 %v5109
        %v5230 = vpop.f32.mrf.mxu0
        %v5231 = vadd.f32 %v5182, %v5230
        %v5232 = vpop.f32.mrf.mxu0
        %v5233 = vadd.f32 %v5184, %v5232
        %5234 = vmatmul.bf16.gmra.mxu0 %v5111
        %v5235 = vpop.f32.mrf.mxu0
        %v5236 = vadd.f32 %v5187, %v5235
        %v5237 = vpop.f32.mrf.mxu0
        %v5238 = vadd.f32 %v5189, %v5237
        %5239 = vmatmul.bf16.gmra.mxu0 %v5113
        %v5240 = vpop.f32.mrf.mxu0
        %v5241 = vadd.f32 %v5192, %v5240
        %v5242 = vpop.f32.mrf.mxu0
        %v5243 = vadd.f32 %v5194, %v5242
        %5244 = vmatmul.bf16.gmra.mxu0 %v5115
        %v5245 = vpop.f32.mrf.mxu0
        %v5246 = vadd.f32 %v5197, %v5245
        %v5247 = vpop.f32.mrf.mxu0
        %v5248 = vadd.f32 %v5199, %v5247
        %5249 = vmatmul.bf16.gmra.mxu0 %v5117
        %v5250 = vpop.f32.mrf.mxu0
        %v5251 = vadd.f32 %v5202, %v5250
        %v5252 = vpop.f32.mrf.mxu0
        %v5253 = vadd.f32 %v5204, %v5252
        %5254 = vmatmul.bf16.gmra.mxu0 %v5119
        %v5255 = vpop.f32.mrf.mxu0
        %v5256 = vadd.f32 %v5207, %v5255
        %v5257 = vpop.f32.mrf.mxu0
        %v5258 = vadd.f32 %v5209, %v5257
        %5259 = vmatmul.bf16.gmra.mxu0 %v5121
        %v5260 = vpop.f32.mrf.mxu0
        %v5261 = vadd.f32 %v5212, %v5260
        %v5262 = vpop.f32.mrf.mxu0
        %v5263 = vadd.f32 %v5214, %v5262
        %5264 = vmatmul.bf16.gmra.mxu0 %v5123
        %v5265 = vpop.f32.mrf.mxu0
        %v5266 = vadd.f32 %v5217, %v5265
        %v5267 = vpop.f32.mrf.mxu0
        %v5268 = vadd.f32 %v5219, %v5267
        %5269 = vdwg.mxu0
        %v5270 = vpack.c.bf16 %v5231, %v5231
        %v5271 = vpack.c.bf16 %v5233, %v5233
        %v5272 = vpack.c.bf16 %v5236, %v5236
        %v5273 = vpack.c.bf16 %v5238, %v5238
        %v5274 = vpack.c.bf16 %v5241, %v5241
        %v5275 = vpack.c.bf16 %v5243, %v5243
        %v5276 = vpack.c.bf16 %v5246, %v5246
        %v5277 = vpack.c.bf16 %v5248, %v5248
        %v5278 = vpack.c.bf16 %v5251, %v5251
        %v5279 = vpack.c.bf16 %v5253, %v5253
        %v5280 = vpack.c.bf16 %v5256, %v5256
        %v5281 = vpack.c.bf16 %v5258, %v5258
        %v5282 = vpack.c.bf16 %v5261, %v5261
        %v5283 = vpack.c.bf16 %v5263, %v5263
        %v5284 = vpack.c.bf16 %v5266, %v5266
        %v5285 = vpack.c.bf16 %v5268, %v5268
        %5302 = vrot.lane.b32.xlu0 %v5270, 64
        %v5303 = vpop.permute.xlu0 %5302
        %5304 = vrot.lane.b32.xlu0 %v5271, 64
        %v5305 = vpop.permute.xlu0 %5304
        %5306 = vrot.lane.b32.xlu0 %v5272, 64
        %v5307 = vpop.permute.xlu0 %5306
        %5308 = vrot.lane.b32.xlu0 %v5273, 64
        %v5309 = vpop.permute.xlu0 %5308
        %5310 = vrot.lane.b32.xlu0 %v5274, 64
        %v5311 = vpop.permute.xlu0 %5310
        %5312 = vrot.lane.b32.xlu0 %v5275, 64
        %v5313 = vpop.permute.xlu0 %5312
        %5314 = vrot.lane.b32.xlu0 %v5276, 64
        %v5315 = vpop.permute.xlu0 %5314
        %5316 = vrot.lane.b32.xlu0 %v5277, 64
        %v5317 = vpop.permute.xlu0 %5316
        %5318 = vrot.lane.b32.xlu0 %v5278, 64
        %v5319 = vpop.permute.xlu0 %5318
        %5320 = vrot.lane.b32.xlu0 %v5279, 64
        %v5321 = vpop.permute.xlu0 %5320
        %5322 = vrot.lane.b32.xlu0 %v5280, 64
        %v5323 = vpop.permute.xlu0 %5322
        %5324 = vrot.lane.b32.xlu0 %v5281, 64
        %v5325 = vpop.permute.xlu0 %5324
        %5326 = vrot.lane.b32.xlu0 %v5282, 64
        %v5327 = vpop.permute.xlu0 %5326
        %5328 = vrot.lane.b32.xlu0 %v5283, 64
        %v5329 = vpop.permute.xlu0 %5328
        %5330 = vrot.lane.b32.xlu0 %v5284, 64
        %v5331 = vpop.permute.xlu0 %5330
        %5332 = vrot.lane.b32.xlu0 %v5285, 64
        %v5333 = vpop.permute.xlu0 %5332
        %5350 = vst.msk [vmem:[#allocation2 + $0x4] sm:$0xf] %vm3941, %v5303
        %5351 = vst.msk [vmem:[#allocation2 + $0xc] sm:$0xf] %vm3941, %v5305
        %5352 = vst.msk [vmem:[#allocation2 + $0x14] sm:$0xf] %vm3941, %v5307
        %5353 = vst.msk [vmem:[#allocation2 + $0x1c] sm:$0xf] %vm3941, %v5309
        %5354 = vst.msk [vmem:[#allocation2 + $0x24] sm:$0xf] %vm3941, %v5311
        %5355 = vst.msk [vmem:[#allocation2 + $0x2c] sm:$0xf] %vm3941, %v5313
        %5356 = vst.msk [vmem:[#allocation2 + $0x34] sm:$0xf] %vm3941, %v5315
        %5357 = vst.msk [vmem:[#allocation2 + $0x3c] sm:$0xf] %vm3941, %v5317
        %5358 = vst.msk [vmem:[#allocation2 + $0x44] sm:$0xf] %vm3941, %v5319
        %5359 = vst.msk [vmem:[#allocation2 + $0x4c] sm:$0xf] %vm3941, %v5321
        %5360 = vst.msk [vmem:[#allocation2 + $0x54] sm:$0xf] %vm3941, %v5323
        %5361 = vst.msk [vmem:[#allocation2 + $0x5c] sm:$0xf] %vm3941, %v5325
        %5362 = vst.msk [vmem:[#allocation2 + $0x64] sm:$0xf] %vm3941, %v5327
        %5363 = vst.msk [vmem:[#allocation2 + $0x6c] sm:$0xf] %vm3941, %v5329
        %5364 = vst.msk [vmem:[#allocation2 + $0x74] sm:$0xf] %vm3941, %v5331
        %5365 = vst.msk [vmem:[#allocation2 + $0x7c] sm:$0xf] %vm3941, %v5333
        %v5366 = vld [vmem:[#allocation2] sm:$0xff]
        %v5367 = vld [vmem:[#allocation2 + $0x8] sm:$0xff]
        %v5368 = vld [vmem:[#allocation2 + $0x10] sm:$0xff]
        %v5369 = vld [vmem:[#allocation2 + $0x18] sm:$0xff]
        %v5370 = vld [vmem:[#allocation2 + $0x20] sm:$0xff]
        %v5371 = vld [vmem:[#allocation2 + $0x28] sm:$0xff]
        %v5372 = vld [vmem:[#allocation2 + $0x30] sm:$0xff]
        %v5373 = vld [vmem:[#allocation2 + $0x38] sm:$0xff]
        %v5374 = vld [vmem:[#allocation2 + $0x40] sm:$0xff]
        %v5375 = vld [vmem:[#allocation2 + $0x48] sm:$0xff]
        %v5376 = vld [vmem:[#allocation2 + $0x50] sm:$0xff]
        %v5377 = vld [vmem:[#allocation2 + $0x58] sm:$0xff]
        %v5378 = vld [vmem:[#allocation2 + $0x60] sm:$0xff]
        %v5379 = vld [vmem:[#allocation2 + $0x68] sm:$0xff]
        %v5380 = vld [vmem:[#allocation2 + $0x70] sm:$0xff]
        %v5381 = vld [vmem:[#allocation2 + $0x78] sm:$0xff]
        %v5382 = vld [vmem:[%s6] sm:$0xff]
        %v5383 = vld [vmem:[%s6 + $0x8] sm:$0xff]
        %v5384 = vld [vmem:[%s6 + $0x10] sm:$0xff]
        %v5385 = vld [vmem:[%s6 + $0x18] sm:$0xff]
        %v5386 = vld [vmem:[%s6 + $0x20] sm:$0xff]
        %v5387 = vld [vmem:[%s6 + $0x28] sm:$0xff]
        %v5388 = vld [vmem:[%s6 + $0x30] sm:$0xff]
        %v5389 = vld [vmem:[%s6 + $0x38] sm:$0xff]
        %v5390 = vld [vmem:[%s6 + $0x40] sm:$0xff]
        %v5391 = vld [vmem:[%s6 + $0x48] sm:$0xff]
        %v5392 = vld [vmem:[%s6 + $0x50] sm:$0xff]
        %v5393 = vld [vmem:[%s6 + $0x58] sm:$0xff]
        %v5394 = vld [vmem:[%s6 + $0x60] sm:$0xff]
        %v5395 = vld [vmem:[%s6 + $0x68] sm:$0xff]
        %v5396 = vld [vmem:[%s6 + $0x70] sm:$0xff]
        %v5397 = vld [vmem:[%s6 + $0x78] sm:$0xff]
        %v5398 = vld [vmem:[%s6 + $0x80] sm:$0xff]
        %v5399 = vld [vmem:[%s6 + $0x88] sm:$0xff]
        %v5400 = vld [vmem:[%s6 + $0x90] sm:$0xff]
        %v5401 = vld [vmem:[%s6 + $0x98] sm:$0xff]
        %v5402 = vld [vmem:[%s6 + $0xa0] sm:$0xff]
        %v5403 = vld [vmem:[%s6 + $0xa8] sm:$0xff]
        %v5404 = vld [vmem:[%s6 + $0xb0] sm:$0xff]
        %v5405 = vld [vmem:[%s6 + $0xb8] sm:$0xff]
        %v5406 = vld [vmem:[%s6 + $0xc0] sm:$0xff]
        %v5407 = vld [vmem:[%s6 + $0xc8] sm:$0xff]
        %v5408 = vld [vmem:[%s6 + $0xd0] sm:$0xff]
        %v5409 = vld [vmem:[%s6 + $0xd8] sm:$0xff]
        %v5410 = vld [vmem:[%s6 + $0xe0] sm:$0xff]
        %v5411 = vld [vmem:[%s6 + $0xe8] sm:$0xff]
        %v5412 = vld [vmem:[%s6 + $0xf0] sm:$0xff]
        %v5413 = vld [vmem:[%s6 + $0xf8] sm:$0xff]
        %v5414 = vld [vmem:[%s7] sm:$0x3]
        %v5416 = vperm.slane %v5414, 0
        %v5417 = vperm.slane %v5414, 1
        %v5436 = vunpack.c.l.b16 %v5366
        %v5437 = vunpack.c.h.b16 %v5366
        %v5438 = vunpack.c.l.b16 %v5367
        %v5439 = vunpack.c.h.b16 %v5367
        %v5440 = vunpack.c.l.b16 %v5368
        %v5441 = vunpack.c.h.b16 %v5368
        %v5442 = vunpack.c.l.b16 %v5369
        %v5443 = vunpack.c.h.b16 %v5369
        %v5444 = vunpack.c.l.b16 %v5370
        %v5445 = vunpack.c.h.b16 %v5370
        %v5446 = vunpack.c.l.b16 %v5371
        %v5447 = vunpack.c.h.b16 %v5371
        %v5448 = vunpack.c.l.b16 %v5372
        %v5449 = vunpack.c.h.b16 %v5372
        %v5450 = vunpack.c.l.b16 %v5373
        %v5451 = vunpack.c.h.b16 %v5373
        %v5452 = vunpack.c.l.b16 %v5374
        %v5453 = vunpack.c.h.b16 %v5374
        %v5454 = vunpack.c.l.b16 %v5375
        %v5455 = vunpack.c.h.b16 %v5375
        %v5456 = vunpack.c.l.b16 %v5376
        %v5457 = vunpack.c.h.b16 %v5376
        %v5458 = vunpack.c.l.b16 %v5377
        %v5459 = vunpack.c.h.b16 %v5377
        %v5460 = vunpack.c.l.b16 %v5378
        %v5461 = vunpack.c.h.b16 %v5378
        %v5462 = vunpack.c.l.b16 %v5379
        %v5463 = vunpack.c.h.b16 %v5379
        %v5464 = vunpack.c.l.b16 %v5380
        %v5465 = vunpack.c.h.b16 %v5380
        %v5466 = vunpack.c.l.b16 %v5381
        %v5467 = vunpack.c.h.b16 %v5381
        %v5468 = vpack.c.b16 %v5438, %v5436
        %v5469 = vpack.c.b16 %v5439, %v5437
        %v5470 = vpack.c.b16 %v5442, %v5440
        %v5471 = vpack.c.b16 %v5443, %v5441
        %v5472 = vpack.c.b16 %v5446, %v5444
        %v5473 = vpack.c.b16 %v5447, %v5445
        %v5474 = vpack.c.b16 %v5450, %v5448
        %v5475 = vpack.c.b16 %v5451, %v5449
        %v5476 = vpack.c.b16 %v5454, %v5452
        %v5477 = vpack.c.b16 %v5455, %v5453
        %v5478 = vpack.c.b16 %v5458, %v5456
        %v5479 = vpack.c.b16 %v5459, %v5457
        %v5480 = vpack.c.b16 %v5462, %v5460
        %v5481 = vpack.c.b16 %v5463, %v5461
        %v5482 = vpack.c.b16 %v5466, %v5464
        %v5483 = vpack.c.b16 %v5467, %v5465
        %v5532 = vunpack.c.l.b16 %v5382
        %v5533 = vunpack.c.h.b16 %v5382
        %v5534 = vunpack.c.l.b16 %v5383
        %v5535 = vunpack.c.h.b16 %v5383
        %v5536 = vunpack.c.l.b16 %v5384
        %v5537 = vunpack.c.h.b16 %v5384
        %v5538 = vunpack.c.l.b16 %v5385
        %v5539 = vunpack.c.h.b16 %v5385
        %v5540 = vunpack.c.l.b16 %v5386
        %v5541 = vunpack.c.h.b16 %v5386
        %v5542 = vunpack.c.l.b16 %v5387
        %v5543 = vunpack.c.h.b16 %v5387
        %v5544 = vunpack.c.l.b16 %v5388
        %v5545 = vunpack.c.h.b16 %v5388
        %v5546 = vunpack.c.l.b16 %v5389
        %v5547 = vunpack.c.h.b16 %v5389
        %v5548 = vunpack.c.l.b16 %v5390
        %v5549 = vunpack.c.h.b16 %v5390
        %v5550 = vunpack.c.l.b16 %v5391
        %v5551 = vunpack.c.h.b16 %v5391
        %v5552 = vunpack.c.l.b16 %v5392
        %v5553 = vunpack.c.h.b16 %v5392
        %v5554 = vunpack.c.l.b16 %v5393
        %v5555 = vunpack.c.h.b16 %v5393
        %v5556 = vunpack.c.l.b16 %v5394
        %v5557 = vunpack.c.h.b16 %v5394
        %v5558 = vunpack.c.l.b16 %v5395
        %v5559 = vunpack.c.h.b16 %v5395
        %v5560 = vunpack.c.l.b16 %v5396
        %v5561 = vunpack.c.h.b16 %v5396
        %v5562 = vunpack.c.l.b16 %v5397
        %v5563 = vunpack.c.h.b16 %v5397
        %v5564 = vunpack.c.l.b16 %v5398
        %v5565 = vunpack.c.h.b16 %v5398
        %v5566 = vunpack.c.l.b16 %v5399
        %v5567 = vunpack.c.h.b16 %v5399
        %v5568 = vunpack.c.l.b16 %v5400
        %v5569 = vunpack.c.h.b16 %v5400
        %v5570 = vunpack.c.l.b16 %v5401
        %v5571 = vunpack.c.h.b16 %v5401
        %v5572 = vunpack.c.l.b16 %v5402
        %v5573 = vunpack.c.h.b16 %v5402
        %v5574 = vunpack.c.l.b16 %v5403
        %v5575 = vunpack.c.h.b16 %v5403
        %v5576 = vunpack.c.l.b16 %v5404
        %v5577 = vunpack.c.h.b16 %v5404
        %v5578 = vunpack.c.l.b16 %v5405
        %v5579 = vunpack.c.h.b16 %v5405
        %v5580 = vunpack.c.l.b16 %v5406
        %v5581 = vunpack.c.h.b16 %v5406
        %v5582 = vunpack.c.l.b16 %v5407
        %v5583 = vunpack.c.h.b16 %v5407
        %v5584 = vunpack.c.l.b16 %v5408
        %v5585 = vunpack.c.h.b16 %v5408
        %v5586 = vunpack.c.l.b16 %v5409
        %v5587 = vunpack.c.h.b16 %v5409
        %v5588 = vunpack.c.l.b16 %v5410
        %v5589 = vunpack.c.h.b16 %v5410
        %v5590 = vunpack.c.l.b16 %v5411
        %v5591 = vunpack.c.h.b16 %v5411
        %v5592 = vunpack.c.l.b16 %v5412
        %v5593 = vunpack.c.h.b16 %v5412
        %v5594 = vunpack.c.l.b16 %v5413
        %v5595 = vunpack.c.h.b16 %v5413
        %v5596 = vpack.c.b16 %v5534, %v5532
        %v5597 = vpack.c.b16 %v5535, %v5533
        %v5598 = vpack.c.b16 %v5538, %v5536
        %v5599 = vpack.c.b16 %v5539, %v5537
        %v5600 = vpack.c.b16 %v5542, %v5540
        %v5601 = vpack.c.b16 %v5543, %v5541
        %v5602 = vpack.c.b16 %v5546, %v5544
        %v5603 = vpack.c.b16 %v5547, %v5545
        %v5604 = vpack.c.b16 %v5550, %v5548
        %v5605 = vpack.c.b16 %v5551, %v5549
        %v5606 = vpack.c.b16 %v5554, %v5552
        %v5607 = vpack.c.b16 %v5555, %v5553
        %v5608 = vpack.c.b16 %v5558, %v5556
        %v5609 = vpack.c.b16 %v5559, %v5557
        %v5610 = vpack.c.b16 %v5562, %v5560
        %v5611 = vpack.c.b16 %v5563, %v5561
        %v5612 = vpack.c.b16 %v5566, %v5564
        %v5613 = vpack.c.b16 %v5567, %v5565
        %v5614 = vpack.c.b16 %v5570, %v5568
        %v5615 = vpack.c.b16 %v5571, %v5569
        %v5616 = vpack.c.b16 %v5574, %v5572
        %v5617 = vpack.c.b16 %v5575, %v5573
        %v5618 = vpack.c.b16 %v5578, %v5576
        %v5619 = vpack.c.b16 %v5579, %v5577
        %v5620 = vpack.c.b16 %v5582, %v5580
        %v5621 = vpack.c.b16 %v5583, %v5581
        %v5622 = vpack.c.b16 %v5586, %v5584
        %v5623 = vpack.c.b16 %v5587, %v5585
        %v5624 = vpack.c.b16 %v5590, %v5588
        %v5625 = vpack.c.b16 %v5591, %v5589
        %v5626 = vpack.c.b16 %v5594, %v5592
        %v5627 = vpack.c.b16 %v5595, %v5593
        %5660 = vmatpush.bf16.xpose.msra.mxu0 %v5610
        %5661 = vmatpush.bf16.xpose.msra.mxu0 %v5608
        %5662 = vmatpush.bf16.xpose.msra.mxu0 %v5606
        %5663 = vmatpush.bf16.xpose.msra.mxu0 %v5604
        %5664 = vmatpush.bf16.xpose.msra.mxu0 %v5602
        %5665 = vmatpush.bf16.xpose.msra.mxu0 %v5600
        %5666 = vmatpush.bf16.xpose.msra.mxu0 %v5598
        %5667 = vmatpush.bf16.xpose.msra.mxu0 %v5596
        %5668 = vmatmul.bf16.gmra.mxu0 %v5468
        %v5669 = vpop.f32.mrf.mxu0
        %v5670 = vadd.f32 %v5416, %v5669
        %v5671 = vpop.f32.mrf.mxu0
        %v5672 = vadd.f32 %v5416, %v5671
        %5673 = vmatmul.bf16.gmra.mxu0 %v5470
        %v5674 = vpop.f32.mrf.mxu0
        %v5675 = vadd.f32 %v5416, %v5674
        %v5676 = vpop.f32.mrf.mxu0
        %v5677 = vadd.f32 %v5416, %v5676
        %5678 = vmatmul.bf16.gmra.mxu0 %v5472
        %v5679 = vpop.f32.mrf.mxu0
        %v5680 = vadd.f32 %v5416, %v5679
        %v5681 = vpop.f32.mrf.mxu0
        %v5682 = vadd.f32 %v5416, %v5681
        %5683 = vmatmul.bf16.gmra.mxu0 %v5474
        %v5684 = vpop.f32.mrf.mxu0
        %v5685 = vadd.f32 %v5416, %v5684
        %v5686 = vpop.f32.mrf.mxu0
        %v5687 = vadd.f32 %v5416, %v5686
        %5688 = vmatmul.bf16.gmra.mxu0 %v5476
        %v5689 = vpop.f32.mrf.mxu0
        %v5690 = vadd.f32 %v5416, %v5689
        %v5691 = vpop.f32.mrf.mxu0
        %v5692 = vadd.f32 %v5416, %v5691
        %5693 = vmatmul.bf16.gmra.mxu0 %v5478
        %v5694 = vpop.f32.mrf.mxu0
        %v5695 = vadd.f32 %v5416, %v5694
        %v5696 = vpop.f32.mrf.mxu0
        %v5697 = vadd.f32 %v5416, %v5696
        %5698 = vmatmul.bf16.gmra.mxu0 %v5480
        %v5699 = vpop.f32.mrf.mxu0
        %v5700 = vadd.f32 %v5416, %v5699
        %v5701 = vpop.f32.mrf.mxu0
        %v5702 = vadd.f32 %v5416, %v5701
        %5703 = vmatmul.bf16.gmra.mxu0 %v5482
        %v5704 = vpop.f32.mrf.mxu0
        %v5705 = vadd.f32 %v5416, %v5704
        %v5706 = vpop.f32.mrf.mxu0
        %v5707 = vadd.f32 %v5416, %v5706
        %5708 = vdwg.mxu0
        %5709 = vmatpush.bf16.xpose.msra.mxu0 %v5611
        %5710 = vmatpush.bf16.xpose.msra.mxu0 %v5609
        %5711 = vmatpush.bf16.xpose.msra.mxu0 %v5607
        %5712 = vmatpush.bf16.xpose.msra.mxu0 %v5605
        %5713 = vmatpush.bf16.xpose.msra.mxu0 %v5603
        %5714 = vmatpush.bf16.xpose.msra.mxu0 %v5601
        %5715 = vmatpush.bf16.xpose.msra.mxu0 %v5599
        %5716 = vmatpush.bf16.xpose.msra.mxu0 %v5597
        %5717 = vmatmul.bf16.gmra.mxu0 %v5469
        %v5718 = vpop.f32.mrf.mxu0
        %v5719 = vadd.f32 %v5670, %v5718
        %v5720 = vpop.f32.mrf.mxu0
        %v5721 = vadd.f32 %v5672, %v5720
        %5722 = vmatmul.bf16.gmra.mxu0 %v5471
        %v5723 = vpop.f32.mrf.mxu0
        %v5724 = vadd.f32 %v5675, %v5723
        %v5725 = vpop.f32.mrf.mxu0
        %v5726 = vadd.f32 %v5677, %v5725
        %5727 = vmatmul.bf16.gmra.mxu0 %v5473
        %v5728 = vpop.f32.mrf.mxu0
        %v5729 = vadd.f32 %v5680, %v5728
        %v5730 = vpop.f32.mrf.mxu0
        %v5731 = vadd.f32 %v5682, %v5730
        %5732 = vmatmul.bf16.gmra.mxu0 %v5475
        %v5733 = vpop.f32.mrf.mxu0
        %v5734 = vadd.f32 %v5685, %v5733
        %v5735 = vpop.f32.mrf.mxu0
        %v5736 = vadd.f32 %v5687, %v5735
        %5737 = vmatmul.bf16.gmra.mxu0 %v5477
        %v5738 = vpop.f32.mrf.mxu0
        %v5739 = vadd.f32 %v5690, %v5738
        %v5740 = vpop.f32.mrf.mxu0
        %v5741 = vadd.f32 %v5692, %v5740
        %5742 = vmatmul.bf16.gmra.mxu0 %v5479
        %v5743 = vpop.f32.mrf.mxu0
        %v5744 = vadd.f32 %v5695, %v5743
        %v5745 = vpop.f32.mrf.mxu0
        %v5746 = vadd.f32 %v5697, %v5745
        %5747 = vmatmul.bf16.gmra.mxu0 %v5481
        %v5748 = vpop.f32.mrf.mxu0
        %v5749 = vadd.f32 %v5700, %v5748
        %v5750 = vpop.f32.mrf.mxu0
        %v5751 = vadd.f32 %v5702, %v5750
        %5752 = vmatmul.bf16.gmra.mxu0 %v5483
        %v5753 = vpop.f32.mrf.mxu0
        %v5754 = vadd.f32 %v5705, %v5753
        %v5755 = vpop.f32.mrf.mxu0
        %v5756 = vadd.f32 %v5707, %v5755
        %5757 = vdwg.mxu0
        %5758 = vmatpush.bf16.xpose.msra.mxu0 %v5626
        %5759 = vmatpush.bf16.xpose.msra.mxu0 %v5624
        %5760 = vmatpush.bf16.xpose.msra.mxu0 %v5622
        %5761 = vmatpush.bf16.xpose.msra.mxu0 %v5620
        %5762 = vmatpush.bf16.xpose.msra.mxu0 %v5618
        %5763 = vmatpush.bf16.xpose.msra.mxu0 %v5616
        %5764 = vmatpush.bf16.xpose.msra.mxu0 %v5614
        %5765 = vmatpush.bf16.xpose.msra.mxu0 %v5612
        %5766 = vmatmul.bf16.gmra.mxu0 %v5468
        %v5767 = vpop.f32.mrf.mxu0
        %v5768 = vadd.f32 %v5417, %v5767
        %v5769 = vpop.f32.mrf.mxu0
        %v5770 = vadd.f32 %v5417, %v5769
        %5771 = vmatmul.bf16.gmra.mxu0 %v5470
        %v5772 = vpop.f32.mrf.mxu0
        %v5773 = vadd.f32 %v5417, %v5772
        %v5774 = vpop.f32.mrf.mxu0
        %v5775 = vadd.f32 %v5417, %v5774
        %5776 = vmatmul.bf16.gmra.mxu0 %v5472
        %v5777 = vpop.f32.mrf.mxu0
        %v5778 = vadd.f32 %v5417, %v5777
        %v5779 = vpop.f32.mrf.mxu0
        %v5780 = vadd.f32 %v5417, %v5779
        %5781 = vmatmul.bf16.gmra.mxu0 %v5474
        %v5782 = vpop.f32.mrf.mxu0
        %v5783 = vadd.f32 %v5417, %v5782
        %v5784 = vpop.f32.mrf.mxu0
        %v5785 = vadd.f32 %v5417, %v5784
        %5786 = vmatmul.bf16.gmra.mxu0 %v5476
        %v5787 = vpop.f32.mrf.mxu0
        %v5788 = vadd.f32 %v5417, %v5787
        %v5789 = vpop.f32.mrf.mxu0
        %v5790 = vadd.f32 %v5417, %v5789
        %5791 = vmatmul.bf16.gmra.mxu0 %v5478
        %v5792 = vpop.f32.mrf.mxu0
        %v5793 = vadd.f32 %v5417, %v5792
        %v5794 = vpop.f32.mrf.mxu0
        %v5795 = vadd.f32 %v5417, %v5794
        %5796 = vmatmul.bf16.gmra.mxu0 %v5480
        %v5797 = vpop.f32.mrf.mxu0
        %v5798 = vadd.f32 %v5417, %v5797
        %v5799 = vpop.f32.mrf.mxu0
        %v5800 = vadd.f32 %v5417, %v5799
        %5801 = vmatmul.bf16.gmra.mxu0 %v5482
        %v5802 = vpop.f32.mrf.mxu0
        %v5803 = vadd.f32 %v5417, %v5802
        %v5804 = vpop.f32.mrf.mxu0
        %v5805 = vadd.f32 %v5417, %v5804
        %5806 = vdwg.mxu0
        %5807 = vmatpush.bf16.xpose.msra.mxu0 %v5627
        %5808 = vmatpush.bf16.xpose.msra.mxu0 %v5625
        %5809 = vmatpush.bf16.xpose.msra.mxu0 %v5623
        %5810 = vmatpush.bf16.xpose.msra.mxu0 %v5621
        %5811 = vmatpush.bf16.xpose.msra.mxu0 %v5619
        %5812 = vmatpush.bf16.xpose.msra.mxu0 %v5617
        %5813 = vmatpush.bf16.xpose.msra.mxu0 %v5615
        %5814 = vmatpush.bf16.xpose.msra.mxu0 %v5613
        %5815 = vmatmul.bf16.gmra.mxu0 %v5469
        %v5816 = vpop.f32.mrf.mxu0
        %v5817 = vadd.f32 %v5768, %v5816
        %v5818 = vpop.f32.mrf.mxu0
        %v5819 = vadd.f32 %v5770, %v5818
        %5820 = vmatmul.bf16.gmra.mxu0 %v5471
        %v5821 = vpop.f32.mrf.mxu0
        %v5822 = vadd.f32 %v5773, %v5821
        %v5823 = vpop.f32.mrf.mxu0
        %v5824 = vadd.f32 %v5775, %v5823
        %5825 = vmatmul.bf16.gmra.mxu0 %v5473
        %v5826 = vpop.f32.mrf.mxu0
        %v5827 = vadd.f32 %v5778, %v5826
        %v5828 = vpop.f32.mrf.mxu0
        %v5829 = vadd.f32 %v5780, %v5828
        %5830 = vmatmul.bf16.gmra.mxu0 %v5475
        %v5831 = vpop.f32.mrf.mxu0
        %v5832 = vadd.f32 %v5783, %v5831
        %v5833 = vpop.f32.mrf.mxu0
        %v5834 = vadd.f32 %v5785, %v5833
        %5835 = vmatmul.bf16.gmra.mxu0 %v5477
        %v5836 = vpop.f32.mrf.mxu0
        %v5837 = vadd.f32 %v5788, %v5836
        %v5838 = vpop.f32.mrf.mxu0
        %v5839 = vadd.f32 %v5790, %v5838
        %5840 = vmatmul.bf16.gmra.mxu0 %v5479
        %v5841 = vpop.f32.mrf.mxu0
        %v5842 = vadd.f32 %v5793, %v5841
        %v5843 = vpop.f32.mrf.mxu0
        %v5844 = vadd.f32 %v5795, %v5843
        %5845 = vmatmul.bf16.gmra.mxu0 %v5481
        %v5846 = vpop.f32.mrf.mxu0
        %v5847 = vadd.f32 %v5798, %v5846
        %v5848 = vpop.f32.mrf.mxu0
        %v5849 = vadd.f32 %v5800, %v5848
        %5850 = vmatmul.bf16.gmra.mxu0 %v5483
        %v5851 = vpop.f32.mrf.mxu0
        %v5852 = vadd.f32 %v5803, %v5851
        %v5853 = vpop.f32.mrf.mxu0
        %v5854 = vadd.f32 %v5805, %v5853
        %5855 = vdwg.mxu0
        %5856 = vst [vmem:[%s337] sm:$0xff] %v5719
        %5857 = vst [vmem:[%s337 + $0x8] sm:$0xff] %v5817
        %5858 = vst [vmem:[%s337 + $0x10] sm:$0xff] %v5721
        %5859 = vst [vmem:[%s337 + $0x18] sm:$0xff] %v5819
        %5860 = vst [vmem:[%s337 + $0x20] sm:$0xff] %v5724
        %5861 = vst [vmem:[%s337 + $0x28] sm:$0xff] %v5822
        %5862 = vst [vmem:[%s337 + $0x30] sm:$0xff] %v5726
        %5863 = vst [vmem:[%s337 + $0x38] sm:$0xff] %v5824
        %5864 = vst [vmem:[%s337 + $0x40] sm:$0xff] %v5729
        %5865 = vst [vmem:[%s337 + $0x48] sm:$0xff] %v5827
        %5866 = vst [vmem:[%s337 + $0x50] sm:$0xff] %v5731
        %5867 = vst [vmem:[%s337 + $0x58] sm:$0xff] %v5829
        %5868 = vst [vmem:[%s337 + $0x60] sm:$0xff] %v5734
        %5869 = vst [vmem:[%s337 + $0x68] sm:$0xff] %v5832
        %5870 = vst [vmem:[%s337 + $0x70] sm:$0xff] %v5736
        %5871 = vst [vmem:[%s337 + $0x78] sm:$0xff] %v5834
        %5872 = vst [vmem:[%s337 + $0x80] sm:$0xff] %v5739
        %5873 = vst [vmem:[%s337 + $0x88] sm:$0xff] %v5837
        %5874 = vst [vmem:[%s337 + $0x90] sm:$0xff] %v5741
        %5875 = vst [vmem:[%s337 + $0x98] sm:$0xff] %v5839
        %5876 = vst [vmem:[%s337 + $0xa0] sm:$0xff] %v5744
        %5877 = vst [vmem:[%s337 + $0xa8] sm:$0xff] %v5842
        %5878 = vst [vmem:[%s337 + $0xb0] sm:$0xff] %v5746
        %5879 = vst [vmem:[%s337 + $0xb8] sm:$0xff] %v5844
        %5880 = vst [vmem:[%s337 + $0xc0] sm:$0xff] %v5749
        %5881 = vst [vmem:[%s337 + $0xc8] sm:$0xff] %v5847
        %5882 = vst [vmem:[%s337 + $0xd0] sm:$0xff] %v5751
        %5883 = vst [vmem:[%s337 + $0xd8] sm:$0xff] %v5849
        %5884 = vst [vmem:[%s337 + $0xe0] sm:$0xff] %v5754
        %5885 = vst [vmem:[%s337 + $0xe8] sm:$0xff] %v5852
        %5886 = vst [vmem:[%s337 + $0xf0] sm:$0xff] %v5756
        %5887 = vst [vmem:[%s337 + $0xf8] sm:$0xff] %v5854
        %s5888 = sand.u32 %s216, 1
        %s5889 = scalar_lea.sflag [#allocation6], %s5888
        %s5890 = sand.u32 %s216, 1
        %s5891 = smul.addr %s5890, 256
        %s5892 = scalar_lea.vmem [#allocation5], %s5891
        // Predicated region
        $region49: #{multi_head_attention.1} parent=47 // pred_check
          %p5893 = pneg %p226
        $region50: #{multi_head_attention.1} parent=47 // pred_check_branch
          %5895 = sbr.rel (%p5893) target = $region52
        $region51: #{multi_head_attention.1} parent=47 // pred_region
          %s5896 = smul.u32 16, %s35
          %5898 = vsyncadd %s5889, 0
          %s5899 = smul.addr %s5896, 2
          %s5900 = smul.addr %s34, 64
          %s5901 = sadd.s32 %s5899, %s5900
          %s5902 = smul.addr %s5901, 8
          %s5903 = scalar_lea.hbm %s8, %s5902
          %s5904 = sshll.u32 %s5892, 4
          %s5905 = int_to_ptr.vmem [resolvable:$true] %s5904
          %s5906 = sshll.u32 %s5903, 4
          %s5907 = int_to_ptr.hbm [resolvable:$true] %s5906
          %5912 = dma.vmem_to_hbm [thread:$0]  %s5905, 4096, %s5907, %s5889, 256, 256, 16
        $region52: #{multi_head_attention.1} parent=47 // pred_fallthru
          _
      $region48: #{multi_head_attention.1} parent=5 // pred_fallthru
        _
      %p5913 = scmp.le.s32.totalorder 2, %s25
      // Predicated region
      $region53: #{multi_head_attention.1} parent=5 // pred_check
        %p5914 = pneg %p5913
      $region54: #{multi_head_attention.1} parent=5 // pred_check_branch
        %5916 = sbr.rel (%p5914) target = $region56
      $region55: #{multi_head_attention.1} parent=5 // pred_region
        %s5917 = ssub.s32 %s25, 2
        // Predicated region
        $region57: #{multi_head_attention.1} parent=55 // pred_check
          %p5918 = pneg %p232
        $region58: #{multi_head_attention.1} parent=55 // pred_check_branch
          %5920 = sbr.rel (%p5918) target = $region60
        $region59: #{multi_head_attention.1} parent=55 // pred_region
          %s5921 = sand.u32 %s217, 1
          %s5922 = scalar_lea.sflag [#allocation6], %s5921
          %s5923 = sand.u32 %s217, 1
          %s5924 = smul.addr %s5923, 256
          %s5925 = scalar_lea.vmem [#allocation5], %s5924
          %5927 = dma.done %s5922, 4096
        $region60: #{multi_head_attention.1} parent=55 // pred_fallthru
          _
      $region56: #{multi_head_attention.1} parent=5 // pred_fallthru
        _
    $region6: #{multi_head_attention.1} parent=1 // loop_footer
      %s29 = sadd.s32 1, %s25
    $region7: #{multi_head_attention.1} parent=1 // loop_footer_branch
      %24 = sbr.rel target = $region3
    $region8: #{multi_head_attention.1} parent=1 // loop_exit
      _
    %5928 = vsyncpa [#allocation6], 1
    %s5929 = scalar_lea.sflag [#allocation6], 1
    %5930 = vsyncpa %s5929, 1

</llo_original>
